<compile_context>
chip_gen: v6e
topology: v6e:2x2x1
jax: 0.10.0
libtpu: 0.0.40
codegen_flags: <defaults>
</compile_context>

<pallas_src>
import functools
import math

import jax
import jax.numpy as jnp
from jax.experimental import pallas as pl
from jax.experimental.pallas import tpu as pltpu


def _mha_shortener_kernel(
    x_ref,       # (Bb, S, K)   input tile
    ln_w_ref,    # (1, K)       f32 LayerNorm weight
    ln_b_ref,    # (1, K)       f32 LayerNorm bias
    qblk_ref,    # (H*T, E)     mxu dtype, block-diagonal pre-scaled query proj
    hmask_ref,   # (H*T, E)     f32 0/1 per-head column mask
    qres_ref,    # (T, E)       f32 raw learned query (residual add)
    wkv_t_ref,   # (K, 2E)      mxu dtype, [Wk^T | Wv^T]
    bkv_ref,     # (1, 2E)      f32, [bk | bv]
    wo_t_ref,    # (E, E)       mxu dtype, Wo^T
    bo_ref,      # (1, E)       f32
    *out_refs,   # out_ref (Bb, T, E) [, attnw_ref (Bb, H, T, S)]
    num_heads: int,
    ln_eps: float,
):
    out_ref = out_refs[0]
    attnw_ref = out_refs[1] if len(out_refs) > 1 else None

    Bb, S, K = x_ref.shape
    T, E = qres_ref.shape
    H = num_heads
    HT = H * T
    mxu_dt = wkv_t_ref.dtype

    # ---- LayerNorm over kdim; single fused pass for mean and E[x^2] ----
    x = x_ref[...].astype(jnp.float32).reshape(Bb * S, K)
    inv_k = 1.0 / K
    mean = jnp.sum(x, axis=-1, keepdims=True) * inv_k
    ex2 = jnp.sum(x * x, axis=-1, keepdims=True) * inv_k
    var = ex2 - mean * mean
    x_ln = (x - mean) * jax.lax.rsqrt(var + ln_eps)
    x_ln = x_ln * ln_w_ref[...] + ln_b_ref[...]                       # (Bb*S, K) f32

    # ---- Fused K/V projection: one MXU matmul, M = Bb*S, contraction = K ----
    kv = jnp.dot(x_ln.astype(mxu_dt), wkv_t_ref[...],
                 preferred_element_type=jnp.float32) + bkv_ref[...]   # (Bb*S, 2E)
    k3 = kv[:, :E].astype(mxu_dt).reshape(Bb, S, E)
    v3 = kv[:, E:].astype(mxu_dt).reshape(Bb, S, E)

    # ---- Scores for ALL heads in one batched matmul (contraction = E) ----
    # q_block row (h*T + t) holds q[t, head-h block] with zeros elsewhere, so a
    # full-E contraction reproduces the per-head Dh contraction exactly.
    qb = jnp.broadcast_to(qblk_ref[...][None], (Bb, HT, E))           # hoisted once
    scores = jnp.einsum("bme,bse->bms", qb, k3,
                        preferred_element_type=jnp.float32)           # (Bb, HT, S)

    # ---- Softmax over the (lane) source axis; exact division so weights sum to 1.
    scores = scores - jnp.max(scores, axis=-1, keepdims=True)
    es = jnp.exp(scores)
    probs = es / jnp.sum(es, axis=-1, keepdims=True)

    if attnw_ref is not None:
        # Single contiguous store of all heads' weights (no per-head sliced stores).
        attnw_ref[...] = probs.reshape(Bb, H, T, S).astype(attnw_ref.dtype)

    # ---- Context for all heads in one batched matmul (contraction = S) ----
    ctx_full = jnp.einsum("bms,bse->bme", probs.astype(mxu_dt), v3,
                          preferred_element_type=jnp.float32)         # (Bb, HT, E)
    # Per-head column masks are disjoint, so masking + summing over heads is
    # exactly the concat-of-heads context (Bb, T, E).
    ctx_sel = (ctx_full * hmask_ref[...]).reshape(Bb, H, T, E)
    ctx = ctx_sel[:, 0]
    for h in range(1, H):                    # H-1 cheap VPU adds (H is static)
        ctx = ctx + ctx_sel[:, h]

    # ---- Single output projection (contraction = E) + bias + query residual ----
    out = jnp.dot(ctx.reshape(Bb * T, E).astype(mxu_dt), wo_t_ref[...],
                  preferred_element_type=jnp.float32) + bo_ref[...]
    out = out.reshape(Bb, T, E) + qres_ref[...][None]
    out_ref[...] = out.astype(out_ref.dtype)


def _choose_batch_block(B, S, per_batch_bytes, const_bytes, vmem_budget):
    """Largest batch block VMEM allows, preferring (a) >=512 MXU rows,
    (b) an even number of blocks (v7x: 2 TensorCores on the parallel axis),
    (c) exact divisors of B (no padded-batch waste)."""
    cap = int(max(1, (vmem_budget - const_bytes) // max(per_batch_bytes, 1)))
    cap = min(cap, B)
    divisors = [d for d in range(1, cap + 1) if B % d == 0]
    score = lambda d: (d * S >= 512, (B // d) % 2 == 0, d)
    best = max(divisors, key=score)
    if best * 4 < cap:
        # B has no usable divisor near the cap: accept a little padding instead,
        # spreading the batch evenly over the blocks.
        n_blocks = -(-B // cap)
        best = -(-B // n_blocks)
    return best


def mha_sequence_shortener_with_ln(
    x, params, *, num_heads, batch_block=None, ln_eps=1e-5,
    mxu_dtype=jnp.bfloat16, attn_weights_dtype=jnp.float32, need_weights=True):
    """x: (B, S, kdim) -> (attn_output (B, T, E), (attn_weights (B, H, T, S),)).

    mxu_dtype:          MXU operand dtype (accumulation is always f32);
                        jnp.float32 gives exact nn.MultiheadAttention parity.
    attn_weights_dtype: dtype of the returned weights (bf16 halves the dominant
                        HBM writeback stream).
    need_weights:       False drops the attention-weight output entirely.
    """
    B, S, K = x.shape
    query = params["query"]                      # (T, E)
    T, E = query.shape
    H = num_heads
    assert E % H == 0, "embed_dim must be divisible by num_heads"
    Dh = E // H
    f32 = jnp.float32

    # ---- x-independent prep, hoisted out of the kernel ----
    q_scaled = (query.astype(f32) @ params["wq"].T.astype(f32)
                + params["bq"].astype(f32)) * (1.0 / math.sqrt(Dh))       # (T, E)
    head_of_col = jnp.arange(E) // Dh                                      # (E,)
    head_of_row = jnp.repeat(jnp.arange(H), T)                             # (H*T,)
    hmask = (head_of_row[:, None] == head_of_col[None, :]).astype(f32)     # (H*T, E)
    q_block = (jnp.tile(q_scaled, (H, 1)) * hmask).astype(mxu_dtype)       # (H*T, E)

    wkv_t = jnp.concatenate([params["wk"].T, params["wv"].T], axis=1).astype(mxu_dtype)
    bkv = jnp.concatenate([params["bk"], params["bv"]]).reshape(1, 2 * E).astype(f32)
    wo_t = params["wo"].T.astype(mxu_dtype)
    bo = params["bo"].reshape(1, E).astype(f32)
    ln_w = params["ln_w"].reshape(1, K).astype(f32)
    ln_b = params["ln_b"].reshape(1, K).astype(f32)
    qres = query.astype(f32)

    # ---- VMEM-budgeted batch block (generation-aware via get_tpu_info) ----
    x_b = jnp.dtype(x.dtype).itemsize
    w_b = jnp.dtype(attn_weights_dtype).itemsize if need_weights else 0
    m_b = jnp.dtype(mxu_dtype).itemsize
    per_b = (2 * S * K * x_b              # x tile (double-buffered)
             + 2 * T * E * x_b            # out tile (double-buffered)
             + 2 * H * T * S * w_b        # attn-weight tile (double-buffered)
             + S * K * (4 + m_b)          # x_ln f32 + MXU-dtype copy
             + S * 2 * E * (4 + m_b)      # kv f32 + k/v MXU-dtype copies
             + H * T * S * (8 + m_b)      # scores + probs + probs MXU copy
             + H * T * E * (4 + m_b)      # ctx_full + broadcast q
             + T * E * 8)                 # ctx + out
    const_b = 2 * (K * 2 * E * m_b              # wkv_t
                   + E * E * m_b                # wo_t
                   + H * T * E * (m_b + 4)      # q_block + hmask
                   + T * E * 4                  # qres
                   + (2 * K + 2 * E + E) * 4)   # ln_w, ln_b, bkv, bo
    try:
        vmem_cap = int(pltpu.get_tpu_info().vmem_capacity_bytes)
    except Exception:  # non-TPU backend / older runtime: assume v7x's 64 MiB
        vmem_cap = 64 * 1024 * 1024

    if batch_block is None:
        Bb = _choose_batch_block(B, S, per_b, const_b, int(0.6 * vmem_cap))
    else:
        Bb = max(1, min(batch_block, B))
    n_blocks = -(-B // Bb)
    Bpad = n_blocks * Bb
    xp = x if Bpad == B else jnp.pad(x, ((0, Bpad - B), (0, 0), (0, 0)))

    vmem_limit = int(min(0.92 * vmem_cap,
                         max(32 * 1024 * 1024, 1.5 * (Bb * per_b + const_b))))

    const = lambda shape: pl.BlockSpec(shape, lambda b: (0,) * len(shape))

    kernel = functools.partial(_mha_shortener_kernel, num_heads=H, ln_eps=ln_eps)

    out_shapes = [jax.ShapeDtypeStruct((Bpad, T, E), x.dtype)]
    out_specs = [pl.BlockSpec((Bb, T, E), lambda b: (b, 0, 0))]
    if need_weights:
        out_shapes.append(jax.ShapeDtypeStruct((Bpad, H, T, S), attn_weights_dtype))
        out_specs.append(pl.BlockSpec((Bb, H, T, S), lambda b: (b, 0, 0, 0)))

    results = pl.pallas_call(
        kernel,
        out_shape=tuple(out_shapes),
        grid_spec=pltpu.PrefetchScalarGridSpec(
            num_scalar_prefetch=0,
            grid=(n_blocks,),
            in_specs=[
                pl.BlockSpec((Bb, S, K), lambda b: (b, 0, 0)),   # x (batch tile)
                const((1, K)), const((1, K)),                    # LayerNorm w, b
                const((H * T, E)), const((H * T, E)),            # q_block, head mask
                const((T, E)),                                   # query residual
                const((K, 2 * E)), const((1, 2 * E)),            # [Wk|Wv]^T, [bk|bv]
                const((E, E)), const((1, E)),                    # Wo^T, bo
            ],
            out_specs=out_specs,
        ),
        compiler_params=pltpu.CompilerParams(
            dimension_semantics=("parallel",),   # batch blocks across TCs (v7x)
            vmem_limit_bytes=vmem_limit,
        ),
    )(xp, ln_w, ln_b, q_block, hmask, qres, wkv_t, bkv, wo_t, bo)

    out = results[0]
    attn_w = results[1] if need_weights else None
    if Bpad != B:
        out = out[:B]
        attn_w = attn_w[:B] if attn_w is not None else None
    return out, (attn_w,)


def _reference(x, params, *, num_heads):
    """Pure-JAX f32 reference mirroring nn.MultiheadAttention + LayerNorm."""
    B, S, K = x.shape
    query = params["query"]
    T, E = query.shape
    Dh = E // num_heads

    mean = jnp.mean(x, axis=-1, keepdims=True)
    var = jnp.mean((x - mean) ** 2, axis=-1, keepdims=True)
    x_ln = (x - mean) / jnp.sqrt(var + 1e-5) * params["ln_w"] + params["ln_b"]

    qp = jnp.broadcast_to(query[None], (B, T, E))
    q = qp @ params["wq"].T + params["bq"]
    k = x_ln @ params["wk"].T + params["bk"]
    v = x_ln @ params["wv"].T + params["bv"]

    qh = q.reshape(B, T, num_heads, Dh).transpose(0, 2, 1, 3)
    kh = k.reshape(B, S, num_heads, Dh).transpose(0, 2, 1, 3)
    vh = v.reshape(B, S, num_heads, Dh).transpose(0, 2, 1, 3)

    scores = jnp.einsum("bhtd,bhsd->bhts", qh, kh) / math.sqrt(Dh)
    probs = jax.nn.softmax(scores, axis=-1)
    ctx = jnp.einsum("bhts,bhsd->bhtd", probs, vh)
    ctx = ctx.transpose(0, 2, 1, 3).reshape(B, T, E)
    out = ctx @ params["wo"].T + params["bo"] + query[None]
    return out, probs


if __name__ == "__main__":
    # Small, module-consistent shapes.  B=20 exercises the divisor-based batch
    # blocking (auto-picks Bb=10 -> grid=(2,), no padding, even block count).
    B, S = 20, 16           # batch, source sequence length
    K = 32                  # kdim == vdim (x's feature dim)
    E = 32                  # embed_dim
    H = 4                   # num_heads
    T = 8                   # target_len

    key = jax.random.PRNGKey(0)
    keys = jax.random.split(key, 12)

    params = {
        "query": 0.2 * jax.random.truncated_normal(keys[0], -2.0, 2.0, (T, E), jnp.float32),
        "ln_w": 1.0 + 0.1 * jax.random.normal(keys[10], (K,), jnp.float32),
        "ln_b": 0.05 * jax.random.normal(keys[11], (K,), jnp.float32),
        "wq": 0.1 * jax.random.normal(keys[1], (E, E), jnp.float32),
        "wk": 0.1 * jax.random.normal(keys[2], (E, K), jnp.float32),
        "wv": 0.1 * jax.random.normal(keys[3], (E, K), jnp.float32),
        "bq": 0.01 * jax.random.normal(keys[4], (E,), jnp.float32),
        "bk": 0.01 * jax.random.normal(keys[5], (E,), jnp.float32),
        "bv": 0.01 * jax.random.normal(keys[6], (E,), jnp.float32),
        "wo": 0.1 * jax.random.normal(keys[7], (E, E), jnp.float32),
        "bo": 0.01 * jax.random.normal(keys[8], (E,), jnp.float32),
    }
    x = jax.random.normal(keys[9], (B, S, K), jnp.float32)

    ref_out, ref_w = _reference(x, params, num_heads=H)

    # 1) Exact-parity mode (f32 MXU operands).
    out32, (w32,) = mha_sequence_shortener_with_ln(
        x, params, num_heads=H, mxu_dtype=jnp.float32)
    out32 = jax.block_until_ready(out32)
    w32 = jax.block_until_ready(w32)
    assert out32.shape == (B, T, E) and w32.shape == (B, H, T, S)
    assert jnp.allclose(out32, ref_out, rtol=2e-3, atol=2e-3), \
        float(jnp.max(jnp.abs(out32 - ref_out)))
    assert jnp.allclose(w32, ref_w, rtol=2e-3, atol=2e-3), \
        float(jnp.max(jnp.abs(w32 - ref_w)))

    # 2) Default fast mode (bf16 MXU operands, f32 accumulation) -> bf16-level
    #    tolerance against the f32 reference.
    out16, (w16,) = mha_sequence_shortener_with_ln(x, params, num_heads=H)
    out16 = jax.block_until_ready(out16)
    w16 = jax.block_until_ready(w16)
    assert jnp.allclose(out16, ref_out, rtol=2e-2, atol=2e-2), \
        float(jnp.max(jnp.abs(out16 - ref_out)))
    assert jnp.allclose(w16, ref_w, rtol=5e-3, atol=5e-3), \
        float(jnp.max(jnp.abs(w16 - ref_w)))

    # 3) need_weights=False drops the dominant attention-weight HBM stream.
    out_nw, (w_nw,) = mha_sequence_shortener_with_ln(
        x, params, num_heads=H, need_weights=False)
    out_nw = jax.block_until_ready(out_nw)
    assert w_nw is None
    assert jnp.allclose(out_nw, out16, rtol=1e-5, atol=1e-5)

    print("KERNEL_OK")
</pallas_src>

<mosaic_0001>
module attributes {stable_mosaic.version = 11 : i64} {
  func.func @_mha_shortener_kernel(%arg0: i32, %arg1: memref<10x16x32xf32, #tpu.memory_space<vmem>>, %arg2: memref<1x32xf32, #tpu.memory_space<vmem>>, %arg3: memref<1x32xf32, #tpu.memory_space<vmem>>, %arg4: memref<32x32xf32, #tpu.memory_space<vmem>>, %arg5: memref<32x32xf32, #tpu.memory_space<vmem>>, %arg6: memref<8x32xf32, #tpu.memory_space<vmem>>, %arg7: memref<32x64xf32, #tpu.memory_space<vmem>>, %arg8: memref<1x64xf32, #tpu.memory_space<vmem>>, %arg9: memref<32x32xf32, #tpu.memory_space<vmem>>, %arg10: memref<1x32xf32, #tpu.memory_space<vmem>>, %arg11: memref<10x8x32xf32, #tpu.memory_space<vmem>>, %arg12: memref<10x4x8x16xf32, #tpu.memory_space<vmem>>) attributes {dimension_semantics = [#tpu.dimension_semantics<parallel>], iteration_bounds = array<i64: 2>, scalar_prefetch = 0 : i64, scratch_operands = 0 : i64, tpu.core_type = #tpu.core_type<tc>, window_params = [{transform_indices = @transform_0, window_bounds = array<i64: 10, 16, 32>}, {pipeline_mode = #tpu.pipeline_mode<synchronous>, transform_indices = @transform_1, window_bounds = array<i64: 1, 32>}, {pipeline_mode = #tpu.pipeline_mode<synchronous>, transform_indices = @transform_2, window_bounds = array<i64: 1, 32>}, {pipeline_mode = #tpu.pipeline_mode<synchronous>, transform_indices = @transform_3, window_bounds = array<i64: 32, 32>}, {pipeline_mode = #tpu.pipeline_mode<synchronous>, transform_indices = @transform_4, window_bounds = array<i64: 32, 32>}, {pipeline_mode = #tpu.pipeline_mode<synchronous>, transform_indices = @transform_5, window_bounds = array<i64: 8, 32>}, {pipeline_mode = #tpu.pipeline_mode<synchronous>, transform_indices = @transform_6, window_bounds = array<i64: 32, 64>}, {pipeline_mode = #tpu.pipeline_mode<synchronous>, transform_indices = @transform_7, window_bounds = array<i64: 1, 64>}, {pipeline_mode = #tpu.pipeline_mode<synchronous>, transform_indices = @transform_8, window_bounds = array<i64: 32, 32>}, {pipeline_mode = #tpu.pipeline_mode<synchronous>, transform_indices = @transform_9, window_bounds = array<i64: 1, 32>}, {transform_indices = @transform_10, window_bounds = array<i64: 10, 8, 32>}, {transform_indices = @transform_11, window_bounds = array<i64: 10, 4, 8, 16>}]} {
    %c0 = arith.constant 0 : index
    %c0_0 = arith.constant 0 : index
    %c0_1 = arith.constant 0 : index
    %0 = vector.load %arg1[%c0, %c0_0, %c0_1] : memref<10x16x32xf32, #tpu.memory_space<vmem>>, vector<10x16x32xf32>
    %1 = vector.shape_cast %0 : vector<10x16x32xf32> to vector<160x32xf32>
    %cst = arith.constant dense<0.000000e+00> : vector<160xf32>
    %2 = vector.multi_reduction <add>, %1, %cst [1] : vector<160x32xf32> to vector<160xf32>
    %3 = vector.shape_cast %2 : vector<160xf32> to vector<160x1xf32>
    %cst_2 = arith.constant 3.125000e-02 : f32
    %4 = vector.broadcast %cst_2 : f32 to vector<160x1xf32>
    %5 = arith.mulf %3, %4 : vector<160x1xf32>
    %6 = arith.mulf %1, %1 : vector<160x32xf32>
    %cst_3 = arith.constant dense<0.000000e+00> : vector<160xf32>
    %7 = vector.multi_reduction <add>, %6, %cst_3 [1] : vector<160x32xf32> to vector<160xf32>
    %8 = vector.shape_cast %7 : vector<160xf32> to vector<160x1xf32>
    %cst_4 = arith.constant 3.125000e-02 : f32
    %9 = vector.broadcast %cst_4 : f32 to vector<160x1xf32>
    %10 = arith.mulf %8, %9 : vector<160x1xf32>
    %11 = arith.mulf %5, %5 : vector<160x1xf32>
    %12 = arith.subf %10, %11 : vector<160x1xf32>
    %13 = vector.broadcast %5 : vector<160x1xf32> to vector<160x32xf32>
    %14 = arith.subf %1, %13 : vector<160x32xf32>
    %cst_5 = arith.constant 9.99999974E-6 : f32
    %15 = vector.broadcast %cst_5 : f32 to vector<160x1xf32>
    %16 = arith.addf %12, %15 : vector<160x1xf32>
    %17 = math.rsqrt %16 : vector<160x1xf32>
    %18 = vector.broadcast %17 : vector<160x1xf32> to vector<160x32xf32>
    %19 = arith.mulf %14, %18 : vector<160x32xf32>
    %c0_6 = arith.constant 0 : index
    %c0_7 = arith.constant 0 : index
    %20 = vector.load %arg2[%c0_6, %c0_7] : memref<1x32xf32, #tpu.memory_space<vmem>>, vector<1x32xf32>
    %21 = vector.broadcast %20 : vector<1x32xf32> to vector<160x32xf32>
    %22 = arith.mulf %19, %21 : vector<160x32xf32>
    %c0_8 = arith.constant 0 : index
    %c0_9 = arith.constant 0 : index
    %23 = vector.load %arg3[%c0_8, %c0_9] : memref<1x32xf32, #tpu.memory_space<vmem>>, vector<1x32xf32>
    %24 = vector.broadcast %23 : vector<1x32xf32> to vector<160x32xf32>
    %25 = arith.addf %22, %24 : vector<160x32xf32>
    %c0_10 = arith.constant 0 : index
    %c0_11 = arith.constant 0 : index
    %26 = vector.load %arg7[%c0_10, %c0_11] : memref<32x64xf32, #tpu.memory_space<vmem>>, vector<32x64xf32>
    %cst_12 = arith.constant dense<0.000000e+00> : vector<160x64xf32>
    %27 = tpu.matmul %25, %26, %cst_12 {dimension_numbers = #tpu.dot_dimension_numbers<[1], [0], [0], [1], [0, 0, 1, 1], [], []>} : vector<160x32xf32>, vector<32x64xf32>, vector<160x64xf32> -> vector<160x64xf32>
    %c0_13 = arith.constant 0 : index
    %c0_14 = arith.constant 0 : index
    %28 = vector.load %arg8[%c0_13, %c0_14] : memref<1x64xf32, #tpu.memory_space<vmem>>, vector<1x64xf32>
    %29 = vector.broadcast %28 : vector<1x64xf32> to vector<160x64xf32>
    %30 = arith.addf %27, %29 : vector<160x64xf32>
    %31 = vector.extract_strided_slice %30 {offsets = [0, 0], sizes = [160, 32], strides = [1, 1]} : vector<160x64xf32> to vector<160x32xf32>
    %32 = vector.shape_cast %31 : vector<160x32xf32> to vector<10x16x32xf32>
    %33 = vector.extract_strided_slice %30 {offsets = [0, 32], sizes = [160, 32], strides = [1, 1]} : vector<160x64xf32> to vector<160x32xf32>
    %34 = vector.shape_cast %33 : vector<160x32xf32> to vector<10x16x32xf32>
    %c0_15 = arith.constant 0 : index
    %c0_16 = arith.constant 0 : index
    %35 = vector.load %arg4[%c0_15, %c0_16] : memref<32x32xf32, #tpu.memory_space<vmem>>, vector<32x32xf32>
    %36 = vector.shape_cast %35 : vector<32x32xf32> to vector<1x32x32xf32>
    %37 = vector.shape_cast %36 : vector<1x32x32xf32> to vector<1x32x32xf32>
    %38 = vector.broadcast %37 : vector<1x32x32xf32> to vector<10x32x32xf32>
    "tpu.trace_start"() <{level = 10 : i32, message = "bme,bse->bms"}> : () -> ()
    %cst_17 = arith.constant dense<0.000000e+00> : vector<10x32x16xf32>
    %39 = tpu.matmul %38, %32, %cst_17 {dimension_numbers = #tpu.dot_dimension_numbers<[2], [2], [1], [1], [0, 0, 0, 1, 1, 1], [0], [0]>} : vector<10x32x32xf32>, vector<10x16x32xf32>, vector<10x32x16xf32> -> vector<10x32x16xf32>
    "tpu.trace_stop"() : () -> ()
    %cst_18 = arith.constant dense<0xFF800000> : vector<10x32xf32>
    %40 = vector.multi_reduction <maximumf>, %39, %cst_18 [2] : vector<10x32x16xf32> to vector<10x32xf32>
    %41 = vector.shape_cast %40 : vector<10x32xf32> to vector<10x32x1xf32>
    %42 = vector.broadcast %41 : vector<10x32x1xf32> to vector<10x32x16xf32>
    %43 = arith.subf %39, %42 : vector<10x32x16xf32>
    %44 = math.exp %43 : vector<10x32x16xf32>
    %cst_19 = arith.constant dense<0.000000e+00> : vector<10x32xf32>
    %45 = vector.multi_reduction <add>, %44, %cst_19 [2] : vector<10x32x16xf32> to vector<10x32xf32>
    %46 = vector.shape_cast %45 : vector<10x32xf32> to vector<10x32x1xf32>
    %47 = vector.broadcast %46 : vector<10x32x1xf32> to vector<10x32x16xf32>
    %48 = arith.divf %44, %47 : vector<10x32x16xf32>
    %49 = vector.shape_cast %48 : vector<10x32x16xf32> to vector<10x4x8x16xf32>
    %c0_20 = arith.constant 0 : index
    %c0_21 = arith.constant 0 : index
    %c0_22 = arith.constant 0 : index
    %c0_23 = arith.constant 0 : index
    %50 = vector.load %arg12[%c0_20, %c0_21, %c0_22, %c0_23] : memref<10x4x8x16xf32, #tpu.memory_space<vmem>>, vector<10x4x8x16xf32>
    tpu.vector_store %arg12[%c0_20, %c0_21, %c0_22, %c0_23], %49 {strides = array<i32>} : memref<10x4x8x16xf32, #tpu.memory_space<vmem>>, vector<10x4x8x16xf32>,
    "tpu.trace_start"() <{level = 10 : i32, message = "bms,bse->bme"}> : () -> ()
    %cst_24 = arith.constant dense<0.000000e+00> : vector<10x32x32xf32>
    %51 = tpu.matmul %48, %34, %cst_24 {dimension_numbers = #tpu.dot_dimension_numbers<[2], [1], [1], [2], [0, 0, 0, 1, 1, 2], [0], [0]>} : vector<10x32x16xf32>, vector<10x16x32xf32>, vector<10x32x32xf32> -> vector<10x32x32xf32>
    "tpu.trace_stop"() : () -> ()
    %c0_25 = arith.constant 0 : index
    %c0_26 = arith.constant 0 : index
    %52 = vector.load %arg5[%c0_25, %c0_26] : memref<32x32xf32, #tpu.memory_space<vmem>>, vector<32x32xf32>
    %53 = vector.shape_cast %52 : vector<32x32xf32> to vector<1x32x32xf32>
    %54 = vector.broadcast %53 : vector<1x32x32xf32> to vector<10x32x32xf32>
    %55 = arith.mulf %51, %54 : vector<10x32x32xf32>
    %56 = vector.shape_cast %55 : vector<10x32x32xf32> to vector<10x4x8x32xf32>
    %57 = vector.extract_strided_slice %56 {offsets = [0, 0, 0, 0], sizes = [10, 1, 8, 32], strides = [1, 1, 1, 1]} : vector<10x4x8x32xf32> to vector<10x1x8x32xf32>
    %58 = vector.shape_cast %57 : vector<10x1x8x32xf32> to vector<10x8x32xf32>
    %59 = vector.extract_strided_slice %56 {offsets = [0, 1, 0, 0], sizes = [10, 1, 8, 32], strides = [1, 1, 1, 1]} : vector<10x4x8x32xf32> to vector<10x1x8x32xf32>
    %60 = vector.shape_cast %59 : vector<10x1x8x32xf32> to vector<10x8x32xf32>
    %61 = arith.addf %58, %60 : vector<10x8x32xf32>
    %62 = vector.extract_strided_slice %56 {offsets = [0, 2, 0, 0], sizes = [10, 1, 8, 32], strides = [1, 1, 1, 1]} : vector<10x4x8x32xf32> to vector<10x1x8x32xf32>
    %63 = vector.shape_cast %62 : vector<10x1x8x32xf32> to vector<10x8x32xf32>
    %64 = arith.addf %61, %63 : vector<10x8x32xf32>
    %65 = vector.extract_strided_slice %56 {offsets = [0, 3, 0, 0], sizes = [10, 1, 8, 32], strides = [1, 1, 1, 1]} : vector<10x4x8x32xf32> to vector<10x1x8x32xf32>
    %66 = vector.shape_cast %65 : vector<10x1x8x32xf32> to vector<10x8x32xf32>
    %67 = arith.addf %64, %66 : vector<10x8x32xf32>
    %68 = vector.shape_cast %67 : vector<10x8x32xf32> to vector<80x32xf32>
    %c0_27 = arith.constant 0 : index
    %c0_28 = arith.constant 0 : index
    %69 = vector.load %arg9[%c0_27, %c0_28] : memref<32x32xf32, #tpu.memory_space<vmem>>, vector<32x32xf32>
    %cst_29 = arith.constant dense<0.000000e+00> : vector<80x32xf32>
    %70 = tpu.matmul %68, %69, %cst_29 {dimension_numbers = #tpu.dot_dimension_numbers<[1], [0], [0], [1], [0, 0, 1, 1], [], []>} : vector<80x32xf32>, vector<32x32xf32>, vector<80x32xf32> -> vector<80x32xf32>
    %c0_30 = arith.constant 0 : index
    %c0_31 = arith.constant 0 : index
    %71 = vector.load %arg10[%c0_30, %c0_31] : memref<1x32xf32, #tpu.memory_space<vmem>>, vector<1x32xf32>
    %72 = vector.broadcast %71 : vector<1x32xf32> to vector<80x32xf32>
    %73 = arith.addf %70, %72 : vector<80x32xf32>
    %74 = vector.shape_cast %73 : vector<80x32xf32> to vector<10x8x32xf32>
    %c0_32 = arith.constant 0 : index
    %c0_33 = arith.constant 0 : index
    %75 = vector.load %arg6[%c0_32, %c0_33] : memref<8x32xf32, #tpu.memory_space<vmem>>, vector<8x32xf32>
    %76 = vector.shape_cast %75 : vector<8x32xf32> to vector<1x8x32xf32>
    %77 = vector.broadcast %76 : vector<1x8x32xf32> to vector<10x8x32xf32>
    %78 = arith.addf %74, %77 : vector<10x8x32xf32>
    %c0_34 = arith.constant 0 : index
    %c0_35 = arith.constant 0 : index
    %c0_36 = arith.constant 0 : index
    %79 = vector.load %arg11[%c0_34, %c0_35, %c0_36] : memref<10x8x32xf32, #tpu.memory_space<vmem>>, vector<10x8x32xf32>
    tpu.vector_store %arg11[%c0_34, %c0_35, %c0_36], %78 {strides = array<i32>} : memref<10x8x32xf32, #tpu.memory_space<vmem>>, vector<10x8x32xf32>,
    return
  }
  func.func @transform_0(%arg0: i32) -> (i32, i32, i32) {
    %c0_i32 = arith.constant 0 : i32
    %c0_i32_0 = arith.constant 0 : i32
    %c0_i32_1 = arith.constant 0 : i32
    return %arg0, %c0_i32, %c0_i32_0 : i32, i32, i32
  }
  func.func @transform_1(%arg0: i32) -> (i32, i32) {
    %c0_i32 = arith.constant 0 : i32
    %c0_i32_0 = arith.constant 0 : i32
    %c0_i32_1 = arith.constant 0 : i32
    return %c0_i32, %c0_i32_0 : i32, i32
  }
  func.func @transform_2(%arg0: i32) -> (i32, i32) {
    %c0_i32 = arith.constant 0 : i32
    %c0_i32_0 = arith.constant 0 : i32
    %c0_i32_1 = arith.constant 0 : i32
    return %c0_i32, %c0_i32_0 : i32, i32
  }
  func.func @transform_3(%arg0: i32) -> (i32, i32) {
    %c0_i32 = arith.constant 0 : i32
    %c0_i32_0 = arith.constant 0 : i32
    %c0_i32_1 = arith.constant 0 : i32
    return %c0_i32, %c0_i32_0 : i32, i32
  }
  func.func @transform_4(%arg0: i32) -> (i32, i32) {
    %c0_i32 = arith.constant 0 : i32
    %c0_i32_0 = arith.constant 0 : i32
    %c0_i32_1 = arith.constant 0 : i32
    return %c0_i32, %c0_i32_0 : i32, i32
  }
  func.func @transform_5(%arg0: i32) -> (i32, i32) {
    %c0_i32 = arith.constant 0 : i32
    %c0_i32_0 = arith.constant 0 : i32
    %c0_i32_1 = arith.constant 0 : i32
    return %c0_i32, %c0_i32_0 : i32, i32
  }
  func.func @transform_6(%arg0: i32) -> (i32, i32) {
    %c0_i32 = arith.constant 0 : i32
    %c0_i32_0 = arith.constant 0 : i32
    %c0_i32_1 = arith.constant 0 : i32
    return %c0_i32, %c0_i32_0 : i32, i32
  }
  func.func @transform_7(%arg0: i32) -> (i32, i32) {
    %c0_i32 = arith.constant 0 : i32
    %c0_i32_0 = arith.constant 0 : i32
    %c0_i32_1 = arith.constant 0 : i32
    return %c0_i32, %c0_i32_0 : i32, i32
  }
  func.func @transform_8(%arg0: i32) -> (i32, i32) {
    %c0_i32 = arith.constant 0 : i32
    %c0_i32_0 = arith.constant 0 : i32
    %c0_i32_1 = arith.constant 0 : i32
    return %c0_i32, %c0_i32_0 : i32, i32
  }
  func.func @transform_9(%arg0: i32) -> (i32, i32) {
    %c0_i32 = arith.constant 0 : i32
    %c0_i32_0 = arith.constant 0 : i32
    %c0_i32_1 = arith.constant 0 : i32
    return %c0_i32, %c0_i32_0 : i32, i32
  }
  func.func @transform_10(%arg0: i32) -> (i32, i32, i32) {
    %c0_i32 = arith.constant 0 : i32
    %c0_i32_0 = arith.constant 0 : i32
    %c0_i32_1 = arith.constant 0 : i32
    return %arg0, %c0_i32, %c0_i32_0 : i32, i32, i32
  }
  func.func @transform_11(%arg0: i32) -> (i32, i32, i32, i32) {
    %c0_i32 = arith.constant 0 : i32
    %c0_i32_0 = arith.constant 0 : i32
    %c0_i32_1 = arith.constant 0 : i32
    %c0_i32_2 = arith.constant 0 : i32
    return %arg0, %c0_i32, %c0_i32_0, %c0_i32_1 : i32, i32, i32, i32
  }
}

</mosaic_0001>

<llo_original>
// kernel: tpu_custom_call.1
$region0: #{tpu_custom_call.1}
  #allocation0 [shape = 'u32[]', space=smem, size = 0x4, offset = 0x4, fixed_abs, tag = 'smem constant byte address 0x4 - core index']
  #allocation1 [shape = 'u32[144,128]{1,0:T(1,128)}', space=vmem, size = 0x12000, scoped, tag = 'internal scratch']
  %s0 = inlined_call_operand.hbm [shape: f32[20,16,32], index: 0, kind: input, shape index: {}]
  %s1 = inlined_call_operand.vmem [shape: f32[1,32], index: 1, kind: input, shape index: {}]
  %s2 = inlined_call_operand.hbm [shape: f32[1,32], index: 2, kind: input, shape index: {}]
  %s3 = inlined_call_operand.hbm [shape: f32[32,32], index: 3, kind: input, shape index: {}]
  %s4 = inlined_call_operand.hbm [shape: f32[32,32], index: 4, kind: input, shape index: {}]
  %s5 = inlined_call_operand.vmem [shape: f32[8,32], index: 5, kind: input, shape index: {}]
  %s6 = inlined_call_operand.hbm [shape: f32[32,64], index: 6, kind: input, shape index: {}]
  %s7 = inlined_call_operand.vmem [shape: f32[1,64], index: 7, kind: input, shape index: {}]
  %s8 = inlined_call_operand.hbm [shape: f32[32,32], index: 8, kind: input, shape index: {}]
  %s9 = inlined_call_operand.vmem [shape: f32[1,32], index: 9, kind: input, shape index: {}]
  %s10 = inlined_call_operand.hbm [shape: f32[20,8,32], index: 10, kind: output, shape index: {0}]
  %s11 = inlined_call_operand.vmem [shape: f32[20,4,8,16], index: 11, kind: output, shape index: {1}]
  %12 = xla_tuple %s10, %s11
  %s13 = sld [smem:[#allocation0]]
  $region105: #{tpu_custom_call.1} parent=0
    _
  %s15 = ssub.s32 1, %s13
  %s16 = scalar_select 0, %s15, %s13
  $region1: #{tpu_custom_call.1} parent=0
    #allocation2 [shape = 'u8[163840]{0}', space=vmem, size = 0x28000, scoped, tag = 'input window, operand 0']
    #allocation3 [shape = 's32[2]{0}', space=sflag, size = 0x8, scoped, tag = 'scoped memory for tpu_custom_call.1']
    #allocation4 [shape = 's32[2]{0}', space=sflag, size = 0x8, scoped, tag = 'scoped memory for tpu_custom_call.1']
    #allocation5 [shape = 'u8[512]{0}', space=vmem, size = 0x400, scoped, tag = 'input window, operand 2, single buffered']
    #allocation6 [shape = 's32[1]{0}', space=sflag, size = 0x4, scoped, tag = 'scoped memory for tpu_custom_call.1']
    #allocation7 [shape = 'u8[16384]{0}', space=vmem, size = 0x4000, scoped, tag = 'input window, operand 3, single buffered']
    #allocation8 [shape = 'u8[16384]{0}', space=vmem, size = 0x4000, scoped, tag = 'input window, operand 4, single buffered']
    #allocation9 [shape = 's32[1]{0}', space=sflag, size = 0x4, scoped, tag = 'scoped memory for tpu_custom_call.1']
    #allocation10 [shape = 'u8[16384]{0}', space=vmem, size = 0x4000, scoped, tag = 'input window, operand 6, single buffered']
    #allocation11 [shape = 'u8[16384]{0}', space=vmem, size = 0x4000, scoped, tag = 'input window, operand 8, single buffered']
    #allocation12 [shape = 's32[1]{0}', space=sflag, size = 0x4, scoped, tag = 'scoped memory for tpu_custom_call.1']
    #allocation13 [shape = 'u8[81920]{0}', space=vmem, size = 0x14000, scoped, tag = 'output window, operand 0']
    %17 = vsyncpa [#allocation3], 0
    %s18 = scalar_lea.sflag [#allocation3], 1
    %19 = vsyncpa %s18, 0
    %20 = vsyncpa [#allocation6], 0
    %21 = vsyncpa [#allocation9], 0
    %22 = vsyncpa [#allocation12], 0
    %23 = vsyncpa [#allocation4], 0
    %s24 = scalar_lea.sflag [#allocation4], 1
    %25 = vsyncpa %s24, 0
    loop: start=0, step=1, limit=4
    $region2: #{tpu_custom_call.1} parent=1 // loop_pre_header
      _
    $region3: #{tpu_custom_call.1} parent=1 // loop_header
      %s27 = sphi 0, %s31
      %p28 = scmp.ge.s32.totalorder %s27, 4
      %s37 = sphi 0, %s39
      %s40 = sphi 0, %s37
      %s41 = sphi 0, %s40
      %s57 = sphi 0, %s41
      %s61 = sphi 0, %s61
      %s63 = sphi 0, %s61
      %s64 = sphi 0, %s63
      %s78 = sphi 0, %s64
      %s82 = sphi 0, %s82
      %s84 = sphi 0, %s82
      %s85 = sphi 0, %s84
      %s99 = sphi 0, %s85
      %s103 = sphi 0, %s103
      %s105 = sphi 0, %s103
      %s106 = sphi 0, %s105
      %s120 = sphi 0, %s106
      %s124 = sphi 0, %s124
      %s126 = sphi 0, %s124
      %s127 = sphi 0, %s126
      %s141 = sphi 0, %s127
      %s145 = sphi 0, %s145
      %s147 = sphi 0, %s145
      %s148 = sphi 0, %s147
      %s162 = sphi 0, %s148
      %s166 = sphi 0, %s166
      %s168 = sphi 0, %s166
      %s169 = sphi 0, %s168
      %s183 = sphi 0, %s169
      %s187 = sphi 0, %s187
      %s189 = sphi 0, %s187
      %s190 = sphi 0, %s189
      %s204 = sphi 0, %s190
      %s208 = sphi 0, %s208
      %s210 = sphi 0, %s208
      %s211 = sphi 0, %s210
      %s225 = sphi 0, %s211
      %s229 = sphi 0, %s229
      %s231 = sphi 0, %s229
      %s232 = sphi 0, %s231
      %s246 = sphi 0, %s232
      %s252 = sphi 0, %s254
      %s255 = sphi 0, %s252
      %s256 = sphi 0, %s255
      %s272 = sphi 0, %s256
      %s278 = sphi 0, %s280
      %s281 = sphi 0, %s278
      %s282 = sphi 0, %s281
      %s298 = sphi 0, %s282
    $region4: #{tpu_custom_call.1} parent=1 // loop_header_branch
      %30 = sbr.rel (%p28) target = $region8
    $region5: #{tpu_custom_call.1} parent=1 // loop_body
      %s32 = ssub.s32 %s27, 1
      %s33 = ssub.s32 %s27, 2
      %s34 = sadd.s32 %s27, 1
      %s35 = ssub.s32 %s27, %s34
      %p36 = scmp.eq.s32.totalorder %s35, 0
      %s38 = sadd.s32 %s37, 1
      %s39 = scalar_select %p36, %s37, %s38
      %p42 = pneg %p36
      %p43 = scmp.eq.s32.totalorder %s27, 1
      %p44 = por %p42, %p43
      %p45 = scmp.ne.s32.totalorder %s37, %s40
      %p46 = scmp.eq.s32.totalorder %s27, 0
      %p47 = por %p45, %p46
      %p48 = scmp.ne.s32.totalorder %s37, %s40
      %p49 = scmp.eq.s32.totalorder %s32, 1
      %p50 = por %p48, %p49
      %p51 = scmp.ne.s32.totalorder %s40, %s41
      %p52 = scmp.eq.s32.totalorder %s32, 0
      %p53 = por %p51, %p52
      %p54 = scmp.ne.s32.totalorder %s40, %s41
      %p55 = scmp.eq.s32.totalorder %s33, 1
      %p56 = por %p54, %p55
      %p58 = scmp.ne.s32.totalorder %s41, %s57
      %p59 = scmp.eq.s32.totalorder %s33, 0
      %p60 = por %p58, %p59
      %s62 = sadd.s32 %s61, 1
      %p65 = scmp.eq.s32.totalorder %s27, 1
      %p66 = scmp.ne.s32.totalorder %s61, %s63
      %p67 = scmp.eq.s32.totalorder %s27, 0
      %p68 = por %p66, %p67
      %p69 = scmp.ne.s32.totalorder %s61, %s63
      %p70 = scmp.eq.s32.totalorder %s32, 1
      %p71 = por %p69, %p70
      %p72 = scmp.ne.s32.totalorder %s63, %s64
      %p73 = scmp.eq.s32.totalorder %s32, 0
      %p74 = por %p72, %p73
      %p75 = scmp.ne.s32.totalorder %s63, %s64
      %p76 = scmp.eq.s32.totalorder %s33, 1
      %p77 = por %p75, %p76
      %p79 = scmp.ne.s32.totalorder %s64, %s78
      %p80 = scmp.eq.s32.totalorder %s33, 0
      %p81 = por %p79, %p80
      %s83 = sadd.s32 %s82, 1
      %p86 = scmp.eq.s32.totalorder %s27, 1
      %p87 = scmp.ne.s32.totalorder %s82, %s84
      %p88 = scmp.eq.s32.totalorder %s27, 0
      %p89 = por %p87, %p88
      %p90 = scmp.ne.s32.totalorder %s82, %s84
      %p91 = scmp.eq.s32.totalorder %s32, 1
      %p92 = por %p90, %p91
      %p93 = scmp.ne.s32.totalorder %s84, %s85
      %p94 = scmp.eq.s32.totalorder %s32, 0
      %p95 = por %p93, %p94
      %p96 = scmp.ne.s32.totalorder %s84, %s85
      %p97 = scmp.eq.s32.totalorder %s33, 1
      %p98 = por %p96, %p97
      %p100 = scmp.ne.s32.totalorder %s85, %s99
      %p101 = scmp.eq.s32.totalorder %s33, 0
      %p102 = por %p100, %p101
      %s104 = sadd.s32 %s103, 1
      %p107 = scmp.eq.s32.totalorder %s27, 1
      %p108 = scmp.ne.s32.totalorder %s103, %s105
      %p109 = scmp.eq.s32.totalorder %s27, 0
      %p110 = por %p108, %p109
      %p111 = scmp.ne.s32.totalorder %s103, %s105
      %p112 = scmp.eq.s32.totalorder %s32, 1
      %p113 = por %p111, %p112
      %p114 = scmp.ne.s32.totalorder %s105, %s106
      %p115 = scmp.eq.s32.totalorder %s32, 0
      %p116 = por %p114, %p115
      %p117 = scmp.ne.s32.totalorder %s105, %s106
      %p118 = scmp.eq.s32.totalorder %s33, 1
      %p119 = por %p117, %p118
      %p121 = scmp.ne.s32.totalorder %s106, %s120
      %p122 = scmp.eq.s32.totalorder %s33, 0
      %p123 = por %p121, %p122
      %s125 = sadd.s32 %s124, 1
      %p128 = scmp.eq.s32.totalorder %s27, 1
      %p129 = scmp.ne.s32.totalorder %s124, %s126
      %p130 = scmp.eq.s32.totalorder %s27, 0
      %p131 = por %p129, %p130
      %p132 = scmp.ne.s32.totalorder %s124, %s126
      %p133 = scmp.eq.s32.totalorder %s32, 1
      %p134 = por %p132, %p133
      %p135 = scmp.ne.s32.totalorder %s126, %s127
      %p136 = scmp.eq.s32.totalorder %s32, 0
      %p137 = por %p135, %p136
      %p138 = scmp.ne.s32.totalorder %s126, %s127
      %p139 = scmp.eq.s32.totalorder %s33, 1
      %p140 = por %p138, %p139
      %p142 = scmp.ne.s32.totalorder %s127, %s141
      %p143 = scmp.eq.s32.totalorder %s33, 0
      %p144 = por %p142, %p143
      %s146 = sadd.s32 %s145, 1
      %p149 = scmp.eq.s32.totalorder %s27, 1
      %p150 = scmp.ne.s32.totalorder %s145, %s147
      %p151 = scmp.eq.s32.totalorder %s27, 0
      %p152 = por %p150, %p151
      %p153 = scmp.ne.s32.totalorder %s145, %s147
      %p154 = scmp.eq.s32.totalorder %s32, 1
      %p155 = por %p153, %p154
      %p156 = scmp.ne.s32.totalorder %s147, %s148
      %p157 = scmp.eq.s32.totalorder %s32, 0
      %p158 = por %p156, %p157
      %p159 = scmp.ne.s32.totalorder %s147, %s148
      %p160 = scmp.eq.s32.totalorder %s33, 1
      %p161 = por %p159, %p160
      %p163 = scmp.ne.s32.totalorder %s148, %s162
      %p164 = scmp.eq.s32.totalorder %s33, 0
      %p165 = por %p163, %p164
      %s167 = sadd.s32 %s166, 1
      %p170 = scmp.eq.s32.totalorder %s27, 1
      %p171 = scmp.ne.s32.totalorder %s166, %s168
      %p172 = scmp.eq.s32.totalorder %s27, 0
      %p173 = por %p171, %p172
      %p174 = scmp.ne.s32.totalorder %s166, %s168
      %p175 = scmp.eq.s32.totalorder %s32, 1
      %p176 = por %p174, %p175
      %p177 = scmp.ne.s32.totalorder %s168, %s169
      %p178 = scmp.eq.s32.totalorder %s32, 0
      %p179 = por %p177, %p178
      %p180 = scmp.ne.s32.totalorder %s168, %s169
      %p181 = scmp.eq.s32.totalorder %s33, 1
      %p182 = por %p180, %p181
      %p184 = scmp.ne.s32.totalorder %s169, %s183
      %p185 = scmp.eq.s32.totalorder %s33, 0
      %p186 = por %p184, %p185
      %s188 = sadd.s32 %s187, 1
      %p191 = scmp.eq.s32.totalorder %s27, 1
      %p192 = scmp.ne.s32.totalorder %s187, %s189
      %p193 = scmp.eq.s32.totalorder %s27, 0
      %p194 = por %p192, %p193
      %p195 = scmp.ne.s32.totalorder %s187, %s189
      %p196 = scmp.eq.s32.totalorder %s32, 1
      %p197 = por %p195, %p196
      %p198 = scmp.ne.s32.totalorder %s189, %s190
      %p199 = scmp.eq.s32.totalorder %s32, 0
      %p200 = por %p198, %p199
      %p201 = scmp.ne.s32.totalorder %s189, %s190
      %p202 = scmp.eq.s32.totalorder %s33, 1
      %p203 = por %p201, %p202
      %p205 = scmp.ne.s32.totalorder %s190, %s204
      %p206 = scmp.eq.s32.totalorder %s33, 0
      %p207 = por %p205, %p206
      %s209 = sadd.s32 %s208, 1
      %p212 = scmp.eq.s32.totalorder %s27, 1
      %p213 = scmp.ne.s32.totalorder %s208, %s210
      %p214 = scmp.eq.s32.totalorder %s27, 0
      %p215 = por %p213, %p214
      %p216 = scmp.ne.s32.totalorder %s208, %s210
      %p217 = scmp.eq.s32.totalorder %s32, 1
      %p218 = por %p216, %p217
      %p219 = scmp.ne.s32.totalorder %s210, %s211
      %p220 = scmp.eq.s32.totalorder %s32, 0
      %p221 = por %p219, %p220
      %p222 = scmp.ne.s32.totalorder %s210, %s211
      %p223 = scmp.eq.s32.totalorder %s33, 1
      %p224 = por %p222, %p223
      %p226 = scmp.ne.s32.totalorder %s211, %s225
      %p227 = scmp.eq.s32.totalorder %s33, 0
      %p228 = por %p226, %p227
      %s230 = sadd.s32 %s229, 1
      %p233 = scmp.eq.s32.totalorder %s27, 1
      %p234 = scmp.ne.s32.totalorder %s229, %s231
      %p235 = scmp.eq.s32.totalorder %s27, 0
      %p236 = por %p234, %p235
      %p237 = scmp.ne.s32.totalorder %s229, %s231
      %p238 = scmp.eq.s32.totalorder %s32, 1
      %p239 = por %p237, %p238
      %p240 = scmp.ne.s32.totalorder %s231, %s232
      %p241 = scmp.eq.s32.totalorder %s32, 0
      %p242 = por %p240, %p241
      %p243 = scmp.ne.s32.totalorder %s231, %s232
      %p244 = scmp.eq.s32.totalorder %s33, 1
      %p245 = por %p243, %p244
      %p247 = scmp.ne.s32.totalorder %s232, %s246
      %p248 = scmp.eq.s32.totalorder %s33, 0
      %p249 = por %p247, %p248
      %s250 = ssub.s32 %s27, %s34
      %p251 = scmp.eq.s32.totalorder %s250, 0
      %s253 = sadd.s32 %s252, 1
      %s254 = scalar_select %p251, %s252, %s253
      %p257 = pneg %p251
      %p258 = scmp.eq.s32.totalorder %s27, 1
      %p259 = por %p257, %p258
      %p260 = scmp.ne.s32.totalorder %s252, %s255
      %p261 = scmp.eq.s32.totalorder %s27, 0
      %p262 = por %p260, %p261
      %p263 = scmp.ne.s32.totalorder %s252, %s255
      %p264 = scmp.eq.s32.totalorder %s32, 1
      %p265 = por %p263, %p264
      %p266 = scmp.ne.s32.totalorder %s255, %s256
      %p267 = scmp.eq.s32.totalorder %s32, 0
      %p268 = por %p266, %p267
      %p269 = scmp.ne.s32.totalorder %s255, %s256
      %p270 = scmp.eq.s32.totalorder %s33, 1
      %p271 = por %p269, %p270
      %p273 = scmp.ne.s32.totalorder %s256, %s272
      %p274 = scmp.eq.s32.totalorder %s33, 0
      %p275 = por %p273, %p274
      %s276 = ssub.s32 %s27, %s34
      %p277 = scmp.eq.s32.totalorder %s276, 0
      %s279 = sadd.s32 %s278, 1
      %s280 = scalar_select %p277, %s278, %s279
      %p283 = pneg %p277
      %p284 = scmp.eq.s32.totalorder %s27, 1
      %p285 = por %p283, %p284
      %p286 = scmp.ne.s32.totalorder %s278, %s281
      %p287 = scmp.eq.s32.totalorder %s27, 0
      %p288 = por %p286, %p287
      %p289 = scmp.ne.s32.totalorder %s278, %s281
      %p290 = scmp.eq.s32.totalorder %s32, 1
      %p291 = por %p289, %p290
      %p292 = scmp.ne.s32.totalorder %s281, %s282
      %p293 = scmp.eq.s32.totalorder %s32, 0
      %p294 = por %p292, %p293
      %p295 = scmp.ne.s32.totalorder %s281, %s282
      %p296 = scmp.eq.s32.totalorder %s33, 1
      %p297 = por %p295, %p296
      %p299 = scmp.ne.s32.totalorder %s282, %s298
      %p300 = scmp.eq.s32.totalorder %s33, 0
      %p301 = por %p299, %p300
      %p302 = scmp.le.s32.totalorder 1, %s27
      %p303 = scmp.lt.s32.totalorder %s27, 3
      %p304 = pnand %p302, %p303
      %p305 = pneg %p304
      // Predicated region
      $region9: #{tpu_custom_call.1} parent=5 // pred_check
        _
      $region10: #{tpu_custom_call.1} parent=5 // pred_check_branch
        %307 = sbr.rel (%p304) target = $region12
      $region11: #{tpu_custom_call.1} parent=5 // pred_region
        %s308 = ssub.s32 %s27, 1
        // Predicated region
        $region13: #{tpu_custom_call.1} parent=11 // pred_check
          %p309 = pneg %p74
        $region14: #{tpu_custom_call.1} parent=11 // pred_check_branch
          %311 = sbr.rel (%p309) target = $region16
        $region15: #{tpu_custom_call.1} parent=11 // pred_region
          _
        $region16: #{tpu_custom_call.1} parent=11 // pred_fallthru
          _
        // Predicated region
        $region17: #{tpu_custom_call.1} parent=11 // pred_check
          %p312 = pneg %p95
        $region18: #{tpu_custom_call.1} parent=11 // pred_check_branch
          %314 = sbr.rel (%p312) target = $region20
        $region19: #{tpu_custom_call.1} parent=11 // pred_region
          %s316 = ssub.s32 16, 16
          %317 = vsyncadd [#allocation6], %s316
          %s319 = sshll.u32 [#allocation5], 4
          %s320 = int_to_ptr.vmem [resolvable:$true] %s319
          %322 = dma.hbm_to_vmem [thread:$0]  %s2, 16, %s320, [#allocation6]
        $region20: #{tpu_custom_call.1} parent=11 // pred_fallthru
          _
        // Predicated region
        $region21: #{tpu_custom_call.1} parent=11 // pred_check
          %p323 = pneg %p116
        $region22: #{tpu_custom_call.1} parent=11 // pred_check_branch
          %325 = sbr.rel (%p323) target = $region24
        $region23: #{tpu_custom_call.1} parent=11 // pred_region
          %s327 = ssub.s32 512, 512
          %328 = vsyncadd [#allocation6], %s327
          %s329 = sshll.u32 [#allocation7], 4
          %s330 = int_to_ptr.vmem [resolvable:$true] %s329
          %335 = dma.hbm_to_vmem [thread:$0]  %s3, 512, %s330, [#allocation6], 128, 128, 8
        $region24: #{tpu_custom_call.1} parent=11 // pred_fallthru
          _
        // Predicated region
        $region25: #{tpu_custom_call.1} parent=11 // pred_check
          %p336 = pneg %p137
        $region26: #{tpu_custom_call.1} parent=11 // pred_check_branch
          %338 = sbr.rel (%p336) target = $region28
        $region27: #{tpu_custom_call.1} parent=11 // pred_region
          %s340 = ssub.s32 512, 512
          %341 = vsyncadd [#allocation9], %s340
          %s342 = sshll.u32 [#allocation8], 4
          %s343 = int_to_ptr.vmem [resolvable:$true] %s342
          %348 = dma.hbm_to_vmem [thread:$0]  %s4, 512, %s343, [#allocation9], 128, 128, 8
        $region28: #{tpu_custom_call.1} parent=11 // pred_fallthru
          _
        // Predicated region
        $region29: #{tpu_custom_call.1} parent=11 // pred_check
          %p349 = pneg %p158
        $region30: #{tpu_custom_call.1} parent=11 // pred_check_branch
          %351 = sbr.rel (%p349) target = $region32
        $region31: #{tpu_custom_call.1} parent=11 // pred_region
          _
        $region32: #{tpu_custom_call.1} parent=11 // pred_fallthru
          _
        // Predicated region
        $region33: #{tpu_custom_call.1} parent=11 // pred_check
          %p352 = pneg %p179
        $region34: #{tpu_custom_call.1} parent=11 // pred_check_branch
          %354 = sbr.rel (%p352) target = $region36
        $region35: #{tpu_custom_call.1} parent=11 // pred_region
          %s356 = ssub.s32 512, 512
          %357 = vsyncadd [#allocation9], %s356
          %s358 = sshll.u32 [#allocation10], 4
          %s359 = int_to_ptr.vmem [resolvable:$true] %s358
          %364 = dma.hbm_to_vmem [thread:$0]  %s6, 512, %s359, [#allocation9], 128, 128, 8
        $region36: #{tpu_custom_call.1} parent=11 // pred_fallthru
          _
        // Predicated region
        $region37: #{tpu_custom_call.1} parent=11 // pred_check
          %p365 = pneg %p200
        $region38: #{tpu_custom_call.1} parent=11 // pred_check_branch
          %367 = sbr.rel (%p365) target = $region40
        $region39: #{tpu_custom_call.1} parent=11 // pred_region
          _
        $region40: #{tpu_custom_call.1} parent=11 // pred_fallthru
          _
        // Predicated region
        $region41: #{tpu_custom_call.1} parent=11 // pred_check
          %p368 = pneg %p221
        $region42: #{tpu_custom_call.1} parent=11 // pred_check_branch
          %370 = sbr.rel (%p368) target = $region44
        $region43: #{tpu_custom_call.1} parent=11 // pred_region
          %s372 = ssub.s32 512, 512
          %373 = vsyncadd [#allocation12], %s372
          %s374 = sshll.u32 [#allocation11], 4
          %s375 = int_to_ptr.vmem [resolvable:$true] %s374
          %380 = dma.hbm_to_vmem [thread:$0]  %s8, 512, %s375, [#allocation12], 128, 128, 8
        $region44: #{tpu_custom_call.1} parent=11 // pred_fallthru
          _
        // Predicated region
        $region45: #{tpu_custom_call.1} parent=11 // pred_check
          %p381 = pneg %p242
        $region46: #{tpu_custom_call.1} parent=11 // pred_check_branch
          %383 = sbr.rel (%p381) target = $region48
        $region47: #{tpu_custom_call.1} parent=11 // pred_region
          _
        $region48: #{tpu_custom_call.1} parent=11 // pred_fallthru
          _
      $region12: #{tpu_custom_call.1} parent=5 // pred_fallthru
        _
      %p384 = scmp.lt.s32.totalorder %s27, 2
      // Predicated region
      $region49: #{tpu_custom_call.1} parent=5 // pred_check
        %p385 = pneg %p384
      $region50: #{tpu_custom_call.1} parent=5 // pred_check_branch
        %387 = sbr.rel (%p385) target = $region52
      $region51: #{tpu_custom_call.1} parent=5 // pred_region
        // Predicated region
        $region53: #{tpu_custom_call.1} parent=51 // pred_check
          %p388 = pneg %p47
        $region54: #{tpu_custom_call.1} parent=51 // pred_check_branch
          %390 = sbr.rel (%p388) target = $region56
        $region55: #{tpu_custom_call.1} parent=51 // pred_region
          %s391 = sand.u32 %s37, 1
          %s392 = scalar_lea.sflag [#allocation3], %s391
          %s393 = sand.u32 %s37, 1
          %s394 = smul.addr %s393, 160
          %s395 = scalar_lea.vmem [#allocation2], %s394
          %s396 = smul.u32 10, %s27
          %s398 = ssub.s32 2560, 2560
          %399 = vsyncadd %s392, %s398
          %s400 = smul.addr %s396, 2
          %s401 = smul.addr %s400, 128
          %s402 = scalar_lea.hbm %s0, %s401
          %s403 = sshll.u32 %s395, 4
          %s404 = int_to_ptr.vmem [resolvable:$true] %s403
          %409 = dma.hbm_to_vmem [thread:$0]  %s402, 2560, %s404, %s392, 128, 128, 8
        $region56: #{tpu_custom_call.1} parent=51 // pred_fallthru
          _
      $region52: #{tpu_custom_call.1} parent=5 // pred_fallthru
        _
      %p410 = scmp.le.s32.totalorder 1, %s27
      %p411 = scmp.lt.s32.totalorder %s27, 3
      %p412 = pnand %p410, %p411
      %p413 = pneg %p412
      // Predicated region
      $region57: #{tpu_custom_call.1} parent=5 // pred_check
        _
      $region58: #{tpu_custom_call.1} parent=5 // pred_check_branch
        %415 = sbr.rel (%p412) target = $region60
      $region59: #{tpu_custom_call.1} parent=5 // pred_region
        %s416 = ssub.s32 %s27, 1
        %s417 = sand.u32 %s40, 1
        %s418 = scalar_lea.sflag [#allocation3], %s417
        %s419 = sand.u32 %s40, 1
        %s420 = smul.addr %s419, 160
        %s421 = scalar_lea.vmem [#allocation2], %s420
        // Predicated region
        $region61: #{tpu_custom_call.1} parent=59 // pred_check
          %p422 = pneg %p53
        $region62: #{tpu_custom_call.1} parent=59 // pred_check_branch
          %424 = sbr.rel (%p422) target = $region64
        $region63: #{tpu_custom_call.1} parent=59 // pred_region
          %425 = dma.done %s418, 2560
        $region64: #{tpu_custom_call.1} parent=59 // pred_fallthru
          _
        // Predicated region
        $region65: #{tpu_custom_call.1} parent=59 // pred_check
          %p426 = pneg %p95
        $region66: #{tpu_custom_call.1} parent=59 // pred_check_branch
          %428 = sbr.rel (%p426) target = $region68
        $region67: #{tpu_custom_call.1} parent=59 // pred_region
          %429 = dma.done [#allocation6], 16
        $region68: #{tpu_custom_call.1} parent=59 // pred_fallthru
          _
        // Predicated region
        $region69: #{tpu_custom_call.1} parent=59 // pred_check
          %p430 = pneg %p116
        $region70: #{tpu_custom_call.1} parent=59 // pred_check_branch
          %432 = sbr.rel (%p430) target = $region72
        $region71: #{tpu_custom_call.1} parent=59 // pred_region
          %433 = dma.done [#allocation6], 512
        $region72: #{tpu_custom_call.1} parent=59 // pred_fallthru
          _
        // Predicated region
        $region73: #{tpu_custom_call.1} parent=59 // pred_check
          %p434 = pneg %p137
        $region74: #{tpu_custom_call.1} parent=59 // pred_check_branch
          %436 = sbr.rel (%p434) target = $region76
        $region75: #{tpu_custom_call.1} parent=59 // pred_region
          %437 = dma.done [#allocation9], 512
        $region76: #{tpu_custom_call.1} parent=59 // pred_fallthru
          _
        // Predicated region
        $region77: #{tpu_custom_call.1} parent=59 // pred_check
          %p438 = pneg %p179
        $region78: #{tpu_custom_call.1} parent=59 // pred_check_branch
          %440 = sbr.rel (%p438) target = $region80
        $region79: #{tpu_custom_call.1} parent=59 // pred_region
          %441 = dma.done [#allocation9], 512
        $region80: #{tpu_custom_call.1} parent=59 // pred_fallthru
          _
        // Predicated region
        $region81: #{tpu_custom_call.1} parent=59 // pred_check
          %p442 = pneg %p221
        $region82: #{tpu_custom_call.1} parent=59 // pred_check_branch
          %444 = sbr.rel (%p442) target = $region84
        $region83: #{tpu_custom_call.1} parent=59 // pred_region
          %445 = dma.done [#allocation12], 512
        $region84: #{tpu_custom_call.1} parent=59 // pred_fallthru
          _
        %s446 = sand.u32 %s40, 1
        %s447 = scalar_lea.sflag [#allocation3], %s446
        %s448 = sand.u32 %s40, 1
        %s449 = smul.addr %s448, 160
        %s450 = scalar_lea.vmem [#allocation2], %s449
        %p451 = pneg %p53
        %p452 = pneg %p50
        %p453 = pneg %p74
        %p454 = pneg %p71
        %p455 = pneg %p95
        %p456 = pneg %p92
        %p457 = pneg %p116
        %p458 = pneg %p113
        %p459 = pneg %p137
        %p460 = pneg %p134
        %p461 = pneg %p158
        %p462 = pneg %p155
        %p463 = pneg %p179
        %p464 = pneg %p176
        %p465 = pneg %p200
        %p466 = pneg %p197
        %p467 = pneg %p221
        %p468 = pneg %p218
        %p469 = pneg %p242
        %p470 = pneg %p239
        %p471 = pneg %p268
        %p472 = pneg %p265
        %s473 = sand.u32 %s255, 1
        %s474 = scalar_lea.sflag [#allocation4], %s473
        %s475 = sand.u32 %s255, 1
        %s476 = smul.addr %s475, 80
        %s477 = scalar_lea.vmem [#allocation13], %s476
        %p478 = pneg %p294
        %p479 = pneg %p291
        %s480 = smul.u32 10, %s32
        %p481 = scmp.lt.s32.totalorder %s480, 19
        %s482 = scalar_select %p481, %s480, 19
        %s483 = smul.addr %s482, 4
        %s484 = smul.addr %s483, 8
        %s485 = scalar_lea.vmem %s11, %s484
        %s486 = smul.u32 10, %s32
        %s487 = smul.u32 10, %s32
        %s488 = smul.u32 10, %s32
        %p489 = scmp.lt.s32.totalorder %s488, 19
        %s490 = scalar_select %p489, %s488, 19
        %s491 = smul.addr %s490, 4
        %s492 = smul.addr %s491, 8
        %s493 = scalar_lea.vmem %s11, %s492
        %s494 = smul.u32 10, %s32
        %v495 = vld [vmem:[%s421] sm:$0xff]
        %v496 = vld [vmem:[%s421 + $0x8] sm:$0xff]
        %v497 = vld [vmem:[%s421 + $0x10] sm:$0xff]
        %v498 = vld [vmem:[%s421 + $0x18] sm:$0xff]
        %v499 = vld [vmem:[%s421 + $0x20] sm:$0xff]
        %v500 = vld [vmem:[%s421 + $0x28] sm:$0xff]
        %v501 = vld [vmem:[%s421 + $0x30] sm:$0xff]
        %v502 = vld [vmem:[%s421 + $0x38] sm:$0xff]
        %v503 = vld [vmem:[%s421 + $0x40] sm:$0xff]
        %v504 = vld [vmem:[%s421 + $0x48] sm:$0xff]
        %v505 = vld [vmem:[%s421 + $0x50] sm:$0xff]
        %v506 = vld [vmem:[%s421 + $0x58] sm:$0xff]
        %v507 = vld [vmem:[%s421 + $0x60] sm:$0xff]
        %v508 = vld [vmem:[%s421 + $0x68] sm:$0xff]
        %v509 = vld [vmem:[%s421 + $0x70] sm:$0xff]
        %v510 = vld [vmem:[%s421 + $0x78] sm:$0xff]
        %v511 = vld [vmem:[%s421 + $0x80] sm:$0xff]
        %v512 = vld [vmem:[%s421 + $0x88] sm:$0xff]
        %v513 = vld [vmem:[%s421 + $0x90] sm:$0xff]
        %v514 = vld [vmem:[%s421 + $0x98] sm:$0xff]
        %vm515 = vcmask 261120
        %v516 = vsel %vm515, %v495, 0.0
        %517 = vadd.xlane.f32.xlu0 %v516
        %v518 = vpop.xlane.xlu0 %517
        %v519 = vsel %vm515, %v496, 0.0
        %520 = vadd.xlane.f32.xlu0 %v519
        %v521 = vpop.xlane.xlu0 %520
        %v522 = vsel %vm515, %v497, 0.0
        %523 = vadd.xlane.f32.xlu0 %v522
        %v524 = vpop.xlane.xlu0 %523
        %v525 = vsel %vm515, %v498, 0.0
        %526 = vadd.xlane.f32.xlu0 %v525
        %v527 = vpop.xlane.xlu0 %526
        %v528 = vsel %vm515, %v499, 0.0
        %529 = vadd.xlane.f32.xlu0 %v528
        %v530 = vpop.xlane.xlu0 %529
        %v531 = vsel %vm515, %v500, 0.0
        %532 = vadd.xlane.f32.xlu0 %v531
        %v533 = vpop.xlane.xlu0 %532
        %v534 = vsel %vm515, %v501, 0.0
        %535 = vadd.xlane.f32.xlu0 %v534
        %v536 = vpop.xlane.xlu0 %535
        %v537 = vsel %vm515, %v502, 0.0
        %538 = vadd.xlane.f32.xlu0 %v537
        %v539 = vpop.xlane.xlu0 %538
        %v540 = vsel %vm515, %v503, 0.0
        %541 = vadd.xlane.f32.xlu0 %v540
        %v542 = vpop.xlane.xlu0 %541
        %v543 = vsel %vm515, %v504, 0.0
        %544 = vadd.xlane.f32.xlu0 %v543
        %v545 = vpop.xlane.xlu0 %544
        %v546 = vsel %vm515, %v505, 0.0
        %547 = vadd.xlane.f32.xlu0 %v546
        %v548 = vpop.xlane.xlu0 %547
        %v549 = vsel %vm515, %v506, 0.0
        %550 = vadd.xlane.f32.xlu0 %v549
        %v551 = vpop.xlane.xlu0 %550
        %v552 = vsel %vm515, %v507, 0.0
        %553 = vadd.xlane.f32.xlu0 %v552
        %v554 = vpop.xlane.xlu0 %553
        %v555 = vsel %vm515, %v508, 0.0
        %556 = vadd.xlane.f32.xlu0 %v555
        %v557 = vpop.xlane.xlu0 %556
        %v558 = vsel %vm515, %v509, 0.0
        %559 = vadd.xlane.f32.xlu0 %v558
        %v560 = vpop.xlane.xlu0 %559
        %v561 = vsel %vm515, %v510, 0.0
        %562 = vadd.xlane.f32.xlu0 %v561
        %v563 = vpop.xlane.xlu0 %562
        %v564 = vsel %vm515, %v511, 0.0
        %565 = vadd.xlane.f32.xlu0 %v564
        %v566 = vpop.xlane.xlu0 %565
        %v567 = vsel %vm515, %v512, 0.0
        %568 = vadd.xlane.f32.xlu0 %v567
        %v569 = vpop.xlane.xlu0 %568
        %v570 = vsel %vm515, %v513, 0.0
        %571 = vadd.xlane.f32.xlu0 %v570
        %v572 = vpop.xlane.xlu0 %571
        %v573 = vsel %vm515, %v514, 0.0
        %574 = vadd.xlane.f32.xlu0 %v573
        %v575 = vpop.xlane.xlu0 %574
        %v576 = vmul.f32 %v518, 0.03125
        %v577 = vmul.f32 %v521, 0.03125
        %v578 = vmul.f32 %v524, 0.03125
        %v579 = vmul.f32 %v527, 0.03125
        %v580 = vmul.f32 %v530, 0.03125
        %v581 = vmul.f32 %v533, 0.03125
        %v582 = vmul.f32 %v536, 0.03125
        %v583 = vmul.f32 %v539, 0.03125
        %v584 = vmul.f32 %v542, 0.03125
        %v585 = vmul.f32 %v545, 0.03125
        %v586 = vmul.f32 %v548, 0.03125
        %v587 = vmul.f32 %v551, 0.03125
        %v588 = vmul.f32 %v554, 0.03125
        %v589 = vmul.f32 %v557, 0.03125
        %v590 = vmul.f32 %v560, 0.03125
        %v591 = vmul.f32 %v563, 0.03125
        %v592 = vmul.f32 %v566, 0.03125
        %v593 = vmul.f32 %v569, 0.03125
        %v594 = vmul.f32 %v572, 0.03125
        %v595 = vmul.f32 %v575, 0.03125
        %v596 = vmul.f32 %v495, %v495
        %v597 = vmul.f32 %v496, %v496
        %v598 = vmul.f32 %v497, %v497
        %v599 = vmul.f32 %v498, %v498
        %v600 = vmul.f32 %v499, %v499
        %v601 = vmul.f32 %v500, %v500
        %v602 = vmul.f32 %v501, %v501
        %v603 = vmul.f32 %v502, %v502
        %v604 = vmul.f32 %v503, %v503
        %v605 = vmul.f32 %v504, %v504
        %v606 = vmul.f32 %v505, %v505
        %v607 = vmul.f32 %v506, %v506
        %v608 = vmul.f32 %v507, %v507
        %v609 = vmul.f32 %v508, %v508
        %v610 = vmul.f32 %v509, %v509
        %v611 = vmul.f32 %v510, %v510
        %v612 = vmul.f32 %v511, %v511
        %v613 = vmul.f32 %v512, %v512
        %v614 = vmul.f32 %v513, %v513
        %v615 = vmul.f32 %v514, %v514
        %v616 = vsel %vm515, %v596, 0.0
        %617 = vadd.xlane.f32.xlu0 %v616
        %v618 = vpop.xlane.xlu0 %617
        %v619 = vsel %vm515, %v597, 0.0
        %620 = vadd.xlane.f32.xlu0 %v619
        %v621 = vpop.xlane.xlu0 %620
        %v622 = vsel %vm515, %v598, 0.0
        %623 = vadd.xlane.f32.xlu0 %v622
        %v624 = vpop.xlane.xlu0 %623
        %v625 = vsel %vm515, %v599, 0.0
        %626 = vadd.xlane.f32.xlu0 %v625
        %v627 = vpop.xlane.xlu0 %626
        %v628 = vsel %vm515, %v600, 0.0
        %629 = vadd.xlane.f32.xlu0 %v628
        %v630 = vpop.xlane.xlu0 %629
        %v631 = vsel %vm515, %v601, 0.0
        %632 = vadd.xlane.f32.xlu0 %v631
        %v633 = vpop.xlane.xlu0 %632
        %v634 = vsel %vm515, %v602, 0.0
        %635 = vadd.xlane.f32.xlu0 %v634
        %v636 = vpop.xlane.xlu0 %635
        %v637 = vsel %vm515, %v603, 0.0
        %638 = vadd.xlane.f32.xlu0 %v637
        %v639 = vpop.xlane.xlu0 %638
        %v640 = vsel %vm515, %v604, 0.0
        %641 = vadd.xlane.f32.xlu0 %v640
        %v642 = vpop.xlane.xlu0 %641
        %v643 = vsel %vm515, %v605, 0.0
        %644 = vadd.xlane.f32.xlu0 %v643
        %v645 = vpop.xlane.xlu0 %644
        %v646 = vsel %vm515, %v606, 0.0
        %647 = vadd.xlane.f32.xlu0 %v646
        %v648 = vpop.xlane.xlu0 %647
        %v649 = vsel %vm515, %v607, 0.0
        %650 = vadd.xlane.f32.xlu0 %v649
        %v651 = vpop.xlane.xlu0 %650
        %v652 = vsel %vm515, %v608, 0.0
        %653 = vadd.xlane.f32.xlu0 %v652
        %v654 = vpop.xlane.xlu0 %653
        %v655 = vsel %vm515, %v609, 0.0
        %656 = vadd.xlane.f32.xlu0 %v655
        %v657 = vpop.xlane.xlu0 %656
        %v658 = vsel %vm515, %v610, 0.0
        %659 = vadd.xlane.f32.xlu0 %v658
        %v660 = vpop.xlane.xlu0 %659
        %v661 = vsel %vm515, %v611, 0.0
        %662 = vadd.xlane.f32.xlu0 %v661
        %v663 = vpop.xlane.xlu0 %662
        %v664 = vsel %vm515, %v612, 0.0
        %665 = vadd.xlane.f32.xlu0 %v664
        %v666 = vpop.xlane.xlu0 %665
        %v667 = vsel %vm515, %v613, 0.0
        %668 = vadd.xlane.f32.xlu0 %v667
        %v669 = vpop.xlane.xlu0 %668
        %v670 = vsel %vm515, %v614, 0.0
        %671 = vadd.xlane.f32.xlu0 %v670
        %v672 = vpop.xlane.xlu0 %671
        %v673 = vsel %vm515, %v615, 0.0
        %674 = vadd.xlane.f32.xlu0 %v673
        %v675 = vpop.xlane.xlu0 %674
        %v676 = vmul.f32 %v618, 0.03125
        %v677 = vmul.f32 %v621, 0.03125
        %v678 = vmul.f32 %v624, 0.03125
        %v679 = vmul.f32 %v627, 0.03125
        %v680 = vmul.f32 %v630, 0.03125
        %v681 = vmul.f32 %v633, 0.03125
        %v682 = vmul.f32 %v636, 0.03125
        %v683 = vmul.f32 %v639, 0.03125
        %v684 = vmul.f32 %v642, 0.03125
        %v685 = vmul.f32 %v645, 0.03125
        %v686 = vmul.f32 %v648, 0.03125
        %v687 = vmul.f32 %v651, 0.03125
        %v688 = vmul.f32 %v654, 0.03125
        %v689 = vmul.f32 %v657, 0.03125
        %v690 = vmul.f32 %v660, 0.03125
        %v691 = vmul.f32 %v663, 0.03125
        %v692 = vmul.f32 %v666, 0.03125
        %v693 = vmul.f32 %v669, 0.03125
        %v694 = vmul.f32 %v672, 0.03125
        %v695 = vmul.f32 %v675, 0.03125
        %v696 = vmul.f32 %v576, %v576
        %v697 = vmul.f32 %v577, %v577
        %v698 = vmul.f32 %v578, %v578
        %v699 = vmul.f32 %v579, %v579
        %v700 = vmul.f32 %v580, %v580
        %v701 = vmul.f32 %v581, %v581
        %v702 = vmul.f32 %v582, %v582
        %v703 = vmul.f32 %v583, %v583
        %v704 = vmul.f32 %v584, %v584
        %v705 = vmul.f32 %v585, %v585
        %v706 = vmul.f32 %v586, %v586
        %v707 = vmul.f32 %v587, %v587
        %v708 = vmul.f32 %v588, %v588
        %v709 = vmul.f32 %v589, %v589
        %v710 = vmul.f32 %v590, %v590
        %v711 = vmul.f32 %v591, %v591
        %v712 = vmul.f32 %v592, %v592
        %v713 = vmul.f32 %v593, %v593
        %v714 = vmul.f32 %v594, %v594
        %v715 = vmul.f32 %v595, %v595
        %v716 = vsub.f32 %v676, %v696
        %v717 = vsub.f32 %v677, %v697
        %v718 = vsub.f32 %v678, %v698
        %v719 = vsub.f32 %v679, %v699
        %v720 = vsub.f32 %v680, %v700
        %v721 = vsub.f32 %v681, %v701
        %v722 = vsub.f32 %v682, %v702
        %v723 = vsub.f32 %v683, %v703
        %v724 = vsub.f32 %v684, %v704
        %v725 = vsub.f32 %v685, %v705
        %v726 = vsub.f32 %v686, %v706
        %v727 = vsub.f32 %v687, %v707
        %v728 = vsub.f32 %v688, %v708
        %v729 = vsub.f32 %v689, %v709
        %v730 = vsub.f32 %v690, %v710
        %v731 = vsub.f32 %v691, %v711
        %v732 = vsub.f32 %v692, %v712
        %v733 = vsub.f32 %v693, %v713
        %v734 = vsub.f32 %v694, %v714
        %v735 = vsub.f32 %v695, %v715
        %v736 = vsub.f32 %v495, %v576
        %v737 = vsub.f32 %v496, %v577
        %v738 = vsub.f32 %v497, %v578
        %v739 = vsub.f32 %v498, %v579
        %v740 = vsub.f32 %v499, %v580
        %v741 = vsub.f32 %v500, %v581
        %v742 = vsub.f32 %v501, %v582
        %v743 = vsub.f32 %v502, %v583
        %v744 = vsub.f32 %v503, %v584
        %v745 = vsub.f32 %v504, %v585
        %v746 = vsub.f32 %v505, %v586
        %v747 = vsub.f32 %v506, %v587
        %v748 = vsub.f32 %v507, %v588
        %v749 = vsub.f32 %v508, %v589
        %v750 = vsub.f32 %v509, %v590
        %v751 = vsub.f32 %v510, %v591
        %v752 = vsub.f32 %v511, %v592
        %v753 = vsub.f32 %v512, %v593
        %v754 = vsub.f32 %v513, %v594
        %v755 = vsub.f32 %v514, %v595
        %v756 = vadd.f32 %v716, 1e-05
        %v757 = vadd.f32 %v717, 1e-05
        %v758 = vadd.f32 %v718, 1e-05
        %v759 = vadd.f32 %v719, 1e-05
        %v760 = vadd.f32 %v720, 1e-05
        %v761 = vadd.f32 %v721, 1e-05
        %v762 = vadd.f32 %v722, 1e-05
        %v763 = vadd.f32 %v723, 1e-05
        %v764 = vadd.f32 %v724, 1e-05
        %v765 = vadd.f32 %v725, 1e-05
        %v766 = vadd.f32 %v726, 1e-05
        %v767 = vadd.f32 %v727, 1e-05
        %v768 = vadd.f32 %v728, 1e-05
        %v769 = vadd.f32 %v729, 1e-05
        %v770 = vadd.f32 %v730, 1e-05
        %v771 = vadd.f32 %v731, 1e-05
        %v772 = vadd.f32 %v732, 1e-05
        %v773 = vadd.f32 %v733, 1e-05
        %v774 = vadd.f32 %v734, 1e-05
        %v775 = vadd.f32 %v735, 1e-05
        %v776 = vrsqrt.pop %v756
        %v777 = vrsqrt.pop %v757
        %v778 = vrsqrt.pop %v758
        %v779 = vrsqrt.pop %v759
        %v780 = vrsqrt.pop %v760
        %v781 = vrsqrt.pop %v761
        %v782 = vrsqrt.pop %v762
        %v783 = vrsqrt.pop %v763
        %v784 = vrsqrt.pop %v764
        %v785 = vrsqrt.pop %v765
        %v786 = vrsqrt.pop %v766
        %v787 = vrsqrt.pop %v767
        %v788 = vrsqrt.pop %v768
        %v789 = vrsqrt.pop %v769
        %v790 = vrsqrt.pop %v770
        %v791 = vrsqrt.pop %v771
        %v792 = vrsqrt.pop %v772
        %v793 = vrsqrt.pop %v773
        %v794 = vrsqrt.pop %v774
        %v795 = vrsqrt.pop %v775
        %v796 = vmul.f32 %v736, %v776
        %v797 = vmul.f32 %v737, %v777
        %v798 = vmul.f32 %v738, %v778
        %v799 = vmul.f32 %v739, %v779
        %v800 = vmul.f32 %v740, %v780
        %v801 = vmul.f32 %v741, %v781
        %v802 = vmul.f32 %v742, %v782
        %v803 = vmul.f32 %v743, %v783
        %v804 = vmul.f32 %v744, %v784
        %v805 = vmul.f32 %v745, %v785
        %v806 = vmul.f32 %v746, %v786
        %v807 = vmul.f32 %v747, %v787
        %v808 = vmul.f32 %v748, %v788
        %v809 = vmul.f32 %v749, %v789
        %v810 = vmul.f32 %v750, %v790
        %v811 = vmul.f32 %v751, %v791
        %v812 = vmul.f32 %v752, %v792
        %v813 = vmul.f32 %v753, %v793
        %v814 = vmul.f32 %v754, %v794
        %v815 = vmul.f32 %v755, %v795
        %v816 = vld [vmem:[%s1] sm:$0x1]
        %v818 = vlaneseq
        %v819 = vshrl.u32 %v818, 7
        %v820 = vsub.s32 0, %v819
        %v821 = vrot.slane %v816, %v820
        %v823 = vmul.f32 %v796, %v821
        %v824 = vmul.f32 %v797, %v821
        %v825 = vmul.f32 %v798, %v821
        %v826 = vmul.f32 %v799, %v821
        %v827 = vmul.f32 %v800, %v821
        %v828 = vmul.f32 %v801, %v821
        %v829 = vmul.f32 %v802, %v821
        %v830 = vmul.f32 %v803, %v821
        %v831 = vmul.f32 %v804, %v821
        %v832 = vmul.f32 %v805, %v821
        %v833 = vmul.f32 %v806, %v821
        %v834 = vmul.f32 %v807, %v821
        %v835 = vmul.f32 %v808, %v821
        %v836 = vmul.f32 %v809, %v821
        %v837 = vmul.f32 %v810, %v821
        %v838 = vmul.f32 %v811, %v821
        %v839 = vmul.f32 %v812, %v821
        %v840 = vmul.f32 %v813, %v821
        %v841 = vmul.f32 %v814, %v821
        %v842 = vmul.f32 %v815, %v821
        %v843 = vld [vmem:[#allocation5] sm:$0x1]
        %v845 = vlaneseq
        %v846 = vshrl.u32 %v845, 7
        %v847 = vsub.s32 0, %v846
        %v848 = vrot.slane %v843, %v847
        %v850 = vadd.f32 %v823, %v848
        %v851 = vadd.f32 %v824, %v848
        %v852 = vadd.f32 %v825, %v848
        %v853 = vadd.f32 %v826, %v848
        %v854 = vadd.f32 %v827, %v848
        %v855 = vadd.f32 %v828, %v848
        %v856 = vadd.f32 %v829, %v848
        %v857 = vadd.f32 %v830, %v848
        %v858 = vadd.f32 %v831, %v848
        %v859 = vadd.f32 %v832, %v848
        %v860 = vadd.f32 %v833, %v848
        %v861 = vadd.f32 %v834, %v848
        %v862 = vadd.f32 %v835, %v848
        %v863 = vadd.f32 %v836, %v848
        %v864 = vadd.f32 %v837, %v848
        %v865 = vadd.f32 %v838, %v848
        %v866 = vadd.f32 %v839, %v848
        %v867 = vadd.f32 %v840, %v848
        %v868 = vadd.f32 %v841, %v848
        %v869 = vadd.f32 %v842, %v848
        %v870 = vld [vmem:[#allocation10] sm:$0xff]
        %v871 = vld [vmem:[#allocation10 + $0x8] sm:$0xff]
        %v872 = vld [vmem:[#allocation10 + $0x10] sm:$0xff]
        %v873 = vld [vmem:[#allocation10 + $0x18] sm:$0xff]
        %v874 = vld [vmem:[%s7] sm:$0x1]
        %v876 = vlaneseq
        %v877 = vshrl.u32 %v876, 7
        %v878 = vsub.s32 0, %v877
        %v879 = vrot.slane %v874, %v878
        %v882 = vsel %vm515, %v850, 0
        %v885 = vsel %vm515, %v851, 0
        %v888 = vsel %vm515, %v852, 0
        %v891 = vsel %vm515, %v853, 0
        %v894 = vsel %vm515, %v854, 0
        %v897 = vsel %vm515, %v855, 0
        %v900 = vsel %vm515, %v856, 0
        %v903 = vsel %vm515, %v857, 0
        %v906 = vsel %vm515, %v858, 0
        %v909 = vsel %vm515, %v859, 0
        %v912 = vsel %vm515, %v860, 0
        %v915 = vsel %vm515, %v861, 0
        %v918 = vsel %vm515, %v862, 0
        %v921 = vsel %vm515, %v863, 0
        %v924 = vsel %vm515, %v864, 0
        %v927 = vsel %vm515, %v865, 0
        %v930 = vsel %vm515, %v866, 0
        %v933 = vsel %vm515, %v867, 0
        %v936 = vsel %vm515, %v868, 0
        %v939 = vsel %vm515, %v869, 0
        %941 = vmatprep.subr.mxu0 0.0
        %942 = vmatpush1.msra.mxu0 0.0
        %943 = vmatprep.subr.mxu0 0.0
        %944 = vmatpush1.msra.mxu0 0.0
        %945 = vmatprep.subr.mxu0 0.0
        %946 = vmatpush1.msra.mxu0 0.0
        %947 = vmatprep.subr.mxu0 0.0
        %948 = vmatpush1.msra.mxu0 0.0
        %949 = vmatprep.subr.mxu0 0.0
        %950 = vmatpush1.msra.mxu0 0.0
        %951 = vmatprep.subr.mxu0 0.0
        %952 = vmatpush1.msra.mxu0 0.0
        %953 = vmatprep.subr.mxu0 0.0
        %954 = vmatpush1.msra.mxu0 0.0
        %955 = vmatprep.subr.mxu0 0.0
        %956 = vmatpush1.msra.mxu0 0.0
        %957 = vmatprep.subr.mxu0 0.0
        %958 = vmatpush1.msra.mxu0 0.0
        %959 = vmatprep.subr.mxu0 0.0
        %960 = vmatpush1.msra.mxu0 0.0
        %961 = vmatprep.subr.mxu0 0.0
        %962 = vmatpush1.msra.mxu0 0.0
        %963 = vmatprep.subr.mxu0 0.0
        %964 = vmatpush1.msra.mxu0 0.0
        %965 = vmatprep.subr.mxu0 0.0
        %966 = vmatpush1.msra.mxu0 %v873
        %967 = vmatprep.subr.mxu0 0.0
        %968 = vmatpush1.msra.mxu0 %v872
        %969 = vmatprep.subr.mxu0 0.0
        %970 = vmatpush1.msra.mxu0 %v871
        %971 = vmatprep.subr.mxu0 0.0
        %972 = vmatpush1.msra.mxu0 %v870
        %973 = vmatprep.subr.mxu0 0.0
        %974 = vmatpush2.msra.mxu0 0.0
        %975 = vmatprep.subr.mxu0 0.0
        %976 = vmatpush2.msra.mxu0 0.0
        %977 = vmatprep.subr.mxu0 0.0
        %978 = vmatpush2.msra.mxu0 0.0
        %979 = vmatprep.subr.mxu0 0.0
        %980 = vmatpush2.msra.mxu0 0.0
        %981 = vmatprep.subr.mxu0 0.0
        %982 = vmatpush2.msra.mxu0 0.0
        %983 = vmatprep.subr.mxu0 0.0
        %984 = vmatpush2.msra.mxu0 0.0
        %985 = vmatprep.subr.mxu0 0.0
        %986 = vmatpush2.msra.mxu0 0.0
        %987 = vmatprep.subr.mxu0 0.0
        %988 = vmatpush2.msra.mxu0 0.0
        %989 = vmatprep.subr.mxu0 0.0
        %990 = vmatpush2.msra.mxu0 0.0
        %991 = vmatprep.subr.mxu0 0.0
        %992 = vmatpush2.msra.mxu0 0.0
        %993 = vmatprep.subr.mxu0 0.0
        %994 = vmatpush2.msra.mxu0 0.0
        %995 = vmatprep.subr.mxu0 0.0
        %996 = vmatpush2.msra.mxu0 0.0
        %997 = vmatprep.subr.mxu0 0.0
        %998 = vmatpush2.msra.mxu0 0.0
        %999 = vmatprep.subr.mxu0 0.0
        %1000 = vmatpush2.msra.mxu0 0.0
        %1001 = vmatprep.subr.mxu0 0.0
        %1002 = vmatpush2.msra.mxu0 0.0
        %1003 = vmatprep.subr.mxu0 0.0
        %1004 = vmatpush2.msra.mxu0 0.0
        %1005 = vmatprep.mubr.f32.mxu0 0.0
        %1006 = vmatmul.mubr.f32.gmra.mxu0 %v882
        %v1007 = vpop.f32.mrf.mxu0
        %v1008 = vadd.f32 %v879, %v1007
        %v1009 = vpop.f32.mrf.mxu0
        %1010 = vmatprep.mubr.f32.mxu0 0.0
        %1011 = vmatmul.mubr.f32.gmra.mxu0 %v885
        %v1012 = vpop.f32.mrf.mxu0
        %v1013 = vadd.f32 %v879, %v1012
        %v1014 = vpop.f32.mrf.mxu0
        %1015 = vmatprep.mubr.f32.mxu0 0.0
        %1016 = vmatmul.mubr.f32.gmra.mxu0 %v888
        %v1017 = vpop.f32.mrf.mxu0
        %v1018 = vadd.f32 %v879, %v1017
        %v1019 = vpop.f32.mrf.mxu0
        %1020 = vmatprep.mubr.f32.mxu0 0.0
        %1021 = vmatmul.mubr.f32.gmra.mxu0 %v891
        %v1022 = vpop.f32.mrf.mxu0
        %v1023 = vadd.f32 %v879, %v1022
        %v1024 = vpop.f32.mrf.mxu0
        %1025 = vmatprep.mubr.f32.mxu0 0.0
        %1026 = vmatmul.mubr.f32.gmra.mxu0 %v894
        %v1027 = vpop.f32.mrf.mxu0
        %v1028 = vadd.f32 %v879, %v1027
        %v1029 = vpop.f32.mrf.mxu0
        %1030 = vmatprep.mubr.f32.mxu0 0.0
        %1031 = vmatmul.mubr.f32.gmra.mxu0 %v897
        %v1032 = vpop.f32.mrf.mxu0
        %v1033 = vadd.f32 %v879, %v1032
        %v1034 = vpop.f32.mrf.mxu0
        %1035 = vmatprep.mubr.f32.mxu0 0.0
        %1036 = vmatmul.mubr.f32.gmra.mxu0 %v900
        %v1037 = vpop.f32.mrf.mxu0
        %v1038 = vadd.f32 %v879, %v1037
        %v1039 = vpop.f32.mrf.mxu0
        %1040 = vmatprep.mubr.f32.mxu0 0.0
        %1041 = vmatmul.mubr.f32.gmra.mxu0 %v903
        %v1042 = vpop.f32.mrf.mxu0
        %v1043 = vadd.f32 %v879, %v1042
        %v1044 = vpop.f32.mrf.mxu0
        %1045 = vmatprep.mubr.f32.mxu0 0.0
        %1046 = vmatmul.mubr.f32.gmra.mxu0 %v906
        %v1047 = vpop.f32.mrf.mxu0
        %v1048 = vadd.f32 %v879, %v1047
        %v1049 = vpop.f32.mrf.mxu0
        %1050 = vmatprep.mubr.f32.mxu0 0.0
        %1051 = vmatmul.mubr.f32.gmra.mxu0 %v909
        %v1052 = vpop.f32.mrf.mxu0
        %v1053 = vadd.f32 %v879, %v1052
        %v1054 = vpop.f32.mrf.mxu0
        %1055 = vmatprep.mubr.f32.mxu0 0.0
        %1056 = vmatmul.mubr.f32.gmra.mxu0 %v912
        %v1057 = vpop.f32.mrf.mxu0
        %v1058 = vadd.f32 %v879, %v1057
        %v1059 = vpop.f32.mrf.mxu0
        %1060 = vmatprep.mubr.f32.mxu0 0.0
        %1061 = vmatmul.mubr.f32.gmra.mxu0 %v915
        %v1062 = vpop.f32.mrf.mxu0
        %v1063 = vadd.f32 %v879, %v1062
        %v1064 = vpop.f32.mrf.mxu0
        %1065 = vmatprep.mubr.f32.mxu0 0.0
        %1066 = vmatmul.mubr.f32.gmra.mxu0 %v918
        %v1067 = vpop.f32.mrf.mxu0
        %v1068 = vadd.f32 %v879, %v1067
        %v1069 = vpop.f32.mrf.mxu0
        %1070 = vmatprep.mubr.f32.mxu0 0.0
        %1071 = vmatmul.mubr.f32.gmra.mxu0 %v921
        %v1072 = vpop.f32.mrf.mxu0
        %v1073 = vadd.f32 %v879, %v1072
        %v1074 = vpop.f32.mrf.mxu0
        %1075 = vmatprep.mubr.f32.mxu0 0.0
        %1076 = vmatmul.mubr.f32.gmra.mxu0 %v924
        %v1077 = vpop.f32.mrf.mxu0
        %v1078 = vadd.f32 %v879, %v1077
        %v1079 = vpop.f32.mrf.mxu0
        %1080 = vmatprep.mubr.f32.mxu0 0.0
        %1081 = vmatmul.mubr.f32.gmra.mxu0 %v927
        %v1082 = vpop.f32.mrf.mxu0
        %v1083 = vadd.f32 %v879, %v1082
        %v1084 = vpop.f32.mrf.mxu0
        %1085 = vmatprep.mubr.f32.mxu0 0.0
        %1086 = vmatmul.mubr.f32.gmra.mxu0 %v930
        %v1087 = vpop.f32.mrf.mxu0
        %v1088 = vadd.f32 %v879, %v1087
        %v1089 = vpop.f32.mrf.mxu0
        %1090 = vmatprep.mubr.f32.mxu0 0.0
        %1091 = vmatmul.mubr.f32.gmra.mxu0 %v933
        %v1092 = vpop.f32.mrf.mxu0
        %v1093 = vadd.f32 %v879, %v1092
        %v1094 = vpop.f32.mrf.mxu0
        %1095 = vmatprep.mubr.f32.mxu0 0.0
        %1096 = vmatmul.mubr.f32.gmra.mxu0 %v936
        %v1097 = vpop.f32.mrf.mxu0
        %v1098 = vadd.f32 %v879, %v1097
        %v1099 = vpop.f32.mrf.mxu0
        %1100 = vmatprep.mubr.f32.mxu0 0.0
        %1101 = vmatmul.mubr.f32.gmra.mxu0 %v939
        %v1102 = vpop.f32.mrf.mxu0
        %v1103 = vadd.f32 %v879, %v1102
        %v1104 = vpop.f32.mrf.mxu0
        %1105 = vdwg.mxu0
        %v1106 = vld [vmem:[#allocation7] sm:$0xff]
        %v1107 = vld [vmem:[#allocation7 + $0x8] sm:$0xff]
        %v1108 = vld [vmem:[#allocation7 + $0x10] sm:$0xff]
        %v1109 = vld [vmem:[#allocation7 + $0x18] sm:$0xff]
        %v1111 = vsel %vm515, %v1106, 0
        %v1114 = vsel %vm515, %v1107, 0
        %v1117 = vsel %vm515, %v1108, 0
        %v1120 = vsel %vm515, %v1109, 0
        %v1123 = vsel %vm515, %v1008, 0
        %v1126 = vsel %vm515, %v1013, 0
        %1128 = vmatprep.subr.mxu0 0.0
        %1129 = vmatpush1.xpose.msra.mxu0 0.0
        %1130 = vmatprep.subr.mxu0 0.0
        %1131 = vmatpush1.xpose.msra.mxu0 0.0
        %1132 = vmatprep.subr.mxu0 0.0
        %1133 = vmatpush1.xpose.msra.mxu0 0.0
        %1134 = vmatprep.subr.mxu0 0.0
        %1135 = vmatpush1.xpose.msra.mxu0 0.0
        %1136 = vmatprep.subr.mxu0 0.0
        %1137 = vmatpush1.xpose.msra.mxu0 0.0
        %1138 = vmatprep.subr.mxu0 0.0
        %1139 = vmatpush1.xpose.msra.mxu0 0.0
        %1140 = vmatprep.subr.mxu0 0.0
        %1141 = vmatpush1.xpose.msra.mxu0 0.0
        %1142 = vmatprep.subr.mxu0 0.0
        %1143 = vmatpush1.xpose.msra.mxu0 0.0
        %1144 = vmatprep.subr.mxu0 0.0
        %1145 = vmatpush1.xpose.msra.mxu0 0.0
        %1146 = vmatprep.subr.mxu0 0.0
        %1147 = vmatpush1.xpose.msra.mxu0 0.0
        %1148 = vmatprep.subr.mxu0 0.0
        %1149 = vmatpush1.xpose.msra.mxu0 0.0
        %1150 = vmatprep.subr.mxu0 0.0
        %1151 = vmatpush1.xpose.msra.mxu0 0.0
        %1152 = vmatprep.subr.mxu0 0.0
        %1153 = vmatpush1.xpose.msra.mxu0 0.0
        %1154 = vmatprep.subr.mxu0 0.0
        %1155 = vmatpush1.xpose.msra.mxu0 0.0
        %1156 = vmatprep.subr.mxu0 0.0
        %1157 = vmatpush1.xpose.msra.mxu0 %v1126
        %1158 = vmatprep.subr.mxu0 0.0
        %1159 = vmatpush1.xpose.msra.mxu0 %v1123
        %1160 = vmatprep.subr.mxu0 0.0
        %1161 = vmatpush2.xpose.msra.mxu0 0.0
        %1162 = vmatprep.subr.mxu0 0.0
        %1163 = vmatpush2.xpose.msra.mxu0 0.0
        %1164 = vmatprep.subr.mxu0 0.0
        %1165 = vmatpush2.xpose.msra.mxu0 0.0
        %1166 = vmatprep.subr.mxu0 0.0
        %1167 = vmatpush2.xpose.msra.mxu0 0.0
        %1168 = vmatprep.subr.mxu0 0.0
        %1169 = vmatpush2.xpose.msra.mxu0 0.0
        %1170 = vmatprep.subr.mxu0 0.0
        %1171 = vmatpush2.xpose.msra.mxu0 0.0
        %1172 = vmatprep.subr.mxu0 0.0
        %1173 = vmatpush2.xpose.msra.mxu0 0.0
        %1174 = vmatprep.subr.mxu0 0.0
        %1175 = vmatpush2.xpose.msra.mxu0 0.0
        %1176 = vmatprep.subr.mxu0 0.0
        %1177 = vmatpush2.xpose.msra.mxu0 0.0
        %1178 = vmatprep.subr.mxu0 0.0
        %1179 = vmatpush2.xpose.msra.mxu0 0.0
        %1180 = vmatprep.subr.mxu0 0.0
        %1181 = vmatpush2.xpose.msra.mxu0 0.0
        %1182 = vmatprep.subr.mxu0 0.0
        %1183 = vmatpush2.xpose.msra.mxu0 0.0
        %1184 = vmatprep.subr.mxu0 0.0
        %1185 = vmatpush2.xpose.msra.mxu0 0.0
        %1186 = vmatprep.subr.mxu0 0.0
        %1187 = vmatpush2.xpose.msra.mxu0 0.0
        %1188 = vmatprep.subr.mxu0 0.0
        %1189 = vmatpush2.xpose.msra.mxu0 0.0
        %1190 = vmatprep.subr.mxu0 0.0
        %1191 = vmatpush2.xpose.msra.mxu0 0.0
        %1192 = vmatprep.mubr.f32.mxu0 0.0
        %1193 = vmatmul.mubr.f32.gmra.mxu0 %v1111
        %v1194 = vpop.f32.mrf.mxu0
        %v1195 = vadd.f32 0.0, %v1194
        %v1196 = vpop.f32.mrf.mxu0
        %1197 = vmatprep.mubr.f32.mxu0 0.0
        %1198 = vmatmul.mubr.f32.gmra.mxu0 %v1114
        %v1199 = vpop.f32.mrf.mxu0
        %v1200 = vadd.f32 0.0, %v1199
        %v1201 = vpop.f32.mrf.mxu0
        %1202 = vmatprep.mubr.f32.mxu0 0.0
        %1203 = vmatmul.mubr.f32.gmra.mxu0 %v1117
        %v1204 = vpop.f32.mrf.mxu0
        %v1205 = vadd.f32 0.0, %v1204
        %v1206 = vpop.f32.mrf.mxu0
        %1207 = vmatprep.mubr.f32.mxu0 0.0
        %1208 = vmatmul.mubr.f32.gmra.mxu0 %v1120
        %v1209 = vpop.f32.mrf.mxu0
        %v1210 = vadd.f32 0.0, %v1209
        %v1211 = vpop.f32.mrf.mxu0
        %1212 = vdwg.mxu0
        %v1214 = vsel %vm515, %v1018, 0
        %v1217 = vsel %vm515, %v1023, 0
        %1219 = vmatprep.subr.mxu0 0.0
        %1220 = vmatpush1.xpose.msra.mxu0 0.0
        %1221 = vmatprep.subr.mxu0 0.0
        %1222 = vmatpush1.xpose.msra.mxu0 0.0
        %1223 = vmatprep.subr.mxu0 0.0
        %1224 = vmatpush1.xpose.msra.mxu0 0.0
        %1225 = vmatprep.subr.mxu0 0.0
        %1226 = vmatpush1.xpose.msra.mxu0 0.0
        %1227 = vmatprep.subr.mxu0 0.0
        %1228 = vmatpush1.xpose.msra.mxu0 0.0
        %1229 = vmatprep.subr.mxu0 0.0
        %1230 = vmatpush1.xpose.msra.mxu0 0.0
        %1231 = vmatprep.subr.mxu0 0.0
        %1232 = vmatpush1.xpose.msra.mxu0 0.0
        %1233 = vmatprep.subr.mxu0 0.0
        %1234 = vmatpush1.xpose.msra.mxu0 0.0
        %1235 = vmatprep.subr.mxu0 0.0
        %1236 = vmatpush1.xpose.msra.mxu0 0.0
        %1237 = vmatprep.subr.mxu0 0.0
        %1238 = vmatpush1.xpose.msra.mxu0 0.0
        %1239 = vmatprep.subr.mxu0 0.0
        %1240 = vmatpush1.xpose.msra.mxu0 0.0
        %1241 = vmatprep.subr.mxu0 0.0
        %1242 = vmatpush1.xpose.msra.mxu0 0.0
        %1243 = vmatprep.subr.mxu0 0.0
        %1244 = vmatpush1.xpose.msra.mxu0 0.0
        %1245 = vmatprep.subr.mxu0 0.0
        %1246 = vmatpush1.xpose.msra.mxu0 0.0
        %1247 = vmatprep.subr.mxu0 0.0
        %1248 = vmatpush1.xpose.msra.mxu0 %v1217
        %1249 = vmatprep.subr.mxu0 0.0
        %1250 = vmatpush1.xpose.msra.mxu0 %v1214
        %1251 = vmatprep.subr.mxu0 0.0
        %1252 = vmatpush2.xpose.msra.mxu0 0.0
        %1253 = vmatprep.subr.mxu0 0.0
        %1254 = vmatpush2.xpose.msra.mxu0 0.0
        %1255 = vmatprep.subr.mxu0 0.0
        %1256 = vmatpush2.xpose.msra.mxu0 0.0
        %1257 = vmatprep.subr.mxu0 0.0
        %1258 = vmatpush2.xpose.msra.mxu0 0.0
        %1259 = vmatprep.subr.mxu0 0.0
        %1260 = vmatpush2.xpose.msra.mxu0 0.0
        %1261 = vmatprep.subr.mxu0 0.0
        %1262 = vmatpush2.xpose.msra.mxu0 0.0
        %1263 = vmatprep.subr.mxu0 0.0
        %1264 = vmatpush2.xpose.msra.mxu0 0.0
        %1265 = vmatprep.subr.mxu0 0.0
        %1266 = vmatpush2.xpose.msra.mxu0 0.0
        %1267 = vmatprep.subr.mxu0 0.0
        %1268 = vmatpush2.xpose.msra.mxu0 0.0
        %1269 = vmatprep.subr.mxu0 0.0
        %1270 = vmatpush2.xpose.msra.mxu0 0.0
        %1271 = vmatprep.subr.mxu0 0.0
        %1272 = vmatpush2.xpose.msra.mxu0 0.0
        %1273 = vmatprep.subr.mxu0 0.0
        %1274 = vmatpush2.xpose.msra.mxu0 0.0
        %1275 = vmatprep.subr.mxu0 0.0
        %1276 = vmatpush2.xpose.msra.mxu0 0.0
        %1277 = vmatprep.subr.mxu0 0.0
        %1278 = vmatpush2.xpose.msra.mxu0 0.0
        %1279 = vmatprep.subr.mxu0 0.0
        %1280 = vmatpush2.xpose.msra.mxu0 0.0
        %1281 = vmatprep.subr.mxu0 0.0
        %1282 = vmatpush2.xpose.msra.mxu0 0.0
        %1283 = vmatprep.mubr.f32.mxu0 0.0
        %1284 = vmatmul.mubr.f32.gmra.mxu0 %v1111
        %v1285 = vpop.f32.mrf.mxu0
        %v1286 = vadd.f32 0.0, %v1285
        %v1287 = vpop.f32.mrf.mxu0
        %1288 = vmatprep.mubr.f32.mxu0 0.0
        %1289 = vmatmul.mubr.f32.gmra.mxu0 %v1114
        %v1290 = vpop.f32.mrf.mxu0
        %v1291 = vadd.f32 0.0, %v1290
        %v1292 = vpop.f32.mrf.mxu0
        %1293 = vmatprep.mubr.f32.mxu0 0.0
        %1294 = vmatmul.mubr.f32.gmra.mxu0 %v1117
        %v1295 = vpop.f32.mrf.mxu0
        %v1296 = vadd.f32 0.0, %v1295
        %v1297 = vpop.f32.mrf.mxu0
        %1298 = vmatprep.mubr.f32.mxu0 0.0
        %1299 = vmatmul.mubr.f32.gmra.mxu0 %v1120
        %v1300 = vpop.f32.mrf.mxu0
        %v1301 = vadd.f32 0.0, %v1300
        %v1302 = vpop.f32.mrf.mxu0
        %1303 = vdwg.mxu0
        %v1305 = vsel %vm515, %v1028, 0
        %v1308 = vsel %vm515, %v1033, 0
        %1310 = vmatprep.subr.mxu0 0.0
        %1311 = vmatpush1.xpose.msra.mxu0 0.0
        %1312 = vmatprep.subr.mxu0 0.0
        %1313 = vmatpush1.xpose.msra.mxu0 0.0
        %1314 = vmatprep.subr.mxu0 0.0
        %1315 = vmatpush1.xpose.msra.mxu0 0.0
        %1316 = vmatprep.subr.mxu0 0.0
        %1317 = vmatpush1.xpose.msra.mxu0 0.0
        %1318 = vmatprep.subr.mxu0 0.0
        %1319 = vmatpush1.xpose.msra.mxu0 0.0
        %1320 = vmatprep.subr.mxu0 0.0
        %1321 = vmatpush1.xpose.msra.mxu0 0.0
        %1322 = vmatprep.subr.mxu0 0.0
        %1323 = vmatpush1.xpose.msra.mxu0 0.0
        %1324 = vmatprep.subr.mxu0 0.0
        %1325 = vmatpush1.xpose.msra.mxu0 0.0
        %1326 = vmatprep.subr.mxu0 0.0
        %1327 = vmatpush1.xpose.msra.mxu0 0.0
        %1328 = vmatprep.subr.mxu0 0.0
        %1329 = vmatpush1.xpose.msra.mxu0 0.0
        %1330 = vmatprep.subr.mxu0 0.0
        %1331 = vmatpush1.xpose.msra.mxu0 0.0
        %1332 = vmatprep.subr.mxu0 0.0
        %1333 = vmatpush1.xpose.msra.mxu0 0.0
        %1334 = vmatprep.subr.mxu0 0.0
        %1335 = vmatpush1.xpose.msra.mxu0 0.0
        %1336 = vmatprep.subr.mxu0 0.0
        %1337 = vmatpush1.xpose.msra.mxu0 0.0
        %1338 = vmatprep.subr.mxu0 0.0
        %1339 = vmatpush1.xpose.msra.mxu0 %v1308
        %1340 = vmatprep.subr.mxu0 0.0
        %1341 = vmatpush1.xpose.msra.mxu0 %v1305
        %1342 = vmatprep.subr.mxu0 0.0
        %1343 = vmatpush2.xpose.msra.mxu0 0.0
        %1344 = vmatprep.subr.mxu0 0.0
        %1345 = vmatpush2.xpose.msra.mxu0 0.0
        %1346 = vmatprep.subr.mxu0 0.0
        %1347 = vmatpush2.xpose.msra.mxu0 0.0
        %1348 = vmatprep.subr.mxu0 0.0
        %1349 = vmatpush2.xpose.msra.mxu0 0.0
        %1350 = vmatprep.subr.mxu0 0.0
        %1351 = vmatpush2.xpose.msra.mxu0 0.0
        %1352 = vmatprep.subr.mxu0 0.0
        %1353 = vmatpush2.xpose.msra.mxu0 0.0
        %1354 = vmatprep.subr.mxu0 0.0
        %1355 = vmatpush2.xpose.msra.mxu0 0.0
        %1356 = vmatprep.subr.mxu0 0.0
        %1357 = vmatpush2.xpose.msra.mxu0 0.0
        %1358 = vmatprep.subr.mxu0 0.0
        %1359 = vmatpush2.xpose.msra.mxu0 0.0
        %1360 = vmatprep.subr.mxu0 0.0
        %1361 = vmatpush2.xpose.msra.mxu0 0.0
        %1362 = vmatprep.subr.mxu0 0.0
        %1363 = vmatpush2.xpose.msra.mxu0 0.0
        %1364 = vmatprep.subr.mxu0 0.0
        %1365 = vmatpush2.xpose.msra.mxu0 0.0
        %1366 = vmatprep.subr.mxu0 0.0
        %1367 = vmatpush2.xpose.msra.mxu0 0.0
        %1368 = vmatprep.subr.mxu0 0.0
        %1369 = vmatpush2.xpose.msra.mxu0 0.0
        %1370 = vmatprep.subr.mxu0 0.0
        %1371 = vmatpush2.xpose.msra.mxu0 0.0
        %1372 = vmatprep.subr.mxu0 0.0
        %1373 = vmatpush2.xpose.msra.mxu0 0.0
        %1374 = vmatprep.mubr.f32.mxu0 0.0
        %1375 = vmatmul.mubr.f32.gmra.mxu0 %v1111
        %v1376 = vpop.f32.mrf.mxu0
        %v1377 = vadd.f32 0.0, %v1376
        %v1378 = vpop.f32.mrf.mxu0
        %1379 = vmatprep.mubr.f32.mxu0 0.0
        %1380 = vmatmul.mubr.f32.gmra.mxu0 %v1114
        %v1381 = vpop.f32.mrf.mxu0
        %v1382 = vadd.f32 0.0, %v1381
        %v1383 = vpop.f32.mrf.mxu0
        %1384 = vmatprep.mubr.f32.mxu0 0.0
        %1385 = vmatmul.mubr.f32.gmra.mxu0 %v1117
        %v1386 = vpop.f32.mrf.mxu0
        %v1387 = vadd.f32 0.0, %v1386
        %v1388 = vpop.f32.mrf.mxu0
        %1389 = vmatprep.mubr.f32.mxu0 0.0
        %1390 = vmatmul.mubr.f32.gmra.mxu0 %v1120
        %v1391 = vpop.f32.mrf.mxu0
        %v1392 = vadd.f32 0.0, %v1391
        %v1393 = vpop.f32.mrf.mxu0
        %1394 = vdwg.mxu0
        %v1396 = vsel %vm515, %v1038, 0
        %v1399 = vsel %vm515, %v1043, 0
        %1401 = vmatprep.subr.mxu0 0.0
        %1402 = vmatpush1.xpose.msra.mxu0 0.0
        %1403 = vmatprep.subr.mxu0 0.0
        %1404 = vmatpush1.xpose.msra.mxu0 0.0
        %1405 = vmatprep.subr.mxu0 0.0
        %1406 = vmatpush1.xpose.msra.mxu0 0.0
        %1407 = vmatprep.subr.mxu0 0.0
        %1408 = vmatpush1.xpose.msra.mxu0 0.0
        %1409 = vmatprep.subr.mxu0 0.0
        %1410 = vmatpush1.xpose.msra.mxu0 0.0
        %1411 = vmatprep.subr.mxu0 0.0
        %1412 = vmatpush1.xpose.msra.mxu0 0.0
        %1413 = vmatprep.subr.mxu0 0.0
        %1414 = vmatpush1.xpose.msra.mxu0 0.0
        %1415 = vmatprep.subr.mxu0 0.0
        %1416 = vmatpush1.xpose.msra.mxu0 0.0
        %1417 = vmatprep.subr.mxu0 0.0
        %1418 = vmatpush1.xpose.msra.mxu0 0.0
        %1419 = vmatprep.subr.mxu0 0.0
        %1420 = vmatpush1.xpose.msra.mxu0 0.0
        %1421 = vmatprep.subr.mxu0 0.0
        %1422 = vmatpush1.xpose.msra.mxu0 0.0
        %1423 = vmatprep.subr.mxu0 0.0
        %1424 = vmatpush1.xpose.msra.mxu0 0.0
        %1425 = vmatprep.subr.mxu0 0.0
        %1426 = vmatpush1.xpose.msra.mxu0 0.0
        %1427 = vmatprep.subr.mxu0 0.0
        %1428 = vmatpush1.xpose.msra.mxu0 0.0
        %1429 = vmatprep.subr.mxu0 0.0
        %1430 = vmatpush1.xpose.msra.mxu0 %v1399
        %1431 = vmatprep.subr.mxu0 0.0
        %1432 = vmatpush1.xpose.msra.mxu0 %v1396
        %1433 = vmatprep.subr.mxu0 0.0
        %1434 = vmatpush2.xpose.msra.mxu0 0.0
        %1435 = vmatprep.subr.mxu0 0.0
        %1436 = vmatpush2.xpose.msra.mxu0 0.0
        %1437 = vmatprep.subr.mxu0 0.0
        %1438 = vmatpush2.xpose.msra.mxu0 0.0
        %1439 = vmatprep.subr.mxu0 0.0
        %1440 = vmatpush2.xpose.msra.mxu0 0.0
        %1441 = vmatprep.subr.mxu0 0.0
        %1442 = vmatpush2.xpose.msra.mxu0 0.0
        %1443 = vmatprep.subr.mxu0 0.0
        %1444 = vmatpush2.xpose.msra.mxu0 0.0
        %1445 = vmatprep.subr.mxu0 0.0
        %1446 = vmatpush2.xpose.msra.mxu0 0.0
        %1447 = vmatprep.subr.mxu0 0.0
        %1448 = vmatpush2.xpose.msra.mxu0 0.0
        %1449 = vmatprep.subr.mxu0 0.0
        %1450 = vmatpush2.xpose.msra.mxu0 0.0
        %1451 = vmatprep.subr.mxu0 0.0
        %1452 = vmatpush2.xpose.msra.mxu0 0.0
        %1453 = vmatprep.subr.mxu0 0.0
        %1454 = vmatpush2.xpose.msra.mxu0 0.0
        %1455 = vmatprep.subr.mxu0 0.0
        %1456 = vmatpush2.xpose.msra.mxu0 0.0
        %1457 = vmatprep.subr.mxu0 0.0
        %1458 = vmatpush2.xpose.msra.mxu0 0.0
        %1459 = vmatprep.subr.mxu0 0.0
        %1460 = vmatpush2.xpose.msra.mxu0 0.0
        %1461 = vmatprep.subr.mxu0 0.0
        %1462 = vmatpush2.xpose.msra.mxu0 0.0
        %1463 = vmatprep.subr.mxu0 0.0
        %1464 = vmatpush2.xpose.msra.mxu0 0.0
        %1465 = vmatprep.mubr.f32.mxu0 0.0
        %1466 = vmatmul.mubr.f32.gmra.mxu0 %v1111
        %v1467 = vpop.f32.mrf.mxu0
        %v1468 = vadd.f32 0.0, %v1467
        %v1469 = vpop.f32.mrf.mxu0
        %1470 = vmatprep.mubr.f32.mxu0 0.0
        %1471 = vmatmul.mubr.f32.gmra.mxu0 %v1114
        %v1472 = vpop.f32.mrf.mxu0
        %v1473 = vadd.f32 0.0, %v1472
        %v1474 = vpop.f32.mrf.mxu0
        %1475 = vmatprep.mubr.f32.mxu0 0.0
        %1476 = vmatmul.mubr.f32.gmra.mxu0 %v1117
        %v1477 = vpop.f32.mrf.mxu0
        %v1478 = vadd.f32 0.0, %v1477
        %v1479 = vpop.f32.mrf.mxu0
        %1480 = vmatprep.mubr.f32.mxu0 0.0
        %1481 = vmatmul.mubr.f32.gmra.mxu0 %v1120
        %v1482 = vpop.f32.mrf.mxu0
        %v1483 = vadd.f32 0.0, %v1482
        %v1484 = vpop.f32.mrf.mxu0
        %1485 = vdwg.mxu0
        %v1487 = vsel %vm515, %v1048, 0
        %v1490 = vsel %vm515, %v1053, 0
        %1492 = vmatprep.subr.mxu0 0.0
        %1493 = vmatpush1.xpose.msra.mxu0 0.0
        %1494 = vmatprep.subr.mxu0 0.0
        %1495 = vmatpush1.xpose.msra.mxu0 0.0
        %1496 = vmatprep.subr.mxu0 0.0
        %1497 = vmatpush1.xpose.msra.mxu0 0.0
        %1498 = vmatprep.subr.mxu0 0.0
        %1499 = vmatpush1.xpose.msra.mxu0 0.0
        %1500 = vmatprep.subr.mxu0 0.0
        %1501 = vmatpush1.xpose.msra.mxu0 0.0
        %1502 = vmatprep.subr.mxu0 0.0
        %1503 = vmatpush1.xpose.msra.mxu0 0.0
        %1504 = vmatprep.subr.mxu0 0.0
        %1505 = vmatpush1.xpose.msra.mxu0 0.0
        %1506 = vmatprep.subr.mxu0 0.0
        %1507 = vmatpush1.xpose.msra.mxu0 0.0
        %1508 = vmatprep.subr.mxu0 0.0
        %1509 = vmatpush1.xpose.msra.mxu0 0.0
        %1510 = vmatprep.subr.mxu0 0.0
        %1511 = vmatpush1.xpose.msra.mxu0 0.0
        %1512 = vmatprep.subr.mxu0 0.0
        %1513 = vmatpush1.xpose.msra.mxu0 0.0
        %1514 = vmatprep.subr.mxu0 0.0
        %1515 = vmatpush1.xpose.msra.mxu0 0.0
        %1516 = vmatprep.subr.mxu0 0.0
        %1517 = vmatpush1.xpose.msra.mxu0 0.0
        %1518 = vmatprep.subr.mxu0 0.0
        %1519 = vmatpush1.xpose.msra.mxu0 0.0
        %1520 = vmatprep.subr.mxu0 0.0
        %1521 = vmatpush1.xpose.msra.mxu0 %v1490
        %1522 = vmatprep.subr.mxu0 0.0
        %1523 = vmatpush1.xpose.msra.mxu0 %v1487
        %1524 = vmatprep.subr.mxu0 0.0
        %1525 = vmatpush2.xpose.msra.mxu0 0.0
        %1526 = vmatprep.subr.mxu0 0.0
        %1527 = vmatpush2.xpose.msra.mxu0 0.0
        %1528 = vmatprep.subr.mxu0 0.0
        %1529 = vmatpush2.xpose.msra.mxu0 0.0
        %1530 = vmatprep.subr.mxu0 0.0
        %1531 = vmatpush2.xpose.msra.mxu0 0.0
        %1532 = vmatprep.subr.mxu0 0.0
        %1533 = vmatpush2.xpose.msra.mxu0 0.0
        %1534 = vmatprep.subr.mxu0 0.0
        %1535 = vmatpush2.xpose.msra.mxu0 0.0
        %1536 = vmatprep.subr.mxu0 0.0
        %1537 = vmatpush2.xpose.msra.mxu0 0.0
        %1538 = vmatprep.subr.mxu0 0.0
        %1539 = vmatpush2.xpose.msra.mxu0 0.0
        %1540 = vmatprep.subr.mxu0 0.0
        %1541 = vmatpush2.xpose.msra.mxu0 0.0
        %1542 = vmatprep.subr.mxu0 0.0
        %1543 = vmatpush2.xpose.msra.mxu0 0.0
        %1544 = vmatprep.subr.mxu0 0.0
        %1545 = vmatpush2.xpose.msra.mxu0 0.0
        %1546 = vmatprep.subr.mxu0 0.0
        %1547 = vmatpush2.xpose.msra.mxu0 0.0
        %1548 = vmatprep.subr.mxu0 0.0
        %1549 = vmatpush2.xpose.msra.mxu0 0.0
        %1550 = vmatprep.subr.mxu0 0.0
        %1551 = vmatpush2.xpose.msra.mxu0 0.0
        %1552 = vmatprep.subr.mxu0 0.0
        %1553 = vmatpush2.xpose.msra.mxu0 0.0
        %1554 = vmatprep.subr.mxu0 0.0
        %1555 = vmatpush2.xpose.msra.mxu0 0.0
        %1556 = vmatprep.mubr.f32.mxu0 0.0
        %1557 = vmatmul.mubr.f32.gmra.mxu0 %v1111
        %v1558 = vpop.f32.mrf.mxu0
        %v1559 = vadd.f32 0.0, %v1558
        %v1560 = vpop.f32.mrf.mxu0
        %1561 = vmatprep.mubr.f32.mxu0 0.0
        %1562 = vmatmul.mubr.f32.gmra.mxu0 %v1114
        %v1563 = vpop.f32.mrf.mxu0
        %v1564 = vadd.f32 0.0, %v1563
        %v1565 = vpop.f32.mrf.mxu0
        %1566 = vmatprep.mubr.f32.mxu0 0.0
        %1567 = vmatmul.mubr.f32.gmra.mxu0 %v1117
        %v1568 = vpop.f32.mrf.mxu0
        %v1569 = vadd.f32 0.0, %v1568
        %v1570 = vpop.f32.mrf.mxu0
        %1571 = vmatprep.mubr.f32.mxu0 0.0
        %1572 = vmatmul.mubr.f32.gmra.mxu0 %v1120
        %v1573 = vpop.f32.mrf.mxu0
        %v1574 = vadd.f32 0.0, %v1573
        %v1575 = vpop.f32.mrf.mxu0
        %1576 = vdwg.mxu0
        %v1578 = vsel %vm515, %v1058, 0
        %v1581 = vsel %vm515, %v1063, 0
        %1583 = vmatprep.subr.mxu0 0.0
        %1584 = vmatpush1.xpose.msra.mxu0 0.0
        %1585 = vmatprep.subr.mxu0 0.0
        %1586 = vmatpush1.xpose.msra.mxu0 0.0
        %1587 = vmatprep.subr.mxu0 0.0
        %1588 = vmatpush1.xpose.msra.mxu0 0.0
        %1589 = vmatprep.subr.mxu0 0.0
        %1590 = vmatpush1.xpose.msra.mxu0 0.0
        %1591 = vmatprep.subr.mxu0 0.0
        %1592 = vmatpush1.xpose.msra.mxu0 0.0
        %1593 = vmatprep.subr.mxu0 0.0
        %1594 = vmatpush1.xpose.msra.mxu0 0.0
        %1595 = vmatprep.subr.mxu0 0.0
        %1596 = vmatpush1.xpose.msra.mxu0 0.0
        %1597 = vmatprep.subr.mxu0 0.0
        %1598 = vmatpush1.xpose.msra.mxu0 0.0
        %1599 = vmatprep.subr.mxu0 0.0
        %1600 = vmatpush1.xpose.msra.mxu0 0.0
        %1601 = vmatprep.subr.mxu0 0.0
        %1602 = vmatpush1.xpose.msra.mxu0 0.0
        %1603 = vmatprep.subr.mxu0 0.0
        %1604 = vmatpush1.xpose.msra.mxu0 0.0
        %1605 = vmatprep.subr.mxu0 0.0
        %1606 = vmatpush1.xpose.msra.mxu0 0.0
        %1607 = vmatprep.subr.mxu0 0.0
        %1608 = vmatpush1.xpose.msra.mxu0 0.0
        %1609 = vmatprep.subr.mxu0 0.0
        %1610 = vmatpush1.xpose.msra.mxu0 0.0
        %1611 = vmatprep.subr.mxu0 0.0
        %1612 = vmatpush1.xpose.msra.mxu0 %v1581
        %1613 = vmatprep.subr.mxu0 0.0
        %1614 = vmatpush1.xpose.msra.mxu0 %v1578
        %1615 = vmatprep.subr.mxu0 0.0
        %1616 = vmatpush2.xpose.msra.mxu0 0.0
        %1617 = vmatprep.subr.mxu0 0.0
        %1618 = vmatpush2.xpose.msra.mxu0 0.0
        %1619 = vmatprep.subr.mxu0 0.0
        %1620 = vmatpush2.xpose.msra.mxu0 0.0
        %1621 = vmatprep.subr.mxu0 0.0
        %1622 = vmatpush2.xpose.msra.mxu0 0.0
        %1623 = vmatprep.subr.mxu0 0.0
        %1624 = vmatpush2.xpose.msra.mxu0 0.0
        %1625 = vmatprep.subr.mxu0 0.0
        %1626 = vmatpush2.xpose.msra.mxu0 0.0
        %1627 = vmatprep.subr.mxu0 0.0
        %1628 = vmatpush2.xpose.msra.mxu0 0.0
        %1629 = vmatprep.subr.mxu0 0.0
        %1630 = vmatpush2.xpose.msra.mxu0 0.0
        %1631 = vmatprep.subr.mxu0 0.0
        %1632 = vmatpush2.xpose.msra.mxu0 0.0
        %1633 = vmatprep.subr.mxu0 0.0
        %1634 = vmatpush2.xpose.msra.mxu0 0.0
        %1635 = vmatprep.subr.mxu0 0.0
        %1636 = vmatpush2.xpose.msra.mxu0 0.0
        %1637 = vmatprep.subr.mxu0 0.0
        %1638 = vmatpush2.xpose.msra.mxu0 0.0
        %1639 = vmatprep.subr.mxu0 0.0
        %1640 = vmatpush2.xpose.msra.mxu0 0.0
        %1641 = vmatprep.subr.mxu0 0.0
        %1642 = vmatpush2.xpose.msra.mxu0 0.0
        %1643 = vmatprep.subr.mxu0 0.0
        %1644 = vmatpush2.xpose.msra.mxu0 0.0
        %1645 = vmatprep.subr.mxu0 0.0
        %1646 = vmatpush2.xpose.msra.mxu0 0.0
        %1647 = vmatprep.mubr.f32.mxu0 0.0
        %1648 = vmatmul.mubr.f32.gmra.mxu0 %v1111
        %v1649 = vpop.f32.mrf.mxu0
        %v1650 = vadd.f32 0.0, %v1649
        %v1651 = vpop.f32.mrf.mxu0
        %1652 = vmatprep.mubr.f32.mxu0 0.0
        %1653 = vmatmul.mubr.f32.gmra.mxu0 %v1114
        %v1654 = vpop.f32.mrf.mxu0
        %v1655 = vadd.f32 0.0, %v1654
        %v1656 = vpop.f32.mrf.mxu0
        %1657 = vmatprep.mubr.f32.mxu0 0.0
        %1658 = vmatmul.mubr.f32.gmra.mxu0 %v1117
        %v1659 = vpop.f32.mrf.mxu0
        %v1660 = vadd.f32 0.0, %v1659
        %v1661 = vpop.f32.mrf.mxu0
        %1662 = vmatprep.mubr.f32.mxu0 0.0
        %1663 = vmatmul.mubr.f32.gmra.mxu0 %v1120
        %v1664 = vpop.f32.mrf.mxu0
        %v1665 = vadd.f32 0.0, %v1664
        %v1666 = vpop.f32.mrf.mxu0
        %1667 = vdwg.mxu0
        %v1669 = vsel %vm515, %v1068, 0
        %v1672 = vsel %vm515, %v1073, 0
        %1674 = vmatprep.subr.mxu0 0.0
        %1675 = vmatpush1.xpose.msra.mxu0 0.0
        %1676 = vmatprep.subr.mxu0 0.0
        %1677 = vmatpush1.xpose.msra.mxu0 0.0
        %1678 = vmatprep.subr.mxu0 0.0
        %1679 = vmatpush1.xpose.msra.mxu0 0.0
        %1680 = vmatprep.subr.mxu0 0.0
        %1681 = vmatpush1.xpose.msra.mxu0 0.0
        %1682 = vmatprep.subr.mxu0 0.0
        %1683 = vmatpush1.xpose.msra.mxu0 0.0
        %1684 = vmatprep.subr.mxu0 0.0
        %1685 = vmatpush1.xpose.msra.mxu0 0.0
        %1686 = vmatprep.subr.mxu0 0.0
        %1687 = vmatpush1.xpose.msra.mxu0 0.0
        %1688 = vmatprep.subr.mxu0 0.0
        %1689 = vmatpush1.xpose.msra.mxu0 0.0
        %1690 = vmatprep.subr.mxu0 0.0
        %1691 = vmatpush1.xpose.msra.mxu0 0.0
        %1692 = vmatprep.subr.mxu0 0.0
        %1693 = vmatpush1.xpose.msra.mxu0 0.0
        %1694 = vmatprep.subr.mxu0 0.0
        %1695 = vmatpush1.xpose.msra.mxu0 0.0
        %1696 = vmatprep.subr.mxu0 0.0
        %1697 = vmatpush1.xpose.msra.mxu0 0.0
        %1698 = vmatprep.subr.mxu0 0.0
        %1699 = vmatpush1.xpose.msra.mxu0 0.0
        %1700 = vmatprep.subr.mxu0 0.0
        %1701 = vmatpush1.xpose.msra.mxu0 0.0
        %1702 = vmatprep.subr.mxu0 0.0
        %1703 = vmatpush1.xpose.msra.mxu0 %v1672
        %1704 = vmatprep.subr.mxu0 0.0
        %1705 = vmatpush1.xpose.msra.mxu0 %v1669
        %1706 = vmatprep.subr.mxu0 0.0
        %1707 = vmatpush2.xpose.msra.mxu0 0.0
        %1708 = vmatprep.subr.mxu0 0.0
        %1709 = vmatpush2.xpose.msra.mxu0 0.0
        %1710 = vmatprep.subr.mxu0 0.0
        %1711 = vmatpush2.xpose.msra.mxu0 0.0
        %1712 = vmatprep.subr.mxu0 0.0
        %1713 = vmatpush2.xpose.msra.mxu0 0.0
        %1714 = vmatprep.subr.mxu0 0.0
        %1715 = vmatpush2.xpose.msra.mxu0 0.0
        %1716 = vmatprep.subr.mxu0 0.0
        %1717 = vmatpush2.xpose.msra.mxu0 0.0
        %1718 = vmatprep.subr.mxu0 0.0
        %1719 = vmatpush2.xpose.msra.mxu0 0.0
        %1720 = vmatprep.subr.mxu0 0.0
        %1721 = vmatpush2.xpose.msra.mxu0 0.0
        %1722 = vmatprep.subr.mxu0 0.0
        %1723 = vmatpush2.xpose.msra.mxu0 0.0
        %1724 = vmatprep.subr.mxu0 0.0
        %1725 = vmatpush2.xpose.msra.mxu0 0.0
        %1726 = vmatprep.subr.mxu0 0.0
        %1727 = vmatpush2.xpose.msra.mxu0 0.0
        %1728 = vmatprep.subr.mxu0 0.0
        %1729 = vmatpush2.xpose.msra.mxu0 0.0
        %1730 = vmatprep.subr.mxu0 0.0
        %1731 = vmatpush2.xpose.msra.mxu0 0.0
        %1732 = vmatprep.subr.mxu0 0.0
        %1733 = vmatpush2.xpose.msra.mxu0 0.0
        %1734 = vmatprep.subr.mxu0 0.0
        %1735 = vmatpush2.xpose.msra.mxu0 0.0
        %1736 = vmatprep.subr.mxu0 0.0
        %1737 = vmatpush2.xpose.msra.mxu0 0.0
        %1738 = vmatprep.mubr.f32.mxu0 0.0
        %1739 = vmatmul.mubr.f32.gmra.mxu0 %v1111
        %v1740 = vpop.f32.mrf.mxu0
        %v1741 = vadd.f32 0.0, %v1740
        %v1742 = vpop.f32.mrf.mxu0
        %1743 = vmatprep.mubr.f32.mxu0 0.0
        %1744 = vmatmul.mubr.f32.gmra.mxu0 %v1114
        %v1745 = vpop.f32.mrf.mxu0
        %v1746 = vadd.f32 0.0, %v1745
        %v1747 = vpop.f32.mrf.mxu0
        %1748 = vmatprep.mubr.f32.mxu0 0.0
        %1749 = vmatmul.mubr.f32.gmra.mxu0 %v1117
        %v1750 = vpop.f32.mrf.mxu0
        %v1751 = vadd.f32 0.0, %v1750
        %v1752 = vpop.f32.mrf.mxu0
        %1753 = vmatprep.mubr.f32.mxu0 0.0
        %1754 = vmatmul.mubr.f32.gmra.mxu0 %v1120
        %v1755 = vpop.f32.mrf.mxu0
        %v1756 = vadd.f32 0.0, %v1755
        %v1757 = vpop.f32.mrf.mxu0
        %1758 = vdwg.mxu0
        %v1760 = vsel %vm515, %v1078, 0
        %v1763 = vsel %vm515, %v1083, 0
        %1765 = vmatprep.subr.mxu0 0.0
        %1766 = vmatpush1.xpose.msra.mxu0 0.0
        %1767 = vmatprep.subr.mxu0 0.0
        %1768 = vmatpush1.xpose.msra.mxu0 0.0
        %1769 = vmatprep.subr.mxu0 0.0
        %1770 = vmatpush1.xpose.msra.mxu0 0.0
        %1771 = vmatprep.subr.mxu0 0.0
        %1772 = vmatpush1.xpose.msra.mxu0 0.0
        %1773 = vmatprep.subr.mxu0 0.0
        %1774 = vmatpush1.xpose.msra.mxu0 0.0
        %1775 = vmatprep.subr.mxu0 0.0
        %1776 = vmatpush1.xpose.msra.mxu0 0.0
        %1777 = vmatprep.subr.mxu0 0.0
        %1778 = vmatpush1.xpose.msra.mxu0 0.0
        %1779 = vmatprep.subr.mxu0 0.0
        %1780 = vmatpush1.xpose.msra.mxu0 0.0
        %1781 = vmatprep.subr.mxu0 0.0
        %1782 = vmatpush1.xpose.msra.mxu0 0.0
        %1783 = vmatprep.subr.mxu0 0.0
        %1784 = vmatpush1.xpose.msra.mxu0 0.0
        %1785 = vmatprep.subr.mxu0 0.0
        %1786 = vmatpush1.xpose.msra.mxu0 0.0
        %1787 = vmatprep.subr.mxu0 0.0
        %1788 = vmatpush1.xpose.msra.mxu0 0.0
        %1789 = vmatprep.subr.mxu0 0.0
        %1790 = vmatpush1.xpose.msra.mxu0 0.0
        %1791 = vmatprep.subr.mxu0 0.0
        %1792 = vmatpush1.xpose.msra.mxu0 0.0
        %1793 = vmatprep.subr.mxu0 0.0
        %1794 = vmatpush1.xpose.msra.mxu0 %v1763
        %1795 = vmatprep.subr.mxu0 0.0
        %1796 = vmatpush1.xpose.msra.mxu0 %v1760
        %1797 = vmatprep.subr.mxu0 0.0
        %1798 = vmatpush2.xpose.msra.mxu0 0.0
        %1799 = vmatprep.subr.mxu0 0.0
        %1800 = vmatpush2.xpose.msra.mxu0 0.0
        %1801 = vmatprep.subr.mxu0 0.0
        %1802 = vmatpush2.xpose.msra.mxu0 0.0
        %1803 = vmatprep.subr.mxu0 0.0
        %1804 = vmatpush2.xpose.msra.mxu0 0.0
        %1805 = vmatprep.subr.mxu0 0.0
        %1806 = vmatpush2.xpose.msra.mxu0 0.0
        %1807 = vmatprep.subr.mxu0 0.0
        %1808 = vmatpush2.xpose.msra.mxu0 0.0
        %1809 = vmatprep.subr.mxu0 0.0
        %1810 = vmatpush2.xpose.msra.mxu0 0.0
        %1811 = vmatprep.subr.mxu0 0.0
        %1812 = vmatpush2.xpose.msra.mxu0 0.0
        %1813 = vmatprep.subr.mxu0 0.0
        %1814 = vmatpush2.xpose.msra.mxu0 0.0
        %1815 = vmatprep.subr.mxu0 0.0
        %1816 = vmatpush2.xpose.msra.mxu0 0.0
        %1817 = vmatprep.subr.mxu0 0.0
        %1818 = vmatpush2.xpose.msra.mxu0 0.0
        %1819 = vmatprep.subr.mxu0 0.0
        %1820 = vmatpush2.xpose.msra.mxu0 0.0
        %1821 = vmatprep.subr.mxu0 0.0
        %1822 = vmatpush2.xpose.msra.mxu0 0.0
        %1823 = vmatprep.subr.mxu0 0.0
        %1824 = vmatpush2.xpose.msra.mxu0 0.0
        %1825 = vmatprep.subr.mxu0 0.0
        %1826 = vmatpush2.xpose.msra.mxu0 0.0
        %1827 = vmatprep.subr.mxu0 0.0
        %1828 = vmatpush2.xpose.msra.mxu0 0.0
        %1829 = vmatprep.mubr.f32.mxu0 0.0
        %1830 = vmatmul.mubr.f32.gmra.mxu0 %v1111
        %v1831 = vpop.f32.mrf.mxu0
        %v1832 = vadd.f32 0.0, %v1831
        %v1833 = vpop.f32.mrf.mxu0
        %1834 = vmatprep.mubr.f32.mxu0 0.0
        %1835 = vmatmul.mubr.f32.gmra.mxu0 %v1114
        %v1836 = vpop.f32.mrf.mxu0
        %v1837 = vadd.f32 0.0, %v1836
        %v1838 = vpop.f32.mrf.mxu0
        %1839 = vmatprep.mubr.f32.mxu0 0.0
        %1840 = vmatmul.mubr.f32.gmra.mxu0 %v1117
        %v1841 = vpop.f32.mrf.mxu0
        %v1842 = vadd.f32 0.0, %v1841
        %v1843 = vpop.f32.mrf.mxu0
        %1844 = vmatprep.mubr.f32.mxu0 0.0
        %1845 = vmatmul.mubr.f32.gmra.mxu0 %v1120
        %v1846 = vpop.f32.mrf.mxu0
        %v1847 = vadd.f32 0.0, %v1846
        %v1848 = vpop.f32.mrf.mxu0
        %1849 = vdwg.mxu0
        %v1851 = vsel %vm515, %v1088, 0
        %v1854 = vsel %vm515, %v1093, 0
        %1856 = vmatprep.subr.mxu0 0.0
        %1857 = vmatpush1.xpose.msra.mxu0 0.0
        %1858 = vmatprep.subr.mxu0 0.0
        %1859 = vmatpush1.xpose.msra.mxu0 0.0
        %1860 = vmatprep.subr.mxu0 0.0
        %1861 = vmatpush1.xpose.msra.mxu0 0.0
        %1862 = vmatprep.subr.mxu0 0.0
        %1863 = vmatpush1.xpose.msra.mxu0 0.0
        %1864 = vmatprep.subr.mxu0 0.0
        %1865 = vmatpush1.xpose.msra.mxu0 0.0
        %1866 = vmatprep.subr.mxu0 0.0
        %1867 = vmatpush1.xpose.msra.mxu0 0.0
        %1868 = vmatprep.subr.mxu0 0.0
        %1869 = vmatpush1.xpose.msra.mxu0 0.0
        %1870 = vmatprep.subr.mxu0 0.0
        %1871 = vmatpush1.xpose.msra.mxu0 0.0
        %1872 = vmatprep.subr.mxu0 0.0
        %1873 = vmatpush1.xpose.msra.mxu0 0.0
        %1874 = vmatprep.subr.mxu0 0.0
        %1875 = vmatpush1.xpose.msra.mxu0 0.0
        %1876 = vmatprep.subr.mxu0 0.0
        %1877 = vmatpush1.xpose.msra.mxu0 0.0
        %1878 = vmatprep.subr.mxu0 0.0
        %1879 = vmatpush1.xpose.msra.mxu0 0.0
        %1880 = vmatprep.subr.mxu0 0.0
        %1881 = vmatpush1.xpose.msra.mxu0 0.0
        %1882 = vmatprep.subr.mxu0 0.0
        %1883 = vmatpush1.xpose.msra.mxu0 0.0
        %1884 = vmatprep.subr.mxu0 0.0
        %1885 = vmatpush1.xpose.msra.mxu0 %v1854
        %1886 = vmatprep.subr.mxu0 0.0
        %1887 = vmatpush1.xpose.msra.mxu0 %v1851
        %1888 = vmatprep.subr.mxu0 0.0
        %1889 = vmatpush2.xpose.msra.mxu0 0.0
        %1890 = vmatprep.subr.mxu0 0.0
        %1891 = vmatpush2.xpose.msra.mxu0 0.0
        %1892 = vmatprep.subr.mxu0 0.0
        %1893 = vmatpush2.xpose.msra.mxu0 0.0
        %1894 = vmatprep.subr.mxu0 0.0
        %1895 = vmatpush2.xpose.msra.mxu0 0.0
        %1896 = vmatprep.subr.mxu0 0.0
        %1897 = vmatpush2.xpose.msra.mxu0 0.0
        %1898 = vmatprep.subr.mxu0 0.0
        %1899 = vmatpush2.xpose.msra.mxu0 0.0
        %1900 = vmatprep.subr.mxu0 0.0
        %1901 = vmatpush2.xpose.msra.mxu0 0.0
        %1902 = vmatprep.subr.mxu0 0.0
        %1903 = vmatpush2.xpose.msra.mxu0 0.0
        %1904 = vmatprep.subr.mxu0 0.0
        %1905 = vmatpush2.xpose.msra.mxu0 0.0
        %1906 = vmatprep.subr.mxu0 0.0
        %1907 = vmatpush2.xpose.msra.mxu0 0.0
        %1908 = vmatprep.subr.mxu0 0.0
        %1909 = vmatpush2.xpose.msra.mxu0 0.0
        %1910 = vmatprep.subr.mxu0 0.0
        %1911 = vmatpush2.xpose.msra.mxu0 0.0
        %1912 = vmatprep.subr.mxu0 0.0
        %1913 = vmatpush2.xpose.msra.mxu0 0.0
        %1914 = vmatprep.subr.mxu0 0.0
        %1915 = vmatpush2.xpose.msra.mxu0 0.0
        %1916 = vmatprep.subr.mxu0 0.0
        %1917 = vmatpush2.xpose.msra.mxu0 0.0
        %1918 = vmatprep.subr.mxu0 0.0
        %1919 = vmatpush2.xpose.msra.mxu0 0.0
        %1920 = vmatprep.mubr.f32.mxu0 0.0
        %1921 = vmatmul.mubr.f32.gmra.mxu0 %v1111
        %v1922 = vpop.f32.mrf.mxu0
        %v1923 = vadd.f32 0.0, %v1922
        %v1924 = vpop.f32.mrf.mxu0
        %1925 = vmatprep.mubr.f32.mxu0 0.0
        %1926 = vmatmul.mubr.f32.gmra.mxu0 %v1114
        %v1927 = vpop.f32.mrf.mxu0
        %v1928 = vadd.f32 0.0, %v1927
        %v1929 = vpop.f32.mrf.mxu0
        %1930 = vmatprep.mubr.f32.mxu0 0.0
        %1931 = vmatmul.mubr.f32.gmra.mxu0 %v1117
        %v1932 = vpop.f32.mrf.mxu0
        %v1933 = vadd.f32 0.0, %v1932
        %v1934 = vpop.f32.mrf.mxu0
        %1935 = vmatprep.mubr.f32.mxu0 0.0
        %1936 = vmatmul.mubr.f32.gmra.mxu0 %v1120
        %v1937 = vpop.f32.mrf.mxu0
        %v1938 = vadd.f32 0.0, %v1937
        %v1939 = vpop.f32.mrf.mxu0
        %1940 = vdwg.mxu0
        %v1942 = vsel %vm515, %v1098, 0
        %v1945 = vsel %vm515, %v1103, 0
        %1947 = vmatprep.subr.mxu0 0.0
        %1948 = vmatpush1.xpose.msra.mxu0 0.0
        %1949 = vmatprep.subr.mxu0 0.0
        %1950 = vmatpush1.xpose.msra.mxu0 0.0
        %1951 = vmatprep.subr.mxu0 0.0
        %1952 = vmatpush1.xpose.msra.mxu0 0.0
        %1953 = vmatprep.subr.mxu0 0.0
        %1954 = vmatpush1.xpose.msra.mxu0 0.0
        %1955 = vmatprep.subr.mxu0 0.0
        %1956 = vmatpush1.xpose.msra.mxu0 0.0
        %1957 = vmatprep.subr.mxu0 0.0
        %1958 = vmatpush1.xpose.msra.mxu0 0.0
        %1959 = vmatprep.subr.mxu0 0.0
        %1960 = vmatpush1.xpose.msra.mxu0 0.0
        %1961 = vmatprep.subr.mxu0 0.0
        %1962 = vmatpush1.xpose.msra.mxu0 0.0
        %1963 = vmatprep.subr.mxu0 0.0
        %1964 = vmatpush1.xpose.msra.mxu0 0.0
        %1965 = vmatprep.subr.mxu0 0.0
        %1966 = vmatpush1.xpose.msra.mxu0 0.0
        %1967 = vmatprep.subr.mxu0 0.0
        %1968 = vmatpush1.xpose.msra.mxu0 0.0
        %1969 = vmatprep.subr.mxu0 0.0
        %1970 = vmatpush1.xpose.msra.mxu0 0.0
        %1971 = vmatprep.subr.mxu0 0.0
        %1972 = vmatpush1.xpose.msra.mxu0 0.0
        %1973 = vmatprep.subr.mxu0 0.0
        %1974 = vmatpush1.xpose.msra.mxu0 0.0
        %1975 = vmatprep.subr.mxu0 0.0
        %1976 = vmatpush1.xpose.msra.mxu0 %v1945
        %1977 = vmatprep.subr.mxu0 0.0
        %1978 = vmatpush1.xpose.msra.mxu0 %v1942
        %1979 = vmatprep.subr.mxu0 0.0
        %1980 = vmatpush2.xpose.msra.mxu0 0.0
        %1981 = vmatprep.subr.mxu0 0.0
        %1982 = vmatpush2.xpose.msra.mxu0 0.0
        %1983 = vmatprep.subr.mxu0 0.0
        %1984 = vmatpush2.xpose.msra.mxu0 0.0
        %1985 = vmatprep.subr.mxu0 0.0
        %1986 = vmatpush2.xpose.msra.mxu0 0.0
        %1987 = vmatprep.subr.mxu0 0.0
        %1988 = vmatpush2.xpose.msra.mxu0 0.0
        %1989 = vmatprep.subr.mxu0 0.0
        %1990 = vmatpush2.xpose.msra.mxu0 0.0
        %1991 = vmatprep.subr.mxu0 0.0
        %1992 = vmatpush2.xpose.msra.mxu0 0.0
        %1993 = vmatprep.subr.mxu0 0.0
        %1994 = vmatpush2.xpose.msra.mxu0 0.0
        %1995 = vmatprep.subr.mxu0 0.0
        %1996 = vmatpush2.xpose.msra.mxu0 0.0
        %1997 = vmatprep.subr.mxu0 0.0
        %1998 = vmatpush2.xpose.msra.mxu0 0.0
        %1999 = vmatprep.subr.mxu0 0.0
        %2000 = vmatpush2.xpose.msra.mxu0 0.0
        %2001 = vmatprep.subr.mxu0 0.0
        %2002 = vmatpush2.xpose.msra.mxu0 0.0
        %2003 = vmatprep.subr.mxu0 0.0
        %2004 = vmatpush2.xpose.msra.mxu0 0.0
        %2005 = vmatprep.subr.mxu0 0.0
        %2006 = vmatpush2.xpose.msra.mxu0 0.0
        %2007 = vmatprep.subr.mxu0 0.0
        %2008 = vmatpush2.xpose.msra.mxu0 0.0
        %2009 = vmatprep.subr.mxu0 0.0
        %2010 = vmatpush2.xpose.msra.mxu0 0.0
        %2011 = vmatprep.mubr.f32.mxu0 0.0
        %2012 = vmatmul.mubr.f32.gmra.mxu0 %v1111
        %v2013 = vpop.f32.mrf.mxu0
        %v2014 = vadd.f32 0.0, %v2013
        %v2015 = vpop.f32.mrf.mxu0
        %2016 = vmatprep.mubr.f32.mxu0 0.0
        %2017 = vmatmul.mubr.f32.gmra.mxu0 %v1114
        %v2018 = vpop.f32.mrf.mxu0
        %v2019 = vadd.f32 0.0, %v2018
        %v2020 = vpop.f32.mrf.mxu0
        %2021 = vmatprep.mubr.f32.mxu0 0.0
        %2022 = vmatmul.mubr.f32.gmra.mxu0 %v1117
        %v2023 = vpop.f32.mrf.mxu0
        %v2024 = vadd.f32 0.0, %v2023
        %v2025 = vpop.f32.mrf.mxu0
        %2026 = vmatprep.mubr.f32.mxu0 0.0
        %2027 = vmatmul.mubr.f32.gmra.mxu0 %v1120
        %v2028 = vpop.f32.mrf.mxu0
        %v2029 = vadd.f32 0.0, %v2028
        %v2030 = vpop.f32.mrf.mxu0
        %2031 = vdwg.mxu0
        %vm2032 = vcmask 130048
        %v2033 = vsel %vm2032, %v1195, -inf
        %2034 = vmax.xlane.f32.xlu0 %v2033
        %v2035 = vpop.xlane.xlu0 %2034
        %v2036 = vsel %vm2032, %v1200, -inf
        %2037 = vmax.xlane.f32.xlu0 %v2036
        %v2038 = vpop.xlane.xlu0 %2037
        %v2039 = vsel %vm2032, %v1205, -inf
        %2040 = vmax.xlane.f32.xlu0 %v2039
        %v2041 = vpop.xlane.xlu0 %2040
        %v2042 = vsel %vm2032, %v1210, -inf
        %2043 = vmax.xlane.f32.xlu0 %v2042
        %v2044 = vpop.xlane.xlu0 %2043
        %v2045 = vsel %vm2032, %v1286, -inf
        %2046 = vmax.xlane.f32.xlu0 %v2045
        %v2047 = vpop.xlane.xlu0 %2046
        %v2048 = vsel %vm2032, %v1291, -inf
        %2049 = vmax.xlane.f32.xlu0 %v2048
        %v2050 = vpop.xlane.xlu0 %2049
        %v2051 = vsel %vm2032, %v1296, -inf
        %2052 = vmax.xlane.f32.xlu0 %v2051
        %v2053 = vpop.xlane.xlu0 %2052
        %v2054 = vsel %vm2032, %v1301, -inf
        %2055 = vmax.xlane.f32.xlu0 %v2054
        %v2056 = vpop.xlane.xlu0 %2055
        %v2057 = vsel %vm2032, %v1377, -inf
        %2058 = vmax.xlane.f32.xlu0 %v2057
        %v2059 = vpop.xlane.xlu0 %2058
        %v2060 = vsel %vm2032, %v1382, -inf
        %2061 = vmax.xlane.f32.xlu0 %v2060
        %v2062 = vpop.xlane.xlu0 %2061
        %v2063 = vsel %vm2032, %v1387, -inf
        %2064 = vmax.xlane.f32.xlu0 %v2063
        %v2065 = vpop.xlane.xlu0 %2064
        %v2066 = vsel %vm2032, %v1392, -inf
        %2067 = vmax.xlane.f32.xlu0 %v2066
        %v2068 = vpop.xlane.xlu0 %2067
        %v2069 = vsel %vm2032, %v1468, -inf
        %2070 = vmax.xlane.f32.xlu0 %v2069
        %v2071 = vpop.xlane.xlu0 %2070
        %v2072 = vsel %vm2032, %v1473, -inf
        %2073 = vmax.xlane.f32.xlu0 %v2072
        %v2074 = vpop.xlane.xlu0 %2073
        %v2075 = vsel %vm2032, %v1478, -inf
        %2076 = vmax.xlane.f32.xlu0 %v2075
        %v2077 = vpop.xlane.xlu0 %2076
        %v2078 = vsel %vm2032, %v1483, -inf
        %2079 = vmax.xlane.f32.xlu0 %v2078
        %v2080 = vpop.xlane.xlu0 %2079
        %v2081 = vsel %vm2032, %v1559, -inf
        %2082 = vmax.xlane.f32.xlu0 %v2081
        %v2083 = vpop.xlane.xlu0 %2082
        %v2084 = vsel %vm2032, %v1564, -inf
        %2085 = vmax.xlane.f32.xlu0 %v2084
        %v2086 = vpop.xlane.xlu0 %2085
        %v2087 = vsel %vm2032, %v1569, -inf
        %2088 = vmax.xlane.f32.xlu0 %v2087
        %v2089 = vpop.xlane.xlu0 %2088
        %v2090 = vsel %vm2032, %v1574, -inf
        %2091 = vmax.xlane.f32.xlu0 %v2090
        %v2092 = vpop.xlane.xlu0 %2091
        %v2093 = vsel %vm2032, %v1650, -inf
        %2094 = vmax.xlane.f32.xlu0 %v2093
        %v2095 = vpop.xlane.xlu0 %2094
        %v2096 = vsel %vm2032, %v1655, -inf
        %2097 = vmax.xlane.f32.xlu0 %v2096
        %v2098 = vpop.xlane.xlu0 %2097
        %v2099 = vsel %vm2032, %v1660, -inf
        %2100 = vmax.xlane.f32.xlu0 %v2099
        %v2101 = vpop.xlane.xlu0 %2100
        %v2102 = vsel %vm2032, %v1665, -inf
        %2103 = vmax.xlane.f32.xlu0 %v2102
        %v2104 = vpop.xlane.xlu0 %2103
        %v2105 = vsel %vm2032, %v1741, -inf
        %2106 = vmax.xlane.f32.xlu0 %v2105
        %v2107 = vpop.xlane.xlu0 %2106
        %v2108 = vsel %vm2032, %v1746, -inf
        %2109 = vmax.xlane.f32.xlu0 %v2108
        %v2110 = vpop.xlane.xlu0 %2109
        %v2111 = vsel %vm2032, %v1751, -inf
        %2112 = vmax.xlane.f32.xlu0 %v2111
        %v2113 = vpop.xlane.xlu0 %2112
        %v2114 = vsel %vm2032, %v1756, -inf
        %2115 = vmax.xlane.f32.xlu0 %v2114
        %v2116 = vpop.xlane.xlu0 %2115
        %v2117 = vsel %vm2032, %v1832, -inf
        %2118 = vmax.xlane.f32.xlu0 %v2117
        %v2119 = vpop.xlane.xlu0 %2118
        %v2120 = vsel %vm2032, %v1837, -inf
        %2121 = vmax.xlane.f32.xlu0 %v2120
        %v2122 = vpop.xlane.xlu0 %2121
        %v2123 = vsel %vm2032, %v1842, -inf
        %2124 = vmax.xlane.f32.xlu0 %v2123
        %v2125 = vpop.xlane.xlu0 %2124
        %v2126 = vsel %vm2032, %v1847, -inf
        %2127 = vmax.xlane.f32.xlu0 %v2126
        %v2128 = vpop.xlane.xlu0 %2127
        %v2129 = vsel %vm2032, %v1923, -inf
        %2130 = vmax.xlane.f32.xlu0 %v2129
        %v2131 = vpop.xlane.xlu0 %2130
        %v2132 = vsel %vm2032, %v1928, -inf
        %2133 = vmax.xlane.f32.xlu0 %v2132
        %v2134 = vpop.xlane.xlu0 %2133
        %v2135 = vsel %vm2032, %v1933, -inf
        %2136 = vmax.xlane.f32.xlu0 %v2135
        %v2137 = vpop.xlane.xlu0 %2136
        %v2138 = vsel %vm2032, %v1938, -inf
        %2139 = vmax.xlane.f32.xlu0 %v2138
        %v2140 = vpop.xlane.xlu0 %2139
        %v2141 = vsel %vm2032, %v2014, -inf
        %2142 = vmax.xlane.f32.xlu0 %v2141
        %v2143 = vpop.xlane.xlu0 %2142
        %v2144 = vsel %vm2032, %v2019, -inf
        %2145 = vmax.xlane.f32.xlu0 %v2144
        %v2146 = vpop.xlane.xlu0 %2145
        %v2147 = vsel %vm2032, %v2024, -inf
        %2148 = vmax.xlane.f32.xlu0 %v2147
        %v2149 = vpop.xlane.xlu0 %2148
        %v2150 = vsel %vm2032, %v2029, -inf
        %2151 = vmax.xlane.f32.xlu0 %v2150
        %v2152 = vpop.xlane.xlu0 %2151
        %v2153 = vsub.f32 %v1195, %v2035
        %v2154 = vsub.f32 %v1200, %v2038
        %v2155 = vsub.f32 %v1205, %v2041
        %v2156 = vsub.f32 %v1210, %v2044
        %v2157 = vsub.f32 %v1286, %v2047
        %v2158 = vsub.f32 %v1291, %v2050
        %v2159 = vsub.f32 %v1296, %v2053
        %v2160 = vsub.f32 %v1301, %v2056
        %v2161 = vsub.f32 %v1377, %v2059
        %v2162 = vsub.f32 %v1382, %v2062
        %v2163 = vsub.f32 %v1387, %v2065
        %v2164 = vsub.f32 %v1392, %v2068
        %v2165 = vsub.f32 %v1468, %v2071
        %v2166 = vsub.f32 %v1473, %v2074
        %v2167 = vsub.f32 %v1478, %v2077
        %v2168 = vsub.f32 %v1483, %v2080
        %v2169 = vsub.f32 %v1559, %v2083
        %v2170 = vsub.f32 %v1564, %v2086
        %v2171 = vsub.f32 %v1569, %v2089
        %v2172 = vsub.f32 %v1574, %v2092
        %v2173 = vsub.f32 %v1650, %v2095
        %v2174 = vsub.f32 %v1655, %v2098
        %v2175 = vsub.f32 %v1660, %v2101
        %v2176 = vsub.f32 %v1665, %v2104
        %v2177 = vsub.f32 %v1741, %v2107
        %v2178 = vsub.f32 %v1746, %v2110
        %v2179 = vsub.f32 %v1751, %v2113
        %v2180 = vsub.f32 %v1756, %v2116
        %v2181 = vsub.f32 %v1832, %v2119
        %v2182 = vsub.f32 %v1837, %v2122
        %v2183 = vsub.f32 %v1842, %v2125
        %v2184 = vsub.f32 %v1847, %v2128
        %v2185 = vsub.f32 %v1923, %v2131
        %v2186 = vsub.f32 %v1928, %v2134
        %v2187 = vsub.f32 %v1933, %v2137
        %v2188 = vsub.f32 %v1938, %v2140
        %v2189 = vsub.f32 %v2014, %v2143
        %v2190 = vsub.f32 %v2019, %v2146
        %v2191 = vsub.f32 %v2024, %v2149
        %v2192 = vsub.f32 %v2029, %v2152
        %v2193 = vmul.f32 %v2153, 1.442695
        %v2194 = vpow.pop %v2193
        %v2195 = vmul.f32 %v2154, 1.442695
        %v2196 = vpow.pop %v2195
        %v2197 = vmul.f32 %v2155, 1.442695
        %v2198 = vpow.pop %v2197
        %v2199 = vmul.f32 %v2156, 1.442695
        %v2200 = vpow.pop %v2199
        %v2201 = vmul.f32 %v2157, 1.442695
        %v2202 = vpow.pop %v2201
        %v2203 = vmul.f32 %v2158, 1.442695
        %v2204 = vpow.pop %v2203
        %v2205 = vmul.f32 %v2159, 1.442695
        %v2206 = vpow.pop %v2205
        %v2207 = vmul.f32 %v2160, 1.442695
        %v2208 = vpow.pop %v2207
        %v2209 = vmul.f32 %v2161, 1.442695
        %v2210 = vpow.pop %v2209
        %v2211 = vmul.f32 %v2162, 1.442695
        %v2212 = vpow.pop %v2211
        %v2213 = vmul.f32 %v2163, 1.442695
        %v2214 = vpow.pop %v2213
        %v2215 = vmul.f32 %v2164, 1.442695
        %v2216 = vpow.pop %v2215
        %v2217 = vmul.f32 %v2165, 1.442695
        %v2218 = vpow.pop %v2217
        %v2219 = vmul.f32 %v2166, 1.442695
        %v2220 = vpow.pop %v2219
        %v2221 = vmul.f32 %v2167, 1.442695
        %v2222 = vpow.pop %v2221
        %v2223 = vmul.f32 %v2168, 1.442695
        %v2224 = vpow.pop %v2223
        %v2225 = vmul.f32 %v2169, 1.442695
        %v2226 = vpow.pop %v2225
        %v2227 = vmul.f32 %v2170, 1.442695
        %v2228 = vpow.pop %v2227
        %v2229 = vmul.f32 %v2171, 1.442695
        %v2230 = vpow.pop %v2229
        %v2231 = vmul.f32 %v2172, 1.442695
        %v2232 = vpow.pop %v2231
        %v2233 = vmul.f32 %v2173, 1.442695
        %v2234 = vpow.pop %v2233
        %v2235 = vmul.f32 %v2174, 1.442695
        %v2236 = vpow.pop %v2235
        %v2237 = vmul.f32 %v2175, 1.442695
        %v2238 = vpow.pop %v2237
        %v2239 = vmul.f32 %v2176, 1.442695
        %v2240 = vpow.pop %v2239
        %v2241 = vmul.f32 %v2177, 1.442695
        %v2242 = vpow.pop %v2241
        %v2243 = vmul.f32 %v2178, 1.442695
        %v2244 = vpow.pop %v2243
        %v2245 = vmul.f32 %v2179, 1.442695
        %v2246 = vpow.pop %v2245
        %v2247 = vmul.f32 %v2180, 1.442695
        %v2248 = vpow.pop %v2247
        %v2249 = vmul.f32 %v2181, 1.442695
        %v2250 = vpow.pop %v2249
        %v2251 = vmul.f32 %v2182, 1.442695
        %v2252 = vpow.pop %v2251
        %v2253 = vmul.f32 %v2183, 1.442695
        %v2254 = vpow.pop %v2253
        %v2255 = vmul.f32 %v2184, 1.442695
        %v2256 = vpow.pop %v2255
        %v2257 = vmul.f32 %v2185, 1.442695
        %v2258 = vpow.pop %v2257
        %v2259 = vmul.f32 %v2186, 1.442695
        %v2260 = vpow.pop %v2259
        %v2261 = vmul.f32 %v2187, 1.442695
        %v2262 = vpow.pop %v2261
        %v2263 = vmul.f32 %v2188, 1.442695
        %v2264 = vpow.pop %v2263
        %v2265 = vmul.f32 %v2189, 1.442695
        %v2266 = vpow.pop %v2265
        %v2267 = vmul.f32 %v2190, 1.442695
        %v2268 = vpow.pop %v2267
        %v2269 = vmul.f32 %v2191, 1.442695
        %v2270 = vpow.pop %v2269
        %v2271 = vmul.f32 %v2192, 1.442695
        %v2272 = vpow.pop %v2271
        %v2273 = vsel %vm2032, %v2194, 0.0
        %2274 = vadd.xlane.f32.xlu0 %v2273
        %v2275 = vpop.xlane.xlu0 %2274
        %v2276 = vsel %vm2032, %v2196, 0.0
        %2277 = vadd.xlane.f32.xlu0 %v2276
        %v2278 = vpop.xlane.xlu0 %2277
        %v2279 = vsel %vm2032, %v2198, 0.0
        %2280 = vadd.xlane.f32.xlu0 %v2279
        %v2281 = vpop.xlane.xlu0 %2280
        %v2282 = vsel %vm2032, %v2200, 0.0
        %2283 = vadd.xlane.f32.xlu0 %v2282
        %v2284 = vpop.xlane.xlu0 %2283
        %v2285 = vsel %vm2032, %v2202, 0.0
        %2286 = vadd.xlane.f32.xlu0 %v2285
        %v2287 = vpop.xlane.xlu0 %2286
        %v2288 = vsel %vm2032, %v2204, 0.0
        %2289 = vadd.xlane.f32.xlu0 %v2288
        %v2290 = vpop.xlane.xlu0 %2289
        %v2291 = vsel %vm2032, %v2206, 0.0
        %2292 = vadd.xlane.f32.xlu0 %v2291
        %v2293 = vpop.xlane.xlu0 %2292
        %v2294 = vsel %vm2032, %v2208, 0.0
        %2295 = vadd.xlane.f32.xlu0 %v2294
        %v2296 = vpop.xlane.xlu0 %2295
        %v2297 = vsel %vm2032, %v2210, 0.0
        %2298 = vadd.xlane.f32.xlu0 %v2297
        %v2299 = vpop.xlane.xlu0 %2298
        %v2300 = vsel %vm2032, %v2212, 0.0
        %2301 = vadd.xlane.f32.xlu0 %v2300
        %v2302 = vpop.xlane.xlu0 %2301
        %v2303 = vsel %vm2032, %v2214, 0.0
        %2304 = vadd.xlane.f32.xlu0 %v2303
        %v2305 = vpop.xlane.xlu0 %2304
        %v2306 = vsel %vm2032, %v2216, 0.0
        %2307 = vadd.xlane.f32.xlu0 %v2306
        %v2308 = vpop.xlane.xlu0 %2307
        %v2309 = vsel %vm2032, %v2218, 0.0
        %2310 = vadd.xlane.f32.xlu0 %v2309
        %v2311 = vpop.xlane.xlu0 %2310
        %v2312 = vsel %vm2032, %v2220, 0.0
        %2313 = vadd.xlane.f32.xlu0 %v2312
        %v2314 = vpop.xlane.xlu0 %2313
        %v2315 = vsel %vm2032, %v2222, 0.0
        %2316 = vadd.xlane.f32.xlu0 %v2315
        %v2317 = vpop.xlane.xlu0 %2316
        %v2318 = vsel %vm2032, %v2224, 0.0
        %2319 = vadd.xlane.f32.xlu0 %v2318
        %v2320 = vpop.xlane.xlu0 %2319
        %v2321 = vsel %vm2032, %v2226, 0.0
        %2322 = vadd.xlane.f32.xlu0 %v2321
        %v2323 = vpop.xlane.xlu0 %2322
        %v2324 = vsel %vm2032, %v2228, 0.0
        %2325 = vadd.xlane.f32.xlu0 %v2324
        %v2326 = vpop.xlane.xlu0 %2325
        %v2327 = vsel %vm2032, %v2230, 0.0
        %2328 = vadd.xlane.f32.xlu0 %v2327
        %v2329 = vpop.xlane.xlu0 %2328
        %v2330 = vsel %vm2032, %v2232, 0.0
        %2331 = vadd.xlane.f32.xlu0 %v2330
        %v2332 = vpop.xlane.xlu0 %2331
        %v2333 = vsel %vm2032, %v2234, 0.0
        %2334 = vadd.xlane.f32.xlu0 %v2333
        %v2335 = vpop.xlane.xlu0 %2334
        %v2336 = vsel %vm2032, %v2236, 0.0
        %2337 = vadd.xlane.f32.xlu0 %v2336
        %v2338 = vpop.xlane.xlu0 %2337
        %v2339 = vsel %vm2032, %v2238, 0.0
        %2340 = vadd.xlane.f32.xlu0 %v2339
        %v2341 = vpop.xlane.xlu0 %2340
        %v2342 = vsel %vm2032, %v2240, 0.0
        %2343 = vadd.xlane.f32.xlu0 %v2342
        %v2344 = vpop.xlane.xlu0 %2343
        %v2345 = vsel %vm2032, %v2242, 0.0
        %2346 = vadd.xlane.f32.xlu0 %v2345
        %v2347 = vpop.xlane.xlu0 %2346
        %v2348 = vsel %vm2032, %v2244, 0.0
        %2349 = vadd.xlane.f32.xlu0 %v2348
        %v2350 = vpop.xlane.xlu0 %2349
        %v2351 = vsel %vm2032, %v2246, 0.0
        %2352 = vadd.xlane.f32.xlu0 %v2351
        %v2353 = vpop.xlane.xlu0 %2352
        %v2354 = vsel %vm2032, %v2248, 0.0
        %2355 = vadd.xlane.f32.xlu0 %v2354
        %v2356 = vpop.xlane.xlu0 %2355
        %v2357 = vsel %vm2032, %v2250, 0.0
        %2358 = vadd.xlane.f32.xlu0 %v2357
        %v2359 = vpop.xlane.xlu0 %2358
        %v2360 = vsel %vm2032, %v2252, 0.0
        %2361 = vadd.xlane.f32.xlu0 %v2360
        %v2362 = vpop.xlane.xlu0 %2361
        %v2363 = vsel %vm2032, %v2254, 0.0
        %2364 = vadd.xlane.f32.xlu0 %v2363
        %v2365 = vpop.xlane.xlu0 %2364
        %v2366 = vsel %vm2032, %v2256, 0.0
        %2367 = vadd.xlane.f32.xlu0 %v2366
        %v2368 = vpop.xlane.xlu0 %2367
        %v2369 = vsel %vm2032, %v2258, 0.0
        %2370 = vadd.xlane.f32.xlu0 %v2369
        %v2371 = vpop.xlane.xlu0 %2370
        %v2372 = vsel %vm2032, %v2260, 0.0
        %2373 = vadd.xlane.f32.xlu0 %v2372
        %v2374 = vpop.xlane.xlu0 %2373
        %v2375 = vsel %vm2032, %v2262, 0.0
        %2376 = vadd.xlane.f32.xlu0 %v2375
        %v2377 = vpop.xlane.xlu0 %2376
        %v2378 = vsel %vm2032, %v2264, 0.0
        %2379 = vadd.xlane.f32.xlu0 %v2378
        %v2380 = vpop.xlane.xlu0 %2379
        %v2381 = vsel %vm2032, %v2266, 0.0
        %2382 = vadd.xlane.f32.xlu0 %v2381
        %v2383 = vpop.xlane.xlu0 %2382
        %v2384 = vsel %vm2032, %v2268, 0.0
        %2385 = vadd.xlane.f32.xlu0 %v2384
        %v2386 = vpop.xlane.xlu0 %2385
        %v2387 = vsel %vm2032, %v2270, 0.0
        %2388 = vadd.xlane.f32.xlu0 %v2387
        %v2389 = vpop.xlane.xlu0 %2388
        %v2390 = vsel %vm2032, %v2272, 0.0
        %2391 = vadd.xlane.f32.xlu0 %v2390
        %v2392 = vpop.xlane.xlu0 %2391
        %v2393 = vrcp.pop %v2275
        %v2394 = vmul.f32 %v2194, %v2393
        %v2395 = vrcp.pop %v2278
        %v2396 = vmul.f32 %v2196, %v2395
        %v2397 = vrcp.pop %v2281
        %v2398 = vmul.f32 %v2198, %v2397
        %v2399 = vrcp.pop %v2284
        %v2400 = vmul.f32 %v2200, %v2399
        %v2401 = vrcp.pop %v2287
        %v2402 = vmul.f32 %v2202, %v2401
        %v2403 = vrcp.pop %v2290
        %v2404 = vmul.f32 %v2204, %v2403
        %v2405 = vrcp.pop %v2293
        %v2406 = vmul.f32 %v2206, %v2405
        %v2407 = vrcp.pop %v2296
        %v2408 = vmul.f32 %v2208, %v2407
        %v2409 = vrcp.pop %v2299
        %v2410 = vmul.f32 %v2210, %v2409
        %v2411 = vrcp.pop %v2302
        %v2412 = vmul.f32 %v2212, %v2411
        %v2413 = vrcp.pop %v2305
        %v2414 = vmul.f32 %v2214, %v2413
        %v2415 = vrcp.pop %v2308
        %v2416 = vmul.f32 %v2216, %v2415
        %v2417 = vrcp.pop %v2311
        %v2418 = vmul.f32 %v2218, %v2417
        %v2419 = vrcp.pop %v2314
        %v2420 = vmul.f32 %v2220, %v2419
        %v2421 = vrcp.pop %v2317
        %v2422 = vmul.f32 %v2222, %v2421
        %v2423 = vrcp.pop %v2320
        %v2424 = vmul.f32 %v2224, %v2423
        %v2425 = vrcp.pop %v2323
        %v2426 = vmul.f32 %v2226, %v2425
        %v2427 = vrcp.pop %v2326
        %v2428 = vmul.f32 %v2228, %v2427
        %v2429 = vrcp.pop %v2329
        %v2430 = vmul.f32 %v2230, %v2429
        %v2431 = vrcp.pop %v2332
        %v2432 = vmul.f32 %v2232, %v2431
        %v2433 = vrcp.pop %v2335
        %v2434 = vmul.f32 %v2234, %v2433
        %v2435 = vrcp.pop %v2338
        %v2436 = vmul.f32 %v2236, %v2435
        %v2437 = vrcp.pop %v2341
        %v2438 = vmul.f32 %v2238, %v2437
        %v2439 = vrcp.pop %v2344
        %v2440 = vmul.f32 %v2240, %v2439
        %v2441 = vrcp.pop %v2347
        %v2442 = vmul.f32 %v2242, %v2441
        %v2443 = vrcp.pop %v2350
        %v2444 = vmul.f32 %v2244, %v2443
        %v2445 = vrcp.pop %v2353
        %v2446 = vmul.f32 %v2246, %v2445
        %v2447 = vrcp.pop %v2356
        %v2448 = vmul.f32 %v2248, %v2447
        %v2449 = vrcp.pop %v2359
        %v2450 = vmul.f32 %v2250, %v2449
        %v2451 = vrcp.pop %v2362
        %v2452 = vmul.f32 %v2252, %v2451
        %v2453 = vrcp.pop %v2365
        %v2454 = vmul.f32 %v2254, %v2453
        %v2455 = vrcp.pop %v2368
        %v2456 = vmul.f32 %v2256, %v2455
        %v2457 = vrcp.pop %v2371
        %v2458 = vmul.f32 %v2258, %v2457
        %v2459 = vrcp.pop %v2374
        %v2460 = vmul.f32 %v2260, %v2459
        %v2461 = vrcp.pop %v2377
        %v2462 = vmul.f32 %v2262, %v2461
        %v2463 = vrcp.pop %v2380
        %v2464 = vmul.f32 %v2264, %v2463
        %v2465 = vrcp.pop %v2383
        %v2466 = vmul.f32 %v2266, %v2465
        %v2467 = vrcp.pop %v2386
        %v2468 = vmul.f32 %v2268, %v2467
        %v2469 = vrcp.pop %v2389
        %v2470 = vmul.f32 %v2270, %v2469
        %v2471 = vrcp.pop %v2392
        %v2472 = vmul.f32 %v2272, %v2471
        %2473 = vst.msk [vmem:[%s493] sm:$0xff] %vm2032, %v2394
        %2474 = vst.msk [vmem:[%s493 + $0x8] sm:$0xff] %vm2032, %v2396
        %2475 = vst.msk [vmem:[%s493 + $0x10] sm:$0xff] %vm2032, %v2398
        %2476 = vst.msk [vmem:[%s493 + $0x18] sm:$0xff] %vm2032, %v2400
        %2477 = vst.msk [vmem:[%s493 + $0x20] sm:$0xff] %vm2032, %v2402
        %2478 = vst.msk [vmem:[%s493 + $0x28] sm:$0xff] %vm2032, %v2404
        %2479 = vst.msk [vmem:[%s493 + $0x30] sm:$0xff] %vm2032, %v2406
        %2480 = vst.msk [vmem:[%s493 + $0x38] sm:$0xff] %vm2032, %v2408
        %2481 = vst.msk [vmem:[%s493 + $0x40] sm:$0xff] %vm2032, %v2410
        %2482 = vst.msk [vmem:[%s493 + $0x48] sm:$0xff] %vm2032, %v2412
        %2483 = vst.msk [vmem:[%s493 + $0x50] sm:$0xff] %vm2032, %v2414
        %2484 = vst.msk [vmem:[%s493 + $0x58] sm:$0xff] %vm2032, %v2416
        %2485 = vst.msk [vmem:[%s493 + $0x60] sm:$0xff] %vm2032, %v2418
        %2486 = vst.msk [vmem:[%s493 + $0x68] sm:$0xff] %vm2032, %v2420
        %2487 = vst.msk [vmem:[%s493 + $0x70] sm:$0xff] %vm2032, %v2422
        %2488 = vst.msk [vmem:[%s493 + $0x78] sm:$0xff] %vm2032, %v2424
        %2489 = vst.msk [vmem:[%s493 + $0x80] sm:$0xff] %vm2032, %v2426
        %2490 = vst.msk [vmem:[%s493 + $0x88] sm:$0xff] %vm2032, %v2428
        %2491 = vst.msk [vmem:[%s493 + $0x90] sm:$0xff] %vm2032, %v2430
        %2492 = vst.msk [vmem:[%s493 + $0x98] sm:$0xff] %vm2032, %v2432
        %2493 = vst.msk [vmem:[%s493 + $0xa0] sm:$0xff] %vm2032, %v2434
        %2494 = vst.msk [vmem:[%s493 + $0xa8] sm:$0xff] %vm2032, %v2436
        %2495 = vst.msk [vmem:[%s493 + $0xb0] sm:$0xff] %vm2032, %v2438
        %2496 = vst.msk [vmem:[%s493 + $0xb8] sm:$0xff] %vm2032, %v2440
        %2497 = vst.msk [vmem:[%s493 + $0xc0] sm:$0xff] %vm2032, %v2442
        %2498 = vst.msk [vmem:[%s493 + $0xc8] sm:$0xff] %vm2032, %v2444
        %2499 = vst.msk [vmem:[%s493 + $0xd0] sm:$0xff] %vm2032, %v2446
        %2500 = vst.msk [vmem:[%s493 + $0xd8] sm:$0xff] %vm2032, %v2448
        %2501 = vst.msk [vmem:[%s493 + $0xe0] sm:$0xff] %vm2032, %v2450
        %2502 = vst.msk [vmem:[%s493 + $0xe8] sm:$0xff] %vm2032, %v2452
        %2503 = vst.msk [vmem:[%s493 + $0xf0] sm:$0xff] %vm2032, %v2454
        %2504 = vst.msk [vmem:[%s493 + $0xf8] sm:$0xff] %vm2032, %v2456
        %2505 = vst.msk [vmem:[%s493 + $0x100] sm:$0xff] %vm2032, %v2458
        %2506 = vst.msk [vmem:[%s493 + $0x108] sm:$0xff] %vm2032, %v2460
        %2507 = vst.msk [vmem:[%s493 + $0x110] sm:$0xff] %vm2032, %v2462
        %2508 = vst.msk [vmem:[%s493 + $0x118] sm:$0xff] %vm2032, %v2464
        %2509 = vst.msk [vmem:[%s493 + $0x120] sm:$0xff] %vm2032, %v2466
        %2510 = vst.msk [vmem:[%s493 + $0x128] sm:$0xff] %vm2032, %v2468
        %2511 = vst.msk [vmem:[%s493 + $0x130] sm:$0xff] %vm2032, %v2470
        %2512 = vst.msk [vmem:[%s493 + $0x138] sm:$0xff] %vm2032, %v2472
        %2513 = vrot.lane.b32.xlu0 %v1008, 96
        %v2514 = vpop.permute.xlu0 %2513
        %2515 = vrot.lane.b32.xlu0 %v1013, 96
        %v2516 = vpop.permute.xlu0 %2515
        %v2520 = vsel %vm2032, %v2394, 0
        %v2523 = vsel %vm2032, %v2396, 0
        %v2526 = vsel %vm2032, %v2398, 0
        %v2529 = vsel %vm2032, %v2400, 0
        %2531 = vmatprep.subr.mxu0 0.0
        %2532 = vmatpush1.msra.mxu0 0.0
        %2533 = vmatprep.subr.mxu0 0.0
        %2534 = vmatpush1.msra.mxu0 0.0
        %2535 = vmatprep.subr.mxu0 0.0
        %2536 = vmatpush1.msra.mxu0 0.0
        %2537 = vmatprep.subr.mxu0 0.0
        %2538 = vmatpush1.msra.mxu0 0.0
        %2539 = vmatprep.subr.mxu0 0.0
        %2540 = vmatpush1.msra.mxu0 0.0
        %2541 = vmatprep.subr.mxu0 0.0
        %2542 = vmatpush1.msra.mxu0 0.0
        %2543 = vmatprep.subr.mxu0 0.0
        %2544 = vmatpush1.msra.mxu0 0.0
        %2545 = vmatprep.subr.mxu0 0.0
        %2546 = vmatpush1.msra.mxu0 0.0
        %2547 = vmatprep.subr.mxu0 0.0
        %2548 = vmatpush1.msra.mxu0 0.0
        %2549 = vmatprep.subr.mxu0 0.0
        %2550 = vmatpush1.msra.mxu0 0.0
        %2551 = vmatprep.subr.mxu0 0.0
        %2552 = vmatpush1.msra.mxu0 0.0
        %2553 = vmatprep.subr.mxu0 0.0
        %2554 = vmatpush1.msra.mxu0 0.0
        %2555 = vmatprep.subr.mxu0 0.0
        %2556 = vmatpush1.msra.mxu0 0.0
        %2557 = vmatprep.subr.mxu0 0.0
        %2558 = vmatpush1.msra.mxu0 0.0
        %2559 = vmatprep.subr.mxu0 0.0
        %2560 = vmatpush1.msra.mxu0 %v2516
        %2561 = vmatprep.subr.mxu0 0.0
        %2562 = vmatpush1.msra.mxu0 %v2514
        %2563 = vmatprep.subr.mxu0 0.0
        %2564 = vmatpush2.msra.mxu0 0.0
        %2565 = vmatprep.subr.mxu0 0.0
        %2566 = vmatpush2.msra.mxu0 0.0
        %2567 = vmatprep.subr.mxu0 0.0
        %2568 = vmatpush2.msra.mxu0 0.0
        %2569 = vmatprep.subr.mxu0 0.0
        %2570 = vmatpush2.msra.mxu0 0.0
        %2571 = vmatprep.subr.mxu0 0.0
        %2572 = vmatpush2.msra.mxu0 0.0
        %2573 = vmatprep.subr.mxu0 0.0
        %2574 = vmatpush2.msra.mxu0 0.0
        %2575 = vmatprep.subr.mxu0 0.0
        %2576 = vmatpush2.msra.mxu0 0.0
        %2577 = vmatprep.subr.mxu0 0.0
        %2578 = vmatpush2.msra.mxu0 0.0
        %2579 = vmatprep.subr.mxu0 0.0
        %2580 = vmatpush2.msra.mxu0 0.0
        %2581 = vmatprep.subr.mxu0 0.0
        %2582 = vmatpush2.msra.mxu0 0.0
        %2583 = vmatprep.subr.mxu0 0.0
        %2584 = vmatpush2.msra.mxu0 0.0
        %2585 = vmatprep.subr.mxu0 0.0
        %2586 = vmatpush2.msra.mxu0 0.0
        %2587 = vmatprep.subr.mxu0 0.0
        %2588 = vmatpush2.msra.mxu0 0.0
        %2589 = vmatprep.subr.mxu0 0.0
        %2590 = vmatpush2.msra.mxu0 0.0
        %2591 = vmatprep.subr.mxu0 0.0
        %2592 = vmatpush2.msra.mxu0 0.0
        %2593 = vmatprep.subr.mxu0 0.0
        %2594 = vmatpush2.msra.mxu0 0.0
        %2595 = vmatprep.mubr.f32.mxu0 0.0
        %2596 = vmatmul.mubr.f32.gmra.mxu0 %v2520
        %v2597 = vpop.f32.mrf.mxu0
        %v2598 = vadd.f32 0.0, %v2597
        %v2599 = vpop.f32.mrf.mxu0
        %2600 = vmatprep.mubr.f32.mxu0 0.0
        %2601 = vmatmul.mubr.f32.gmra.mxu0 %v2523
        %v2602 = vpop.f32.mrf.mxu0
        %v2603 = vadd.f32 0.0, %v2602
        %v2604 = vpop.f32.mrf.mxu0
        %2605 = vmatprep.mubr.f32.mxu0 0.0
        %2606 = vmatmul.mubr.f32.gmra.mxu0 %v2526
        %v2607 = vpop.f32.mrf.mxu0
        %v2608 = vadd.f32 0.0, %v2607
        %v2609 = vpop.f32.mrf.mxu0
        %2610 = vmatprep.mubr.f32.mxu0 0.0
        %2611 = vmatmul.mubr.f32.gmra.mxu0 %v2529
        %v2612 = vpop.f32.mrf.mxu0
        %v2613 = vadd.f32 0.0, %v2612
        %v2614 = vpop.f32.mrf.mxu0
        %2615 = vdwg.mxu0
        %2616 = vrot.lane.b32.xlu0 %v1018, 96
        %v2617 = vpop.permute.xlu0 %2616
        %2618 = vrot.lane.b32.xlu0 %v1023, 96
        %v2619 = vpop.permute.xlu0 %2618
        %v2623 = vsel %vm2032, %v2402, 0
        %v2626 = vsel %vm2032, %v2404, 0
        %v2629 = vsel %vm2032, %v2406, 0
        %v2632 = vsel %vm2032, %v2408, 0
        %2634 = vmatprep.subr.mxu0 0.0
        %2635 = vmatpush1.msra.mxu0 0.0
        %2636 = vmatprep.subr.mxu0 0.0
        %2637 = vmatpush1.msra.mxu0 0.0
        %2638 = vmatprep.subr.mxu0 0.0
        %2639 = vmatpush1.msra.mxu0 0.0
        %2640 = vmatprep.subr.mxu0 0.0
        %2641 = vmatpush1.msra.mxu0 0.0
        %2642 = vmatprep.subr.mxu0 0.0
        %2643 = vmatpush1.msra.mxu0 0.0
        %2644 = vmatprep.subr.mxu0 0.0
        %2645 = vmatpush1.msra.mxu0 0.0
        %2646 = vmatprep.subr.mxu0 0.0
        %2647 = vmatpush1.msra.mxu0 0.0
        %2648 = vmatprep.subr.mxu0 0.0
        %2649 = vmatpush1.msra.mxu0 0.0
        %2650 = vmatprep.subr.mxu0 0.0
        %2651 = vmatpush1.msra.mxu0 0.0
        %2652 = vmatprep.subr.mxu0 0.0
        %2653 = vmatpush1.msra.mxu0 0.0
        %2654 = vmatprep.subr.mxu0 0.0
        %2655 = vmatpush1.msra.mxu0 0.0
        %2656 = vmatprep.subr.mxu0 0.0
        %2657 = vmatpush1.msra.mxu0 0.0
        %2658 = vmatprep.subr.mxu0 0.0
        %2659 = vmatpush1.msra.mxu0 0.0
        %2660 = vmatprep.subr.mxu0 0.0
        %2661 = vmatpush1.msra.mxu0 0.0
        %2662 = vmatprep.subr.mxu0 0.0
        %2663 = vmatpush1.msra.mxu0 %v2619
        %2664 = vmatprep.subr.mxu0 0.0
        %2665 = vmatpush1.msra.mxu0 %v2617
        %2666 = vmatprep.subr.mxu0 0.0
        %2667 = vmatpush2.msra.mxu0 0.0
        %2668 = vmatprep.subr.mxu0 0.0
        %2669 = vmatpush2.msra.mxu0 0.0
        %2670 = vmatprep.subr.mxu0 0.0
        %2671 = vmatpush2.msra.mxu0 0.0
        %2672 = vmatprep.subr.mxu0 0.0
        %2673 = vmatpush2.msra.mxu0 0.0
        %2674 = vmatprep.subr.mxu0 0.0
        %2675 = vmatpush2.msra.mxu0 0.0
        %2676 = vmatprep.subr.mxu0 0.0
        %2677 = vmatpush2.msra.mxu0 0.0
        %2678 = vmatprep.subr.mxu0 0.0
        %2679 = vmatpush2.msra.mxu0 0.0
        %2680 = vmatprep.subr.mxu0 0.0
        %2681 = vmatpush2.msra.mxu0 0.0
        %2682 = vmatprep.subr.mxu0 0.0
        %2683 = vmatpush2.msra.mxu0 0.0
        %2684 = vmatprep.subr.mxu0 0.0
        %2685 = vmatpush2.msra.mxu0 0.0
        %2686 = vmatprep.subr.mxu0 0.0
        %2687 = vmatpush2.msra.mxu0 0.0
        %2688 = vmatprep.subr.mxu0 0.0
        %2689 = vmatpush2.msra.mxu0 0.0
        %2690 = vmatprep.subr.mxu0 0.0
        %2691 = vmatpush2.msra.mxu0 0.0
        %2692 = vmatprep.subr.mxu0 0.0
        %2693 = vmatpush2.msra.mxu0 0.0
        %2694 = vmatprep.subr.mxu0 0.0
        %2695 = vmatpush2.msra.mxu0 0.0
        %2696 = vmatprep.subr.mxu0 0.0
        %2697 = vmatpush2.msra.mxu0 0.0
        %2698 = vmatprep.mubr.f32.mxu0 0.0
        %2699 = vmatmul.mubr.f32.gmra.mxu0 %v2623
        %v2700 = vpop.f32.mrf.mxu0
        %v2701 = vadd.f32 0.0, %v2700
        %v2702 = vpop.f32.mrf.mxu0
        %2703 = vmatprep.mubr.f32.mxu0 0.0
        %2704 = vmatmul.mubr.f32.gmra.mxu0 %v2626
        %v2705 = vpop.f32.mrf.mxu0
        %v2706 = vadd.f32 0.0, %v2705
        %v2707 = vpop.f32.mrf.mxu0
        %2708 = vmatprep.mubr.f32.mxu0 0.0
        %2709 = vmatmul.mubr.f32.gmra.mxu0 %v2629
        %v2710 = vpop.f32.mrf.mxu0
        %v2711 = vadd.f32 0.0, %v2710
        %v2712 = vpop.f32.mrf.mxu0
        %2713 = vmatprep.mubr.f32.mxu0 0.0
        %2714 = vmatmul.mubr.f32.gmra.mxu0 %v2632
        %v2715 = vpop.f32.mrf.mxu0
        %v2716 = vadd.f32 0.0, %v2715
        %v2717 = vpop.f32.mrf.mxu0
        %2718 = vdwg.mxu0
        %2719 = vrot.lane.b32.xlu0 %v1028, 96
        %v2720 = vpop.permute.xlu0 %2719
        %2721 = vrot.lane.b32.xlu0 %v1033, 96
        %v2722 = vpop.permute.xlu0 %2721
        %v2726 = vsel %vm2032, %v2410, 0
        %v2729 = vsel %vm2032, %v2412, 0
        %v2732 = vsel %vm2032, %v2414, 0
        %v2735 = vsel %vm2032, %v2416, 0
        %2737 = vmatprep.subr.mxu0 0.0
        %2738 = vmatpush1.msra.mxu0 0.0
        %2739 = vmatprep.subr.mxu0 0.0
        %2740 = vmatpush1.msra.mxu0 0.0
        %2741 = vmatprep.subr.mxu0 0.0
        %2742 = vmatpush1.msra.mxu0 0.0
        %2743 = vmatprep.subr.mxu0 0.0
        %2744 = vmatpush1.msra.mxu0 0.0
        %2745 = vmatprep.subr.mxu0 0.0
        %2746 = vmatpush1.msra.mxu0 0.0
        %2747 = vmatprep.subr.mxu0 0.0
        %2748 = vmatpush1.msra.mxu0 0.0
        %2749 = vmatprep.subr.mxu0 0.0
        %2750 = vmatpush1.msra.mxu0 0.0
        %2751 = vmatprep.subr.mxu0 0.0
        %2752 = vmatpush1.msra.mxu0 0.0
        %2753 = vmatprep.subr.mxu0 0.0
        %2754 = vmatpush1.msra.mxu0 0.0
        %2755 = vmatprep.subr.mxu0 0.0
        %2756 = vmatpush1.msra.mxu0 0.0
        %2757 = vmatprep.subr.mxu0 0.0
        %2758 = vmatpush1.msra.mxu0 0.0
        %2759 = vmatprep.subr.mxu0 0.0
        %2760 = vmatpush1.msra.mxu0 0.0
        %2761 = vmatprep.subr.mxu0 0.0
        %2762 = vmatpush1.msra.mxu0 0.0
        %2763 = vmatprep.subr.mxu0 0.0
        %2764 = vmatpush1.msra.mxu0 0.0
        %2765 = vmatprep.subr.mxu0 0.0
        %2766 = vmatpush1.msra.mxu0 %v2722
        %2767 = vmatprep.subr.mxu0 0.0
        %2768 = vmatpush1.msra.mxu0 %v2720
        %2769 = vmatprep.subr.mxu0 0.0
        %2770 = vmatpush2.msra.mxu0 0.0
        %2771 = vmatprep.subr.mxu0 0.0
        %2772 = vmatpush2.msra.mxu0 0.0
        %2773 = vmatprep.subr.mxu0 0.0
        %2774 = vmatpush2.msra.mxu0 0.0
        %2775 = vmatprep.subr.mxu0 0.0
        %2776 = vmatpush2.msra.mxu0 0.0
        %2777 = vmatprep.subr.mxu0 0.0
        %2778 = vmatpush2.msra.mxu0 0.0
        %2779 = vmatprep.subr.mxu0 0.0
        %2780 = vmatpush2.msra.mxu0 0.0
        %2781 = vmatprep.subr.mxu0 0.0
        %2782 = vmatpush2.msra.mxu0 0.0
        %2783 = vmatprep.subr.mxu0 0.0
        %2784 = vmatpush2.msra.mxu0 0.0
        %2785 = vmatprep.subr.mxu0 0.0
        %2786 = vmatpush2.msra.mxu0 0.0
        %2787 = vmatprep.subr.mxu0 0.0
        %2788 = vmatpush2.msra.mxu0 0.0
        %2789 = vmatprep.subr.mxu0 0.0
        %2790 = vmatpush2.msra.mxu0 0.0
        %2791 = vmatprep.subr.mxu0 0.0
        %2792 = vmatpush2.msra.mxu0 0.0
        %2793 = vmatprep.subr.mxu0 0.0
        %2794 = vmatpush2.msra.mxu0 0.0
        %2795 = vmatprep.subr.mxu0 0.0
        %2796 = vmatpush2.msra.mxu0 0.0
        %2797 = vmatprep.subr.mxu0 0.0
        %2798 = vmatpush2.msra.mxu0 0.0
        %2799 = vmatprep.subr.mxu0 0.0
        %2800 = vmatpush2.msra.mxu0 0.0
        %2801 = vmatprep.mubr.f32.mxu0 0.0
        %2802 = vmatmul.mubr.f32.gmra.mxu0 %v2726
        %v2803 = vpop.f32.mrf.mxu0
        %v2804 = vadd.f32 0.0, %v2803
        %v2805 = vpop.f32.mrf.mxu0
        %2806 = vmatprep.mubr.f32.mxu0 0.0
        %2807 = vmatmul.mubr.f32.gmra.mxu0 %v2729
        %v2808 = vpop.f32.mrf.mxu0
        %v2809 = vadd.f32 0.0, %v2808
        %v2810 = vpop.f32.mrf.mxu0
        %2811 = vmatprep.mubr.f32.mxu0 0.0
        %2812 = vmatmul.mubr.f32.gmra.mxu0 %v2732
        %v2813 = vpop.f32.mrf.mxu0
        %v2814 = vadd.f32 0.0, %v2813
        %v2815 = vpop.f32.mrf.mxu0
        %2816 = vmatprep.mubr.f32.mxu0 0.0
        %2817 = vmatmul.mubr.f32.gmra.mxu0 %v2735
        %v2818 = vpop.f32.mrf.mxu0
        %v2819 = vadd.f32 0.0, %v2818
        %v2820 = vpop.f32.mrf.mxu0
        %2821 = vdwg.mxu0
        %2822 = vrot.lane.b32.xlu0 %v1038, 96
        %v2823 = vpop.permute.xlu0 %2822
        %2824 = vrot.lane.b32.xlu0 %v1043, 96
        %v2825 = vpop.permute.xlu0 %2824
        %v2829 = vsel %vm2032, %v2418, 0
        %v2832 = vsel %vm2032, %v2420, 0
        %v2835 = vsel %vm2032, %v2422, 0
        %v2838 = vsel %vm2032, %v2424, 0
        %2840 = vmatprep.subr.mxu0 0.0
        %2841 = vmatpush1.msra.mxu0 0.0
        %2842 = vmatprep.subr.mxu0 0.0
        %2843 = vmatpush1.msra.mxu0 0.0
        %2844 = vmatprep.subr.mxu0 0.0
        %2845 = vmatpush1.msra.mxu0 0.0
        %2846 = vmatprep.subr.mxu0 0.0
        %2847 = vmatpush1.msra.mxu0 0.0
        %2848 = vmatprep.subr.mxu0 0.0
        %2849 = vmatpush1.msra.mxu0 0.0
        %2850 = vmatprep.subr.mxu0 0.0
        %2851 = vmatpush1.msra.mxu0 0.0
        %2852 = vmatprep.subr.mxu0 0.0
        %2853 = vmatpush1.msra.mxu0 0.0
        %2854 = vmatprep.subr.mxu0 0.0
        %2855 = vmatpush1.msra.mxu0 0.0
        %2856 = vmatprep.subr.mxu0 0.0
        %2857 = vmatpush1.msra.mxu0 0.0
        %2858 = vmatprep.subr.mxu0 0.0
        %2859 = vmatpush1.msra.mxu0 0.0
        %2860 = vmatprep.subr.mxu0 0.0
        %2861 = vmatpush1.msra.mxu0 0.0
        %2862 = vmatprep.subr.mxu0 0.0
        %2863 = vmatpush1.msra.mxu0 0.0
        %2864 = vmatprep.subr.mxu0 0.0
        %2865 = vmatpush1.msra.mxu0 0.0
        %2866 = vmatprep.subr.mxu0 0.0
        %2867 = vmatpush1.msra.mxu0 0.0
        %2868 = vmatprep.subr.mxu0 0.0
        %2869 = vmatpush1.msra.mxu0 %v2825
        %2870 = vmatprep.subr.mxu0 0.0
        %2871 = vmatpush1.msra.mxu0 %v2823
        %2872 = vmatprep.subr.mxu0 0.0
        %2873 = vmatpush2.msra.mxu0 0.0
        %2874 = vmatprep.subr.mxu0 0.0
        %2875 = vmatpush2.msra.mxu0 0.0
        %2876 = vmatprep.subr.mxu0 0.0
        %2877 = vmatpush2.msra.mxu0 0.0
        %2878 = vmatprep.subr.mxu0 0.0
        %2879 = vmatpush2.msra.mxu0 0.0
        %2880 = vmatprep.subr.mxu0 0.0
        %2881 = vmatpush2.msra.mxu0 0.0
        %2882 = vmatprep.subr.mxu0 0.0
        %2883 = vmatpush2.msra.mxu0 0.0
        %2884 = vmatprep.subr.mxu0 0.0
        %2885 = vmatpush2.msra.mxu0 0.0
        %2886 = vmatprep.subr.mxu0 0.0
        %2887 = vmatpush2.msra.mxu0 0.0
        %2888 = vmatprep.subr.mxu0 0.0
        %2889 = vmatpush2.msra.mxu0 0.0
        %2890 = vmatprep.subr.mxu0 0.0
        %2891 = vmatpush2.msra.mxu0 0.0
        %2892 = vmatprep.subr.mxu0 0.0
        %2893 = vmatpush2.msra.mxu0 0.0
        %2894 = vmatprep.subr.mxu0 0.0
        %2895 = vmatpush2.msra.mxu0 0.0
        %2896 = vmatprep.subr.mxu0 0.0
        %2897 = vmatpush2.msra.mxu0 0.0
        %2898 = vmatprep.subr.mxu0 0.0
        %2899 = vmatpush2.msra.mxu0 0.0
        %2900 = vmatprep.subr.mxu0 0.0
        %2901 = vmatpush2.msra.mxu0 0.0
        %2902 = vmatprep.subr.mxu0 0.0
        %2903 = vmatpush2.msra.mxu0 0.0
        %2904 = vmatprep.mubr.f32.mxu0 0.0
        %2905 = vmatmul.mubr.f32.gmra.mxu0 %v2829
        %v2906 = vpop.f32.mrf.mxu0
        %v2907 = vadd.f32 0.0, %v2906
        %v2908 = vpop.f32.mrf.mxu0
        %2909 = vmatprep.mubr.f32.mxu0 0.0
        %2910 = vmatmul.mubr.f32.gmra.mxu0 %v2832
        %v2911 = vpop.f32.mrf.mxu0
        %v2912 = vadd.f32 0.0, %v2911
        %v2913 = vpop.f32.mrf.mxu0
        %2914 = vmatprep.mubr.f32.mxu0 0.0
        %2915 = vmatmul.mubr.f32.gmra.mxu0 %v2835
        %v2916 = vpop.f32.mrf.mxu0
        %v2917 = vadd.f32 0.0, %v2916
        %v2918 = vpop.f32.mrf.mxu0
        %2919 = vmatprep.mubr.f32.mxu0 0.0
        %2920 = vmatmul.mubr.f32.gmra.mxu0 %v2838
        %v2921 = vpop.f32.mrf.mxu0
        %v2922 = vadd.f32 0.0, %v2921
        %v2923 = vpop.f32.mrf.mxu0
        %2924 = vdwg.mxu0
        %2925 = vrot.lane.b32.xlu0 %v1048, 96
        %v2926 = vpop.permute.xlu0 %2925
        %2927 = vrot.lane.b32.xlu0 %v1053, 96
        %v2928 = vpop.permute.xlu0 %2927
        %v2932 = vsel %vm2032, %v2426, 0
        %v2935 = vsel %vm2032, %v2428, 0
        %v2938 = vsel %vm2032, %v2430, 0
        %v2941 = vsel %vm2032, %v2432, 0
        %2943 = vmatprep.subr.mxu0 0.0
        %2944 = vmatpush1.msra.mxu0 0.0
        %2945 = vmatprep.subr.mxu0 0.0
        %2946 = vmatpush1.msra.mxu0 0.0
        %2947 = vmatprep.subr.mxu0 0.0
        %2948 = vmatpush1.msra.mxu0 0.0
        %2949 = vmatprep.subr.mxu0 0.0
        %2950 = vmatpush1.msra.mxu0 0.0
        %2951 = vmatprep.subr.mxu0 0.0
        %2952 = vmatpush1.msra.mxu0 0.0
        %2953 = vmatprep.subr.mxu0 0.0
        %2954 = vmatpush1.msra.mxu0 0.0
        %2955 = vmatprep.subr.mxu0 0.0
        %2956 = vmatpush1.msra.mxu0 0.0
        %2957 = vmatprep.subr.mxu0 0.0
        %2958 = vmatpush1.msra.mxu0 0.0
        %2959 = vmatprep.subr.mxu0 0.0
        %2960 = vmatpush1.msra.mxu0 0.0
        %2961 = vmatprep.subr.mxu0 0.0
        %2962 = vmatpush1.msra.mxu0 0.0
        %2963 = vmatprep.subr.mxu0 0.0
        %2964 = vmatpush1.msra.mxu0 0.0
        %2965 = vmatprep.subr.mxu0 0.0
        %2966 = vmatpush1.msra.mxu0 0.0
        %2967 = vmatprep.subr.mxu0 0.0
        %2968 = vmatpush1.msra.mxu0 0.0
        %2969 = vmatprep.subr.mxu0 0.0
        %2970 = vmatpush1.msra.mxu0 0.0
        %2971 = vmatprep.subr.mxu0 0.0
        %2972 = vmatpush1.msra.mxu0 %v2928
        %2973 = vmatprep.subr.mxu0 0.0
        %2974 = vmatpush1.msra.mxu0 %v2926
        %2975 = vmatprep.subr.mxu0 0.0
        %2976 = vmatpush2.msra.mxu0 0.0
        %2977 = vmatprep.subr.mxu0 0.0
        %2978 = vmatpush2.msra.mxu0 0.0
        %2979 = vmatprep.subr.mxu0 0.0
        %2980 = vmatpush2.msra.mxu0 0.0
        %2981 = vmatprep.subr.mxu0 0.0
        %2982 = vmatpush2.msra.mxu0 0.0
        %2983 = vmatprep.subr.mxu0 0.0
        %2984 = vmatpush2.msra.mxu0 0.0
        %2985 = vmatprep.subr.mxu0 0.0
        %2986 = vmatpush2.msra.mxu0 0.0
        %2987 = vmatprep.subr.mxu0 0.0
        %2988 = vmatpush2.msra.mxu0 0.0
        %2989 = vmatprep.subr.mxu0 0.0
        %2990 = vmatpush2.msra.mxu0 0.0
        %2991 = vmatprep.subr.mxu0 0.0
        %2992 = vmatpush2.msra.mxu0 0.0
        %2993 = vmatprep.subr.mxu0 0.0
        %2994 = vmatpush2.msra.mxu0 0.0
        %2995 = vmatprep.subr.mxu0 0.0
        %2996 = vmatpush2.msra.mxu0 0.0
        %2997 = vmatprep.subr.mxu0 0.0
        %2998 = vmatpush2.msra.mxu0 0.0
        %2999 = vmatprep.subr.mxu0 0.0
        %3000 = vmatpush2.msra.mxu0 0.0
        %3001 = vmatprep.subr.mxu0 0.0
        %3002 = vmatpush2.msra.mxu0 0.0
        %3003 = vmatprep.subr.mxu0 0.0
        %3004 = vmatpush2.msra.mxu0 0.0
        %3005 = vmatprep.subr.mxu0 0.0
        %3006 = vmatpush2.msra.mxu0 0.0
        %3007 = vmatprep.mubr.f32.mxu0 0.0
        %3008 = vmatmul.mubr.f32.gmra.mxu0 %v2932
        %v3009 = vpop.f32.mrf.mxu0
        %v3010 = vadd.f32 0.0, %v3009
        %v3011 = vpop.f32.mrf.mxu0
        %3012 = vmatprep.mubr.f32.mxu0 0.0
        %3013 = vmatmul.mubr.f32.gmra.mxu0 %v2935
        %v3014 = vpop.f32.mrf.mxu0
        %v3015 = vadd.f32 0.0, %v3014
        %v3016 = vpop.f32.mrf.mxu0
        %3017 = vmatprep.mubr.f32.mxu0 0.0
        %3018 = vmatmul.mubr.f32.gmra.mxu0 %v2938
        %v3019 = vpop.f32.mrf.mxu0
        %v3020 = vadd.f32 0.0, %v3019
        %v3021 = vpop.f32.mrf.mxu0
        %3022 = vmatprep.mubr.f32.mxu0 0.0
        %3023 = vmatmul.mubr.f32.gmra.mxu0 %v2941
        %v3024 = vpop.f32.mrf.mxu0
        %v3025 = vadd.f32 0.0, %v3024
        %v3026 = vpop.f32.mrf.mxu0
        %3027 = vdwg.mxu0
        %3028 = vrot.lane.b32.xlu0 %v1058, 96
        %v3029 = vpop.permute.xlu0 %3028
        %3030 = vrot.lane.b32.xlu0 %v1063, 96
        %v3031 = vpop.permute.xlu0 %3030
        %v3035 = vsel %vm2032, %v2434, 0
        %v3038 = vsel %vm2032, %v2436, 0
        %v3041 = vsel %vm2032, %v2438, 0
        %v3044 = vsel %vm2032, %v2440, 0
        %3046 = vmatprep.subr.mxu0 0.0
        %3047 = vmatpush1.msra.mxu0 0.0
        %3048 = vmatprep.subr.mxu0 0.0
        %3049 = vmatpush1.msra.mxu0 0.0
        %3050 = vmatprep.subr.mxu0 0.0
        %3051 = vmatpush1.msra.mxu0 0.0
        %3052 = vmatprep.subr.mxu0 0.0
        %3053 = vmatpush1.msra.mxu0 0.0
        %3054 = vmatprep.subr.mxu0 0.0
        %3055 = vmatpush1.msra.mxu0 0.0
        %3056 = vmatprep.subr.mxu0 0.0
        %3057 = vmatpush1.msra.mxu0 0.0
        %3058 = vmatprep.subr.mxu0 0.0
        %3059 = vmatpush1.msra.mxu0 0.0
        %3060 = vmatprep.subr.mxu0 0.0
        %3061 = vmatpush1.msra.mxu0 0.0
        %3062 = vmatprep.subr.mxu0 0.0
        %3063 = vmatpush1.msra.mxu0 0.0
        %3064 = vmatprep.subr.mxu0 0.0
        %3065 = vmatpush1.msra.mxu0 0.0
        %3066 = vmatprep.subr.mxu0 0.0
        %3067 = vmatpush1.msra.mxu0 0.0
        %3068 = vmatprep.subr.mxu0 0.0
        %3069 = vmatpush1.msra.mxu0 0.0
        %3070 = vmatprep.subr.mxu0 0.0
        %3071 = vmatpush1.msra.mxu0 0.0
        %3072 = vmatprep.subr.mxu0 0.0
        %3073 = vmatpush1.msra.mxu0 0.0
        %3074 = vmatprep.subr.mxu0 0.0
        %3075 = vmatpush1.msra.mxu0 %v3031
        %3076 = vmatprep.subr.mxu0 0.0
        %3077 = vmatpush1.msra.mxu0 %v3029
        %3078 = vmatprep.subr.mxu0 0.0
        %3079 = vmatpush2.msra.mxu0 0.0
        %3080 = vmatprep.subr.mxu0 0.0
        %3081 = vmatpush2.msra.mxu0 0.0
        %3082 = vmatprep.subr.mxu0 0.0
        %3083 = vmatpush2.msra.mxu0 0.0
        %3084 = vmatprep.subr.mxu0 0.0
        %3085 = vmatpush2.msra.mxu0 0.0
        %3086 = vmatprep.subr.mxu0 0.0
        %3087 = vmatpush2.msra.mxu0 0.0
        %3088 = vmatprep.subr.mxu0 0.0
        %3089 = vmatpush2.msra.mxu0 0.0
        %3090 = vmatprep.subr.mxu0 0.0
        %3091 = vmatpush2.msra.mxu0 0.0
        %3092 = vmatprep.subr.mxu0 0.0
        %3093 = vmatpush2.msra.mxu0 0.0
        %3094 = vmatprep.subr.mxu0 0.0
        %3095 = vmatpush2.msra.mxu0 0.0
        %3096 = vmatprep.subr.mxu0 0.0
        %3097 = vmatpush2.msra.mxu0 0.0
        %3098 = vmatprep.subr.mxu0 0.0
        %3099 = vmatpush2.msra.mxu0 0.0
        %3100 = vmatprep.subr.mxu0 0.0
        %3101 = vmatpush2.msra.mxu0 0.0
        %3102 = vmatprep.subr.mxu0 0.0
        %3103 = vmatpush2.msra.mxu0 0.0
        %3104 = vmatprep.subr.mxu0 0.0
        %3105 = vmatpush2.msra.mxu0 0.0
        %3106 = vmatprep.subr.mxu0 0.0
        %3107 = vmatpush2.msra.mxu0 0.0
        %3108 = vmatprep.subr.mxu0 0.0
        %3109 = vmatpush2.msra.mxu0 0.0
        %3110 = vmatprep.mubr.f32.mxu0 0.0
        %3111 = vmatmul.mubr.f32.gmra.mxu0 %v3035
        %v3112 = vpop.f32.mrf.mxu0
        %v3113 = vadd.f32 0.0, %v3112
        %v3114 = vpop.f32.mrf.mxu0
        %3115 = vmatprep.mubr.f32.mxu0 0.0
        %3116 = vmatmul.mubr.f32.gmra.mxu0 %v3038
        %v3117 = vpop.f32.mrf.mxu0
        %v3118 = vadd.f32 0.0, %v3117
        %v3119 = vpop.f32.mrf.mxu0
        %3120 = vmatprep.mubr.f32.mxu0 0.0
        %3121 = vmatmul.mubr.f32.gmra.mxu0 %v3041
        %v3122 = vpop.f32.mrf.mxu0
        %v3123 = vadd.f32 0.0, %v3122
        %v3124 = vpop.f32.mrf.mxu0
        %3125 = vmatprep.mubr.f32.mxu0 0.0
        %3126 = vmatmul.mubr.f32.gmra.mxu0 %v3044
        %v3127 = vpop.f32.mrf.mxu0
        %v3128 = vadd.f32 0.0, %v3127
        %v3129 = vpop.f32.mrf.mxu0
        %3130 = vdwg.mxu0
        %3131 = vrot.lane.b32.xlu0 %v1068, 96
        %v3132 = vpop.permute.xlu0 %3131
        %3133 = vrot.lane.b32.xlu0 %v1073, 96
        %v3134 = vpop.permute.xlu0 %3133
        %v3138 = vsel %vm2032, %v2442, 0
        %v3141 = vsel %vm2032, %v2444, 0
        %v3144 = vsel %vm2032, %v2446, 0
        %v3147 = vsel %vm2032, %v2448, 0
        %3149 = vmatprep.subr.mxu0 0.0
        %3150 = vmatpush1.msra.mxu0 0.0
        %3151 = vmatprep.subr.mxu0 0.0
        %3152 = vmatpush1.msra.mxu0 0.0
        %3153 = vmatprep.subr.mxu0 0.0
        %3154 = vmatpush1.msra.mxu0 0.0
        %3155 = vmatprep.subr.mxu0 0.0
        %3156 = vmatpush1.msra.mxu0 0.0
        %3157 = vmatprep.subr.mxu0 0.0
        %3158 = vmatpush1.msra.mxu0 0.0
        %3159 = vmatprep.subr.mxu0 0.0
        %3160 = vmatpush1.msra.mxu0 0.0
        %3161 = vmatprep.subr.mxu0 0.0
        %3162 = vmatpush1.msra.mxu0 0.0
        %3163 = vmatprep.subr.mxu0 0.0
        %3164 = vmatpush1.msra.mxu0 0.0
        %3165 = vmatprep.subr.mxu0 0.0
        %3166 = vmatpush1.msra.mxu0 0.0
        %3167 = vmatprep.subr.mxu0 0.0
        %3168 = vmatpush1.msra.mxu0 0.0
        %3169 = vmatprep.subr.mxu0 0.0
        %3170 = vmatpush1.msra.mxu0 0.0
        %3171 = vmatprep.subr.mxu0 0.0
        %3172 = vmatpush1.msra.mxu0 0.0
        %3173 = vmatprep.subr.mxu0 0.0
        %3174 = vmatpush1.msra.mxu0 0.0
        %3175 = vmatprep.subr.mxu0 0.0
        %3176 = vmatpush1.msra.mxu0 0.0
        %3177 = vmatprep.subr.mxu0 0.0
        %3178 = vmatpush1.msra.mxu0 %v3134
        %3179 = vmatprep.subr.mxu0 0.0
        %3180 = vmatpush1.msra.mxu0 %v3132
        %3181 = vmatprep.subr.mxu0 0.0
        %3182 = vmatpush2.msra.mxu0 0.0
        %3183 = vmatprep.subr.mxu0 0.0
        %3184 = vmatpush2.msra.mxu0 0.0
        %3185 = vmatprep.subr.mxu0 0.0
        %3186 = vmatpush2.msra.mxu0 0.0
        %3187 = vmatprep.subr.mxu0 0.0
        %3188 = vmatpush2.msra.mxu0 0.0
        %3189 = vmatprep.subr.mxu0 0.0
        %3190 = vmatpush2.msra.mxu0 0.0
        %3191 = vmatprep.subr.mxu0 0.0
        %3192 = vmatpush2.msra.mxu0 0.0
        %3193 = vmatprep.subr.mxu0 0.0
        %3194 = vmatpush2.msra.mxu0 0.0
        %3195 = vmatprep.subr.mxu0 0.0
        %3196 = vmatpush2.msra.mxu0 0.0
        %3197 = vmatprep.subr.mxu0 0.0
        %3198 = vmatpush2.msra.mxu0 0.0
        %3199 = vmatprep.subr.mxu0 0.0
        %3200 = vmatpush2.msra.mxu0 0.0
        %3201 = vmatprep.subr.mxu0 0.0
        %3202 = vmatpush2.msra.mxu0 0.0
        %3203 = vmatprep.subr.mxu0 0.0
        %3204 = vmatpush2.msra.mxu0 0.0
        %3205 = vmatprep.subr.mxu0 0.0
        %3206 = vmatpush2.msra.mxu0 0.0
        %3207 = vmatprep.subr.mxu0 0.0
        %3208 = vmatpush2.msra.mxu0 0.0
        %3209 = vmatprep.subr.mxu0 0.0
        %3210 = vmatpush2.msra.mxu0 0.0
        %3211 = vmatprep.subr.mxu0 0.0
        %3212 = vmatpush2.msra.mxu0 0.0
        %3213 = vmatprep.mubr.f32.mxu0 0.0
        %3214 = vmatmul.mubr.f32.gmra.mxu0 %v3138
        %v3215 = vpop.f32.mrf.mxu0
        %v3216 = vadd.f32 0.0, %v3215
        %v3217 = vpop.f32.mrf.mxu0
        %3218 = vmatprep.mubr.f32.mxu0 0.0
        %3219 = vmatmul.mubr.f32.gmra.mxu0 %v3141
        %v3220 = vpop.f32.mrf.mxu0
        %v3221 = vadd.f32 0.0, %v3220
        %v3222 = vpop.f32.mrf.mxu0
        %3223 = vmatprep.mubr.f32.mxu0 0.0
        %3224 = vmatmul.mubr.f32.gmra.mxu0 %v3144
        %v3225 = vpop.f32.mrf.mxu0
        %v3226 = vadd.f32 0.0, %v3225
        %v3227 = vpop.f32.mrf.mxu0
        %3228 = vmatprep.mubr.f32.mxu0 0.0
        %3229 = vmatmul.mubr.f32.gmra.mxu0 %v3147
        %v3230 = vpop.f32.mrf.mxu0
        %v3231 = vadd.f32 0.0, %v3230
        %v3232 = vpop.f32.mrf.mxu0
        %3233 = vdwg.mxu0
        %3234 = vrot.lane.b32.xlu0 %v1078, 96
        %v3235 = vpop.permute.xlu0 %3234
        %3236 = vrot.lane.b32.xlu0 %v1083, 96
        %v3237 = vpop.permute.xlu0 %3236
        %v3241 = vsel %vm2032, %v2450, 0
        %v3244 = vsel %vm2032, %v2452, 0
        %v3247 = vsel %vm2032, %v2454, 0
        %v3250 = vsel %vm2032, %v2456, 0
        %3252 = vmatprep.subr.mxu0 0.0
        %3253 = vmatpush1.msra.mxu0 0.0
        %3254 = vmatprep.subr.mxu0 0.0
        %3255 = vmatpush1.msra.mxu0 0.0
        %3256 = vmatprep.subr.mxu0 0.0
        %3257 = vmatpush1.msra.mxu0 0.0
        %3258 = vmatprep.subr.mxu0 0.0
        %3259 = vmatpush1.msra.mxu0 0.0
        %3260 = vmatprep.subr.mxu0 0.0
        %3261 = vmatpush1.msra.mxu0 0.0
        %3262 = vmatprep.subr.mxu0 0.0
        %3263 = vmatpush1.msra.mxu0 0.0
        %3264 = vmatprep.subr.mxu0 0.0
        %3265 = vmatpush1.msra.mxu0 0.0
        %3266 = vmatprep.subr.mxu0 0.0
        %3267 = vmatpush1.msra.mxu0 0.0
        %3268 = vmatprep.subr.mxu0 0.0
        %3269 = vmatpush1.msra.mxu0 0.0
        %3270 = vmatprep.subr.mxu0 0.0
        %3271 = vmatpush1.msra.mxu0 0.0
        %3272 = vmatprep.subr.mxu0 0.0
        %3273 = vmatpush1.msra.mxu0 0.0
        %3274 = vmatprep.subr.mxu0 0.0
        %3275 = vmatpush1.msra.mxu0 0.0
        %3276 = vmatprep.subr.mxu0 0.0
        %3277 = vmatpush1.msra.mxu0 0.0
        %3278 = vmatprep.subr.mxu0 0.0
        %3279 = vmatpush1.msra.mxu0 0.0
        %3280 = vmatprep.subr.mxu0 0.0
        %3281 = vmatpush1.msra.mxu0 %v3237
        %3282 = vmatprep.subr.mxu0 0.0
        %3283 = vmatpush1.msra.mxu0 %v3235
        %3284 = vmatprep.subr.mxu0 0.0
        %3285 = vmatpush2.msra.mxu0 0.0
        %3286 = vmatprep.subr.mxu0 0.0
        %3287 = vmatpush2.msra.mxu0 0.0
        %3288 = vmatprep.subr.mxu0 0.0
        %3289 = vmatpush2.msra.mxu0 0.0
        %3290 = vmatprep.subr.mxu0 0.0
        %3291 = vmatpush2.msra.mxu0 0.0
        %3292 = vmatprep.subr.mxu0 0.0
        %3293 = vmatpush2.msra.mxu0 0.0
        %3294 = vmatprep.subr.mxu0 0.0
        %3295 = vmatpush2.msra.mxu0 0.0
        %3296 = vmatprep.subr.mxu0 0.0
        %3297 = vmatpush2.msra.mxu0 0.0
        %3298 = vmatprep.subr.mxu0 0.0
        %3299 = vmatpush2.msra.mxu0 0.0
        %3300 = vmatprep.subr.mxu0 0.0
        %3301 = vmatpush2.msra.mxu0 0.0
        %3302 = vmatprep.subr.mxu0 0.0
        %3303 = vmatpush2.msra.mxu0 0.0
        %3304 = vmatprep.subr.mxu0 0.0
        %3305 = vmatpush2.msra.mxu0 0.0
        %3306 = vmatprep.subr.mxu0 0.0
        %3307 = vmatpush2.msra.mxu0 0.0
        %3308 = vmatprep.subr.mxu0 0.0
        %3309 = vmatpush2.msra.mxu0 0.0
        %3310 = vmatprep.subr.mxu0 0.0
        %3311 = vmatpush2.msra.mxu0 0.0
        %3312 = vmatprep.subr.mxu0 0.0
        %3313 = vmatpush2.msra.mxu0 0.0
        %3314 = vmatprep.subr.mxu0 0.0
        %3315 = vmatpush2.msra.mxu0 0.0
        %3316 = vmatprep.mubr.f32.mxu0 0.0
        %3317 = vmatmul.mubr.f32.gmra.mxu0 %v3241
        %v3318 = vpop.f32.mrf.mxu0
        %v3319 = vadd.f32 0.0, %v3318
        %v3320 = vpop.f32.mrf.mxu0
        %3321 = vmatprep.mubr.f32.mxu0 0.0
        %3322 = vmatmul.mubr.f32.gmra.mxu0 %v3244
        %v3323 = vpop.f32.mrf.mxu0
        %v3324 = vadd.f32 0.0, %v3323
        %v3325 = vpop.f32.mrf.mxu0
        %3326 = vmatprep.mubr.f32.mxu0 0.0
        %3327 = vmatmul.mubr.f32.gmra.mxu0 %v3247
        %v3328 = vpop.f32.mrf.mxu0
        %v3329 = vadd.f32 0.0, %v3328
        %v3330 = vpop.f32.mrf.mxu0
        %3331 = vmatprep.mubr.f32.mxu0 0.0
        %3332 = vmatmul.mubr.f32.gmra.mxu0 %v3250
        %v3333 = vpop.f32.mrf.mxu0
        %v3334 = vadd.f32 0.0, %v3333
        %v3335 = vpop.f32.mrf.mxu0
        %3336 = vdwg.mxu0
        %3337 = vrot.lane.b32.xlu0 %v1088, 96
        %v3338 = vpop.permute.xlu0 %3337
        %3339 = vrot.lane.b32.xlu0 %v1093, 96
        %v3340 = vpop.permute.xlu0 %3339
        %v3344 = vsel %vm2032, %v2458, 0
        %v3347 = vsel %vm2032, %v2460, 0
        %v3350 = vsel %vm2032, %v2462, 0
        %v3353 = vsel %vm2032, %v2464, 0
        %3355 = vmatprep.subr.mxu0 0.0
        %3356 = vmatpush1.msra.mxu0 0.0
        %3357 = vmatprep.subr.mxu0 0.0
        %3358 = vmatpush1.msra.mxu0 0.0
        %3359 = vmatprep.subr.mxu0 0.0
        %3360 = vmatpush1.msra.mxu0 0.0
        %3361 = vmatprep.subr.mxu0 0.0
        %3362 = vmatpush1.msra.mxu0 0.0
        %3363 = vmatprep.subr.mxu0 0.0
        %3364 = vmatpush1.msra.mxu0 0.0
        %3365 = vmatprep.subr.mxu0 0.0
        %3366 = vmatpush1.msra.mxu0 0.0
        %3367 = vmatprep.subr.mxu0 0.0
        %3368 = vmatpush1.msra.mxu0 0.0
        %3369 = vmatprep.subr.mxu0 0.0
        %3370 = vmatpush1.msra.mxu0 0.0
        %3371 = vmatprep.subr.mxu0 0.0
        %3372 = vmatpush1.msra.mxu0 0.0
        %3373 = vmatprep.subr.mxu0 0.0
        %3374 = vmatpush1.msra.mxu0 0.0
        %3375 = vmatprep.subr.mxu0 0.0
        %3376 = vmatpush1.msra.mxu0 0.0
        %3377 = vmatprep.subr.mxu0 0.0
        %3378 = vmatpush1.msra.mxu0 0.0
        %3379 = vmatprep.subr.mxu0 0.0
        %3380 = vmatpush1.msra.mxu0 0.0
        %3381 = vmatprep.subr.mxu0 0.0
        %3382 = vmatpush1.msra.mxu0 0.0
        %3383 = vmatprep.subr.mxu0 0.0
        %3384 = vmatpush1.msra.mxu0 %v3340
        %3385 = vmatprep.subr.mxu0 0.0
        %3386 = vmatpush1.msra.mxu0 %v3338
        %3387 = vmatprep.subr.mxu0 0.0
        %3388 = vmatpush2.msra.mxu0 0.0
        %3389 = vmatprep.subr.mxu0 0.0
        %3390 = vmatpush2.msra.mxu0 0.0
        %3391 = vmatprep.subr.mxu0 0.0
        %3392 = vmatpush2.msra.mxu0 0.0
        %3393 = vmatprep.subr.mxu0 0.0
        %3394 = vmatpush2.msra.mxu0 0.0
        %3395 = vmatprep.subr.mxu0 0.0
        %3396 = vmatpush2.msra.mxu0 0.0
        %3397 = vmatprep.subr.mxu0 0.0
        %3398 = vmatpush2.msra.mxu0 0.0
        %3399 = vmatprep.subr.mxu0 0.0
        %3400 = vmatpush2.msra.mxu0 0.0
        %3401 = vmatprep.subr.mxu0 0.0
        %3402 = vmatpush2.msra.mxu0 0.0
        %3403 = vmatprep.subr.mxu0 0.0
        %3404 = vmatpush2.msra.mxu0 0.0
        %3405 = vmatprep.subr.mxu0 0.0
        %3406 = vmatpush2.msra.mxu0 0.0
        %3407 = vmatprep.subr.mxu0 0.0
        %3408 = vmatpush2.msra.mxu0 0.0
        %3409 = vmatprep.subr.mxu0 0.0
        %3410 = vmatpush2.msra.mxu0 0.0
        %3411 = vmatprep.subr.mxu0 0.0
        %3412 = vmatpush2.msra.mxu0 0.0
        %3413 = vmatprep.subr.mxu0 0.0
        %3414 = vmatpush2.msra.mxu0 0.0
        %3415 = vmatprep.subr.mxu0 0.0
        %3416 = vmatpush2.msra.mxu0 0.0
        %3417 = vmatprep.subr.mxu0 0.0
        %3418 = vmatpush2.msra.mxu0 0.0
        %3419 = vmatprep.mubr.f32.mxu0 0.0
        %3420 = vmatmul.mubr.f32.gmra.mxu0 %v3344
        %v3421 = vpop.f32.mrf.mxu0
        %v3422 = vadd.f32 0.0, %v3421
        %v3423 = vpop.f32.mrf.mxu0
        %3424 = vmatprep.mubr.f32.mxu0 0.0
        %3425 = vmatmul.mubr.f32.gmra.mxu0 %v3347
        %v3426 = vpop.f32.mrf.mxu0
        %v3427 = vadd.f32 0.0, %v3426
        %v3428 = vpop.f32.mrf.mxu0
        %3429 = vmatprep.mubr.f32.mxu0 0.0
        %3430 = vmatmul.mubr.f32.gmra.mxu0 %v3350
        %v3431 = vpop.f32.mrf.mxu0
        %v3432 = vadd.f32 0.0, %v3431
        %v3433 = vpop.f32.mrf.mxu0
        %3434 = vmatprep.mubr.f32.mxu0 0.0
        %3435 = vmatmul.mubr.f32.gmra.mxu0 %v3353
        %v3436 = vpop.f32.mrf.mxu0
        %v3437 = vadd.f32 0.0, %v3436
        %v3438 = vpop.f32.mrf.mxu0
        %3439 = vdwg.mxu0
        %3440 = vrot.lane.b32.xlu0 %v1098, 96
        %v3441 = vpop.permute.xlu0 %3440
        %3442 = vrot.lane.b32.xlu0 %v1103, 96
        %v3443 = vpop.permute.xlu0 %3442
        %v3447 = vsel %vm2032, %v2466, 0
        %v3450 = vsel %vm2032, %v2468, 0
        %v3453 = vsel %vm2032, %v2470, 0
        %v3456 = vsel %vm2032, %v2472, 0
        %3458 = vmatprep.subr.mxu0 0.0
        %3459 = vmatpush1.msra.mxu0 0.0
        %3460 = vmatprep.subr.mxu0 0.0
        %3461 = vmatpush1.msra.mxu0 0.0
        %3462 = vmatprep.subr.mxu0 0.0
        %3463 = vmatpush1.msra.mxu0 0.0
        %3464 = vmatprep.subr.mxu0 0.0
        %3465 = vmatpush1.msra.mxu0 0.0
        %3466 = vmatprep.subr.mxu0 0.0
        %3467 = vmatpush1.msra.mxu0 0.0
        %3468 = vmatprep.subr.mxu0 0.0
        %3469 = vmatpush1.msra.mxu0 0.0
        %3470 = vmatprep.subr.mxu0 0.0
        %3471 = vmatpush1.msra.mxu0 0.0
        %3472 = vmatprep.subr.mxu0 0.0
        %3473 = vmatpush1.msra.mxu0 0.0
        %3474 = vmatprep.subr.mxu0 0.0
        %3475 = vmatpush1.msra.mxu0 0.0
        %3476 = vmatprep.subr.mxu0 0.0
        %3477 = vmatpush1.msra.mxu0 0.0
        %3478 = vmatprep.subr.mxu0 0.0
        %3479 = vmatpush1.msra.mxu0 0.0
        %3480 = vmatprep.subr.mxu0 0.0
        %3481 = vmatpush1.msra.mxu0 0.0
        %3482 = vmatprep.subr.mxu0 0.0
        %3483 = vmatpush1.msra.mxu0 0.0
        %3484 = vmatprep.subr.mxu0 0.0
        %3485 = vmatpush1.msra.mxu0 0.0
        %3486 = vmatprep.subr.mxu0 0.0
        %3487 = vmatpush1.msra.mxu0 %v3443
        %3488 = vmatprep.subr.mxu0 0.0
        %3489 = vmatpush1.msra.mxu0 %v3441
        %3490 = vmatprep.subr.mxu0 0.0
        %3491 = vmatpush2.msra.mxu0 0.0
        %3492 = vmatprep.subr.mxu0 0.0
        %3493 = vmatpush2.msra.mxu0 0.0
        %3494 = vmatprep.subr.mxu0 0.0
        %3495 = vmatpush2.msra.mxu0 0.0
        %3496 = vmatprep.subr.mxu0 0.0
        %3497 = vmatpush2.msra.mxu0 0.0
        %3498 = vmatprep.subr.mxu0 0.0
        %3499 = vmatpush2.msra.mxu0 0.0
        %3500 = vmatprep.subr.mxu0 0.0
        %3501 = vmatpush2.msra.mxu0 0.0
        %3502 = vmatprep.subr.mxu0 0.0
        %3503 = vmatpush2.msra.mxu0 0.0
        %3504 = vmatprep.subr.mxu0 0.0
        %3505 = vmatpush2.msra.mxu0 0.0
        %3506 = vmatprep.subr.mxu0 0.0
        %3507 = vmatpush2.msra.mxu0 0.0
        %3508 = vmatprep.subr.mxu0 0.0
        %3509 = vmatpush2.msra.mxu0 0.0
        %3510 = vmatprep.subr.mxu0 0.0
        %3511 = vmatpush2.msra.mxu0 0.0
        %3512 = vmatprep.subr.mxu0 0.0
        %3513 = vmatpush2.msra.mxu0 0.0
        %3514 = vmatprep.subr.mxu0 0.0
        %3515 = vmatpush2.msra.mxu0 0.0
        %3516 = vmatprep.subr.mxu0 0.0
        %3517 = vmatpush2.msra.mxu0 0.0
        %3518 = vmatprep.subr.mxu0 0.0
        %3519 = vmatpush2.msra.mxu0 0.0
        %3520 = vmatprep.subr.mxu0 0.0
        %3521 = vmatpush2.msra.mxu0 0.0
        %3522 = vmatprep.mubr.f32.mxu0 0.0
        %3523 = vmatmul.mubr.f32.gmra.mxu0 %v3447
        %v3524 = vpop.f32.mrf.mxu0
        %v3525 = vadd.f32 0.0, %v3524
        %v3526 = vpop.f32.mrf.mxu0
        %3527 = vmatprep.mubr.f32.mxu0 0.0
        %3528 = vmatmul.mubr.f32.gmra.mxu0 %v3450
        %v3529 = vpop.f32.mrf.mxu0
        %v3530 = vadd.f32 0.0, %v3529
        %v3531 = vpop.f32.mrf.mxu0
        %3532 = vmatprep.mubr.f32.mxu0 0.0
        %3533 = vmatmul.mubr.f32.gmra.mxu0 %v3453
        %v3534 = vpop.f32.mrf.mxu0
        %v3535 = vadd.f32 0.0, %v3534
        %v3536 = vpop.f32.mrf.mxu0
        %3537 = vmatprep.mubr.f32.mxu0 0.0
        %3538 = vmatmul.mubr.f32.gmra.mxu0 %v3456
        %v3539 = vpop.f32.mrf.mxu0
        %v3540 = vadd.f32 0.0, %v3539
        %v3541 = vpop.f32.mrf.mxu0
        %3542 = vdwg.mxu0
        %v3543 = vld [vmem:[#allocation8] sm:$0xff]
        %v3544 = vld [vmem:[#allocation8 + $0x8] sm:$0xff]
        %v3545 = vld [vmem:[#allocation8 + $0x10] sm:$0xff]
        %v3546 = vld [vmem:[#allocation8 + $0x18] sm:$0xff]
        %v3547 = vmul.f32 %v2598, %v3543
        %v3548 = vmul.f32 %v2603, %v3544
        %v3549 = vmul.f32 %v2608, %v3545
        %v3550 = vmul.f32 %v2613, %v3546
        %v3551 = vmul.f32 %v2701, %v3543
        %v3552 = vmul.f32 %v2706, %v3544
        %v3553 = vmul.f32 %v2711, %v3545
        %v3554 = vmul.f32 %v2716, %v3546
        %v3555 = vmul.f32 %v2804, %v3543
        %v3556 = vmul.f32 %v2809, %v3544
        %v3557 = vmul.f32 %v2814, %v3545
        %v3558 = vmul.f32 %v2819, %v3546
        %v3559 = vmul.f32 %v2907, %v3543
        %v3560 = vmul.f32 %v2912, %v3544
        %v3561 = vmul.f32 %v2917, %v3545
        %v3562 = vmul.f32 %v2922, %v3546
        %v3563 = vmul.f32 %v3010, %v3543
        %v3564 = vmul.f32 %v3015, %v3544
        %v3565 = vmul.f32 %v3020, %v3545
        %v3566 = vmul.f32 %v3025, %v3546
        %v3567 = vmul.f32 %v3113, %v3543
        %v3568 = vmul.f32 %v3118, %v3544
        %v3569 = vmul.f32 %v3123, %v3545
        %v3570 = vmul.f32 %v3128, %v3546
        %v3571 = vmul.f32 %v3216, %v3543
        %v3572 = vmul.f32 %v3221, %v3544
        %v3573 = vmul.f32 %v3226, %v3545
        %v3574 = vmul.f32 %v3231, %v3546
        %v3575 = vmul.f32 %v3319, %v3543
        %v3576 = vmul.f32 %v3324, %v3544
        %v3577 = vmul.f32 %v3329, %v3545
        %v3578 = vmul.f32 %v3334, %v3546
        %v3579 = vmul.f32 %v3422, %v3543
        %v3580 = vmul.f32 %v3427, %v3544
        %v3581 = vmul.f32 %v3432, %v3545
        %v3582 = vmul.f32 %v3437, %v3546
        %v3583 = vmul.f32 %v3525, %v3543
        %v3584 = vmul.f32 %v3530, %v3544
        %v3585 = vmul.f32 %v3535, %v3545
        %v3586 = vmul.f32 %v3540, %v3546
        %v3587 = vadd.f32 %v3547, %v3548
        %v3588 = vadd.f32 %v3551, %v3552
        %v3589 = vadd.f32 %v3555, %v3556
        %v3590 = vadd.f32 %v3559, %v3560
        %v3591 = vadd.f32 %v3563, %v3564
        %v3592 = vadd.f32 %v3567, %v3568
        %v3593 = vadd.f32 %v3571, %v3572
        %v3594 = vadd.f32 %v3575, %v3576
        %v3595 = vadd.f32 %v3579, %v3580
        %v3596 = vadd.f32 %v3583, %v3584
        %v3597 = vadd.f32 %v3587, %v3549
        %v3598 = vadd.f32 %v3588, %v3553
        %v3599 = vadd.f32 %v3589, %v3557
        %v3600 = vadd.f32 %v3590, %v3561
        %v3601 = vadd.f32 %v3591, %v3565
        %v3602 = vadd.f32 %v3592, %v3569
        %v3603 = vadd.f32 %v3593, %v3573
        %v3604 = vadd.f32 %v3594, %v3577
        %v3605 = vadd.f32 %v3595, %v3581
        %v3606 = vadd.f32 %v3596, %v3585
        %v3607 = vadd.f32 %v3597, %v3550
        %v3608 = vadd.f32 %v3598, %v3554
        %v3609 = vadd.f32 %v3599, %v3558
        %v3610 = vadd.f32 %v3600, %v3562
        %v3611 = vadd.f32 %v3601, %v3566
        %v3612 = vadd.f32 %v3602, %v3570
        %v3613 = vadd.f32 %v3603, %v3574
        %v3614 = vadd.f32 %v3604, %v3578
        %v3615 = vadd.f32 %v3605, %v3582
        %v3616 = vadd.f32 %v3606, %v3586
        %v3617 = vld [vmem:[#allocation11] sm:$0xff]
        %v3618 = vld [vmem:[#allocation11 + $0x8] sm:$0xff]
        %v3619 = vld [vmem:[#allocation11 + $0x10] sm:$0xff]
        %v3620 = vld [vmem:[#allocation11 + $0x18] sm:$0xff]
        %v3621 = vld [vmem:[%s9] sm:$0x1]
        %v3623 = vlaneseq
        %v3624 = vshrl.u32 %v3623, 7
        %v3625 = vsub.s32 0, %v3624
        %v3626 = vrot.slane %v3621, %v3625
        %v3629 = vsel %vm515, %v3607, 0
        %v3632 = vsel %vm515, %v3608, 0
        %v3635 = vsel %vm515, %v3609, 0
        %v3638 = vsel %vm515, %v3610, 0
        %v3641 = vsel %vm515, %v3611, 0
        %v3644 = vsel %vm515, %v3612, 0
        %v3647 = vsel %vm515, %v3613, 0
        %v3650 = vsel %vm515, %v3614, 0
        %v3653 = vsel %vm515, %v3615, 0
        %v3656 = vsel %vm515, %v3616, 0
        %3658 = vmatprep.subr.mxu0 0.0
        %3659 = vmatpush1.msra.mxu0 0.0
        %3660 = vmatprep.subr.mxu0 0.0
        %3661 = vmatpush1.msra.mxu0 0.0
        %3662 = vmatprep.subr.mxu0 0.0
        %3663 = vmatpush1.msra.mxu0 0.0
        %3664 = vmatprep.subr.mxu0 0.0
        %3665 = vmatpush1.msra.mxu0 0.0
        %3666 = vmatprep.subr.mxu0 0.0
        %3667 = vmatpush1.msra.mxu0 0.0
        %3668 = vmatprep.subr.mxu0 0.0
        %3669 = vmatpush1.msra.mxu0 0.0
        %3670 = vmatprep.subr.mxu0 0.0
        %3671 = vmatpush1.msra.mxu0 0.0
        %3672 = vmatprep.subr.mxu0 0.0
        %3673 = vmatpush1.msra.mxu0 0.0
        %3674 = vmatprep.subr.mxu0 0.0
        %3675 = vmatpush1.msra.mxu0 0.0
        %3676 = vmatprep.subr.mxu0 0.0
        %3677 = vmatpush1.msra.mxu0 0.0
        %3678 = vmatprep.subr.mxu0 0.0
        %3679 = vmatpush1.msra.mxu0 0.0
        %3680 = vmatprep.subr.mxu0 0.0
        %3681 = vmatpush1.msra.mxu0 0.0
        %3682 = vmatprep.subr.mxu0 0.0
        %3683 = vmatpush1.msra.mxu0 %v3620
        %3684 = vmatprep.subr.mxu0 0.0
        %3685 = vmatpush1.msra.mxu0 %v3619
        %3686 = vmatprep.subr.mxu0 0.0
        %3687 = vmatpush1.msra.mxu0 %v3618
        %3688 = vmatprep.subr.mxu0 0.0
        %3689 = vmatpush1.msra.mxu0 %v3617
        %3690 = vmatprep.subr.mxu0 0.0
        %3691 = vmatpush2.msra.mxu0 0.0
        %3692 = vmatprep.subr.mxu0 0.0
        %3693 = vmatpush2.msra.mxu0 0.0
        %3694 = vmatprep.subr.mxu0 0.0
        %3695 = vmatpush2.msra.mxu0 0.0
        %3696 = vmatprep.subr.mxu0 0.0
        %3697 = vmatpush2.msra.mxu0 0.0
        %3698 = vmatprep.subr.mxu0 0.0
        %3699 = vmatpush2.msra.mxu0 0.0
        %3700 = vmatprep.subr.mxu0 0.0
        %3701 = vmatpush2.msra.mxu0 0.0
        %3702 = vmatprep.subr.mxu0 0.0
        %3703 = vmatpush2.msra.mxu0 0.0
        %3704 = vmatprep.subr.mxu0 0.0
        %3705 = vmatpush2.msra.mxu0 0.0
        %3706 = vmatprep.subr.mxu0 0.0
        %3707 = vmatpush2.msra.mxu0 0.0
        %3708 = vmatprep.subr.mxu0 0.0
        %3709 = vmatpush2.msra.mxu0 0.0
        %3710 = vmatprep.subr.mxu0 0.0
        %3711 = vmatpush2.msra.mxu0 0.0
        %3712 = vmatprep.subr.mxu0 0.0
        %3713 = vmatpush2.msra.mxu0 0.0
        %3714 = vmatprep.subr.mxu0 0.0
        %3715 = vmatpush2.msra.mxu0 0.0
        %3716 = vmatprep.subr.mxu0 0.0
        %3717 = vmatpush2.msra.mxu0 0.0
        %3718 = vmatprep.subr.mxu0 0.0
        %3719 = vmatpush2.msra.mxu0 0.0
        %3720 = vmatprep.subr.mxu0 0.0
        %3721 = vmatpush2.msra.mxu0 0.0
        %3722 = vmatprep.mubr.f32.mxu0 0.0
        %3723 = vmatmul.mubr.f32.gmra.mxu0 %v3629
        %v3724 = vpop.f32.mrf.mxu0
        %v3725 = vadd.f32 %v3626, %v3724
        %v3726 = vpop.f32.mrf.mxu0
        %3727 = vmatprep.mubr.f32.mxu0 0.0
        %3728 = vmatmul.mubr.f32.gmra.mxu0 %v3632
        %v3729 = vpop.f32.mrf.mxu0
        %v3730 = vadd.f32 %v3626, %v3729
        %v3731 = vpop.f32.mrf.mxu0
        %3732 = vmatprep.mubr.f32.mxu0 0.0
        %3733 = vmatmul.mubr.f32.gmra.mxu0 %v3635
        %v3734 = vpop.f32.mrf.mxu0
        %v3735 = vadd.f32 %v3626, %v3734
        %v3736 = vpop.f32.mrf.mxu0
        %3737 = vmatprep.mubr.f32.mxu0 0.0
        %3738 = vmatmul.mubr.f32.gmra.mxu0 %v3638
        %v3739 = vpop.f32.mrf.mxu0
        %v3740 = vadd.f32 %v3626, %v3739
        %v3741 = vpop.f32.mrf.mxu0
        %3742 = vmatprep.mubr.f32.mxu0 0.0
        %3743 = vmatmul.mubr.f32.gmra.mxu0 %v3641
        %v3744 = vpop.f32.mrf.mxu0
        %v3745 = vadd.f32 %v3626, %v3744
        %v3746 = vpop.f32.mrf.mxu0
        %3747 = vmatprep.mubr.f32.mxu0 0.0
        %3748 = vmatmul.mubr.f32.gmra.mxu0 %v3644
        %v3749 = vpop.f32.mrf.mxu0
        %v3750 = vadd.f32 %v3626, %v3749
        %v3751 = vpop.f32.mrf.mxu0
        %3752 = vmatprep.mubr.f32.mxu0 0.0
        %3753 = vmatmul.mubr.f32.gmra.mxu0 %v3647
        %v3754 = vpop.f32.mrf.mxu0
        %v3755 = vadd.f32 %v3626, %v3754
        %v3756 = vpop.f32.mrf.mxu0
        %3757 = vmatprep.mubr.f32.mxu0 0.0
        %3758 = vmatmul.mubr.f32.gmra.mxu0 %v3650
        %v3759 = vpop.f32.mrf.mxu0
        %v3760 = vadd.f32 %v3626, %v3759
        %v3761 = vpop.f32.mrf.mxu0
        %3762 = vmatprep.mubr.f32.mxu0 0.0
        %3763 = vmatmul.mubr.f32.gmra.mxu0 %v3653
        %v3764 = vpop.f32.mrf.mxu0
        %v3765 = vadd.f32 %v3626, %v3764
        %v3766 = vpop.f32.mrf.mxu0
        %3767 = vmatprep.mubr.f32.mxu0 0.0
        %3768 = vmatmul.mubr.f32.gmra.mxu0 %v3656
        %v3769 = vpop.f32.mrf.mxu0
        %v3770 = vadd.f32 %v3626, %v3769
        %v3771 = vpop.f32.mrf.mxu0
        %3772 = vdwg.mxu0
        %v3773 = vld [vmem:[%s5] sm:$0xff]
        %v3774 = vadd.f32 %v3725, %v3773
        %v3775 = vadd.f32 %v3730, %v3773
        %v3776 = vadd.f32 %v3735, %v3773
        %v3777 = vadd.f32 %v3740, %v3773
        %v3778 = vadd.f32 %v3745, %v3773
        %v3779 = vadd.f32 %v3750, %v3773
        %v3780 = vadd.f32 %v3755, %v3773
        %v3781 = vadd.f32 %v3760, %v3773
        %v3782 = vadd.f32 %v3765, %v3773
        %v3783 = vadd.f32 %v3770, %v3773
        %3784 = vst.msk [vmem:[%s477] sm:$0xff] %vm515, %v3774
        %3785 = vst.msk [vmem:[%s477 + $0x8] sm:$0xff] %vm515, %v3775
        %3786 = vst.msk [vmem:[%s477 + $0x10] sm:$0xff] %vm515, %v3776
        %3787 = vst.msk [vmem:[%s477 + $0x18] sm:$0xff] %vm515, %v3777
        %3788 = vst.msk [vmem:[%s477 + $0x20] sm:$0xff] %vm515, %v3778
        %3789 = vst.msk [vmem:[%s477 + $0x28] sm:$0xff] %vm515, %v3779
        %3790 = vst.msk [vmem:[%s477 + $0x30] sm:$0xff] %vm515, %v3780
        %3791 = vst.msk [vmem:[%s477 + $0x38] sm:$0xff] %vm515, %v3781
        %3792 = vst.msk [vmem:[%s477 + $0x40] sm:$0xff] %vm515, %v3782
        %3793 = vst.msk [vmem:[%s477 + $0x48] sm:$0xff] %vm515, %v3783
        %s3794 = sand.u32 %s255, 1
        %s3795 = scalar_lea.sflag [#allocation4], %s3794
        %s3796 = sand.u32 %s255, 1
        %s3797 = smul.addr %s3796, 80
        %s3798 = scalar_lea.vmem [#allocation13], %s3797
        %s3799 = smul.u32 10, %s32
        %p3800 = scmp.lt.s32.totalorder %s3799, 19
        %s3801 = scalar_select %p3800, %s3799, 19
        %s3802 = smul.addr %s3801, 4
        %s3803 = smul.addr %s3802, 8
        %s3804 = scalar_lea.vmem %s11, %s3803
        // Predicated region
        $region85: #{tpu_custom_call.1} parent=59 // pred_check
          %p3805 = pneg %p265
        $region86: #{tpu_custom_call.1} parent=59 // pred_check_branch
          %3807 = sbr.rel (%p3805) target = $region88
        $region87: #{tpu_custom_call.1} parent=59 // pred_region
          %s3808 = smul.u32 10, %s32
          %s3810 = ssub.s32 1280, 1280
          %3811 = vsyncadd %s3795, %s3810
          %s3812 = smul.addr %s3808, 128
          %s3813 = scalar_lea.hbm %s10, %s3812
          %s3814 = sshll.u32 %s3798, 4
          %s3815 = int_to_ptr.vmem [resolvable:$true] %s3814
          %3820 = dma.vmem_to_hbm [thread:$0]  %s3815, 1280, %s3813, %s3795, 128, 128, 8
        $region88: #{tpu_custom_call.1} parent=59 // pred_fallthru
          _
        // Predicated region
        $region89: #{tpu_custom_call.1} parent=59 // pred_check
          %p3821 = pneg %p291
        $region90: #{tpu_custom_call.1} parent=59 // pred_check_branch
          %3823 = sbr.rel (%p3821) target = $region92
        $region91: #{tpu_custom_call.1} parent=59 // pred_region
          %s3824 = smul.u32 10, %s32
        $region92: #{tpu_custom_call.1} parent=59 // pred_fallthru
          _
      $region60: #{tpu_custom_call.1} parent=5 // pred_fallthru
        _
      %p3825 = scmp.le.s32.totalorder 2, %s27
      // Predicated region
      $region93: #{tpu_custom_call.1} parent=5 // pred_check
        %p3826 = pneg %p3825
      $region94: #{tpu_custom_call.1} parent=5 // pred_check_branch
        %3828 = sbr.rel (%p3826) target = $region96
      $region95: #{tpu_custom_call.1} parent=5 // pred_region
        %s3829 = ssub.s32 %s27, 2
        // Predicated region
        $region97: #{tpu_custom_call.1} parent=95 // pred_check
          %p3830 = pneg %p271
        $region98: #{tpu_custom_call.1} parent=95 // pred_check_branch
          %3832 = sbr.rel (%p3830) target = $region100
        $region99: #{tpu_custom_call.1} parent=95 // pred_region
          %s3833 = sand.u32 %s256, 1
          %s3834 = scalar_lea.sflag [#allocation4], %s3833
          %s3835 = sand.u32 %s256, 1
          %s3836 = smul.addr %s3835, 80
          %s3837 = scalar_lea.vmem [#allocation13], %s3836
          %3838 = dma.done %s3834, 1280
        $region100: #{tpu_custom_call.1} parent=95 // pred_fallthru
          _
        // Predicated region
        $region101: #{tpu_custom_call.1} parent=95 // pred_check
          %p3839 = pneg %p297
        $region102: #{tpu_custom_call.1} parent=95 // pred_check_branch
          %3841 = sbr.rel (%p3839) target = $region104
        $region103: #{tpu_custom_call.1} parent=95 // pred_region
          %s3842 = smul.u32 10, %s33
          %p3843 = scmp.lt.s32.totalorder %s3842, 19
          %s3844 = scalar_select %p3843, %s3842, 19
          %s3845 = smul.addr %s3844, 4
          %s3846 = smul.addr %s3845, 8
          %s3847 = scalar_lea.vmem %s11, %s3846
        $region104: #{tpu_custom_call.1} parent=95 // pred_fallthru
          _
      $region96: #{tpu_custom_call.1} parent=5 // pred_fallthru
        _
    $region6: #{tpu_custom_call.1} parent=1 // loop_footer
      %s31 = sadd.s32 1, %s27
    $region7: #{tpu_custom_call.1} parent=1 // loop_footer_branch
      %26 = sbr.rel target = $region3
    $region8: #{tpu_custom_call.1} parent=1 // loop_exit
      _
    %3848 = vsyncpa [#allocation3], 1
    %s3849 = scalar_lea.sflag [#allocation3], 1
    %3850 = vsyncpa %s3849, 1
    %3851 = vsyncpa [#allocation6], 1
    %3852 = vsyncpa [#allocation9], 1
    %3853 = vsyncpa [#allocation12], 1
    %3854 = vsyncpa [#allocation4], 1
    %s3855 = scalar_lea.sflag [#allocation4], 1
    %3856 = vsyncpa %s3855, 1

</llo_original>
